<compile_context>
chip_gen: v6e
topology: v6e:2x2x1
jax: 0.10.0
libtpu: 0.0.40
codegen_flags: <defaults>
</compile_context>

<pallas_src>
import functools

import jax
import jax.numpy as jnp
import numpy as np
from jax.experimental import pallas as pl
from jax.experimental.pallas import tpu as pltpu

SLOPE = 0.2  # LeakyReLU negative slope


def _leaky(v):
    return jnp.where(v >= 0, v, SLOPE * v)


def _conv_out(size, k, stride, pad):
    return (size + 2 * pad - k) // stride + 1


# ---------------------------------------------------------------------------
# Spectral normalization (batch-independent weight preprocessing, plain JAX).
# ---------------------------------------------------------------------------
def _spectral_normalize(w, n_iter=5, eps=1e-12):
    """w / sigma_max(w).  Singular values of W.reshape(out,-1) (PyTorch layout)
    equal those of the (in,out)-style layout used here."""
    m = w.reshape(-1, w.shape[-1]).astype(jnp.float32)
    v0 = jnp.full((m.shape[1],), 1.0 / np.sqrt(m.shape[1]), jnp.float32)

    def body(_, v):
        u = m @ v
        u = u / (jnp.linalg.norm(u) + eps)
        v = m.T @ u
        return v / (jnp.linalg.norm(v) + eps)

    v = jax.lax.fori_loop(0, n_iter, body, v0)
    sigma = jnp.linalg.norm(m @ v)
    return w / (sigma + eps)


def _normalized_weights(p):
    q = dict(p)
    for name in ("conv1_w", "conv2_w", "conv3_w", "conv4_w", "fc1_w", "fc2_w"):
        q[name] = _spectral_normalize(p[name])
    return q


# ---------------------------------------------------------------------------
# In-kernel helpers.
# ---------------------------------------------------------------------------
def _zero_border(pad_ref):
    """Zero the 1-wide border of a padded activation scratch buffer.  The
    interior is overwritten every step, so only the border needs refreshing
    (cheap, and correct regardless of how the parallel grid axis is sharded
    across TensorCores)."""
    nb, hp, wp, c = pad_ref.shape
    z_row = jnp.zeros((nb, 1, wp, c), jnp.float32)
    z_col = jnp.zeros((nb, hp, 1, c), jnp.float32)
    pad_ref[:, 0:1, :, :] = z_row
    pad_ref[:, hp - 1:hp, :, :] = z_row
    pad_ref[:, :, 0:1, :] = z_col
    pad_ref[:, :, wp - 1:wp, :] = z_col


def _conv3x3_s2_lrelu(pad_ref, w_ref, b_ref, ho, wo):
    """3x3 stride-2 conv (+bias, +LeakyReLU) on a zero-padded activation held
    in VMEM scratch.  Each tap is a strided VMEM read (stride 2 along H and W);
    contraction happens on the MXU."""
    nb, _, _, cin = pad_ref.shape
    cout = w_ref.shape[2]
    rows = nb * ho * wo
    acc = jnp.zeros((rows, cout), jnp.float32)
    for kh in range(3):
        for kw in range(3):
            tap = pad_ref[:, pl.ds(kh, ho, stride=2), pl.ds(kw, wo, stride=2), :]
            acc = acc + jnp.dot(tap.reshape(rows, cin), w_ref[kh * 3 + kw],
                                preferred_element_type=jnp.float32)
    acc = _leaky(acc + b_ref[...])
    return acc.reshape(nb, ho, wo, cout)


# ---------------------------------------------------------------------------
# Fully fused network kernel (one grid step = one batch tile, all layers).
# ---------------------------------------------------------------------------
def _make_kernel(bn, geom, chans):
    (ho1, wo1), (ho2, wo2), (ho3, wo3), (ho4, wo4) = geom
    c1, c2, c3, c4 = chans

    def kernel(x_ref,
               w1_ref, b1_ref, w2_ref, b2_ref, w3_ref, b3_ref, w4_ref, b4_ref,
               fw1_ref, fb1_ref, fw2_ref, fb2_ref,
               o_ref,
               pad2_ref, pad3_ref, pad4_ref):
        # conv1: wrapper-side im2col -> one MXU dot with K = 5*5*2 = 50.
        p1 = x_ref[...].reshape(bn * ho1 * wo1, 50)
        a1 = _leaky(jnp.dot(p1, w1_ref[...], preferred_element_type=jnp.float32)
                    + b1_ref[...])
        a1 = a1.reshape(bn, ho1, wo1, c1)

        # conv2
        _zero_border(pad2_ref)
        pad2_ref[:, 1:1 + ho1, 1:1 + wo1, :] = a1
        a2 = _conv3x3_s2_lrelu(pad2_ref, w2_ref, b2_ref, ho2, wo2)

        # conv3
        _zero_border(pad3_ref)
        pad3_ref[:, 1:1 + ho2, 1:1 + wo2, :] = a2
        a3 = _conv3x3_s2_lrelu(pad3_ref, w3_ref, b3_ref, ho3, wo3)

        # conv4
        _zero_border(pad4_ref)
        pad4_ref[:, 1:1 + ho3, 1:1 + wo3, :] = a3
        a4 = _conv3x3_s2_lrelu(pad4_ref, w4_ref, b4_ref, ho4, wo4)

        # AdaptiveAvgPool2d(1) + Flatten + MLP head.
        pooled = jnp.mean(a4, axis=(1, 2))                       # (bn, 80)
        h = _leaky(jnp.dot(pooled, fw1_ref[...],
                           preferred_element_type=jnp.float32) + fb1_ref[...])
        out = jnp.dot(h, fw2_ref[...],
                      preferred_element_type=jnp.float32) + fb2_ref[...]
        o_ref[...] = out.reshape(1, 1, bn)                       # lane-dense

    return kernel


# ---------------------------------------------------------------------------
# Wrapper: geometry, spectral norm, conv1 im2col, single fused pallas_call.
# ---------------------------------------------------------------------------
@functools.partial(jax.jit, static_argnames=("block_n",))
def forward_pallas(x, y, params, block_n=8):
    x = x.astype(jnp.float32)
    y = y.astype(jnp.float32)
    n, h, w = x.shape
    xy = jnp.stack([x, y], axis=-1)                   # (N, H, W, 2)  NHWC

    p = _normalized_weights(params)

    # Layer geometry (PyTorch conv arithmetic).
    ho1, wo1 = _conv_out(h, 5, 2, 2), _conv_out(w, 5, 2, 2)
    ho2, wo2 = _conv_out(ho1, 3, 2, 1), _conv_out(wo1, 3, 2, 1)
    ho3, wo3 = _conv_out(ho2, 3, 2, 1), _conv_out(wo2, 3, 2, 1)
    ho4, wo4 = _conv_out(ho3, 3, 2, 1), _conv_out(wo3, 3, 2, 1)
    c1, c2, c3, c4 = (p["conv1_w"].shape[-1], p["conv2_w"].shape[-1],
                      p["conv3_w"].shape[-1], p["conv4_w"].shape[-1])

    # conv1 im2col in the wrapper (plain XLA): (N, ho1*wo1, 5*5*2).
    xp = jnp.pad(xy, ((0, 0), (2, 2), (2, 2), (0, 0)))
    taps = []
    for kh in range(5):
        for kw in range(5):
            taps.append(xp[:, kh:kh + 2 * ho1 - 1:2, kw:kw + 2 * wo1 - 1:2, :])
    patches = jnp.concatenate(taps, axis=-1).reshape(n, ho1 * wo1, 50)

    # Batch tiling.
    bn = max(1, min(block_n, n))
    n_rem = (-n) % bn
    if n_rem:
        patches = jnp.pad(patches, ((0, n_rem), (0, 0), (0, 0)))
    n_total = n + n_rem
    num_blocks = n_total // bn

    # Weights flattened for matmul form (HWIO -> (taps, cin, cout) / (K, cout)).
    w1r = p["conv1_w"].reshape(50, c1)
    w2r = p["conv2_w"].reshape(9, c1, c2)
    w3r = p["conv3_w"].reshape(9, c2, c3)
    w4r = p["conv4_w"].reshape(9, c3, c4)

    operands = [
        patches,
        w1r, p["conv1_b"], w2r, p["conv2_b"], w3r, p["conv3_b"],
        w4r, p["conv4_b"],
        p["fc1_w"], p["fc1_b"], p["fc2_w"], p["fc2_b"],
    ]

    # Batch-blocked input; weights/biases are full, VMEM-resident blocks.
    in_specs = [pl.BlockSpec((bn, ho1 * wo1, 50), lambda b: (b, 0, 0))]
    for op in operands[1:]:
        nd = op.ndim
        in_specs.append(pl.BlockSpec(op.shape, lambda b, nd=nd: (0,) * nd))

    # VMEM scratch for the zero-padded intermediate activations.
    scratch_shapes = [
        pltpu.VMEM((bn, ho1 + 2, wo1 + 2, c1), jnp.float32),
        pltpu.VMEM((bn, ho2 + 2, wo2 + 2, c2), jnp.float32),
        pltpu.VMEM((bn, ho3 + 2, wo3 + 2, c3), jnp.float32),
    ]

    out = pl.pallas_call(
        _make_kernel(bn,
                     ((ho1, wo1), (ho2, wo2), (ho3, wo3), (ho4, wo4)),
                     (c1, c2, c3, c4)),
        out_shape=jax.ShapeDtypeStruct((num_blocks, 1, bn), jnp.float32),
        grid=(num_blocks,),
        in_specs=in_specs,
        out_specs=pl.BlockSpec((1, 1, bn), lambda b: (b, 0, 0)),
        scratch_shapes=scratch_shapes,
        compiler_params=pltpu.CompilerParams(
            dimension_semantics=("parallel",)),
    )(*operands)

    return out.reshape(n_total, 1)[:n]


# ---------------------------------------------------------------------------
# Pure-JAX reference (same spectral-normalized weights) for verification.
# ---------------------------------------------------------------------------
@jax.jit
def forward_reference(x, y, params):
    p = _normalized_weights(params)
    xy = jnp.stack([x.astype(jnp.float32), y.astype(jnp.float32)], axis=-1)

    def conv(v, wgt, b, pad):
        o = jax.lax.conv_general_dilated(
            v, wgt, window_strides=(2, 2),
            padding=((pad, pad), (pad, pad)),
            dimension_numbers=("NHWC", "HWIO", "NHWC"))
        return _leaky(o + b.reshape(1, 1, 1, -1))

    hcur = conv(xy, p["conv1_w"], p["conv1_b"], 2)
    hcur = conv(hcur, p["conv2_w"], p["conv2_b"], 1)
    hcur = conv(hcur, p["conv3_w"], p["conv3_b"], 1)
    hcur = conv(hcur, p["conv4_w"], p["conv4_b"], 1)
    pooled = jnp.mean(hcur, axis=(1, 2))
    hcur = _leaky(pooled @ p["fc1_w"] + p["fc1_b"])
    return hcur @ p["fc2_w"] + p["fc2_b"]


# ---------------------------------------------------------------------------
# Deterministic synthetic parameters (PyTorch-style uniform init).
# ---------------------------------------------------------------------------
def init_params(key):
    def conv_p(k, kh, kw, cin, cout):
        k1, k2 = jax.random.split(k)
        bound = 1.0 / np.sqrt(kh * kw * cin)
        wgt = jax.random.uniform(k1, (kh, kw, cin, cout), jnp.float32, -bound, bound)
        b = jax.random.uniform(k2, (1, cout), jnp.float32, -bound, bound)
        return wgt, b

    def lin_p(k, cin, cout):
        k1, k2 = jax.random.split(k)
        bound = 1.0 / np.sqrt(cin)
        wgt = jax.random.uniform(k1, (cin, cout), jnp.float32, -bound, bound)
        b = jax.random.uniform(k2, (1, cout), jnp.float32, -bound, bound)
        return wgt, b

    keys = jax.random.split(key, 6)
    prm = {}
    prm["conv1_w"], prm["conv1_b"] = conv_p(keys[0], 5, 5, 2, 10)
    prm["conv2_w"], prm["conv2_b"] = conv_p(keys[1], 3, 3, 10, 20)
    prm["conv3_w"], prm["conv3_b"] = conv_p(keys[2], 3, 3, 20, 40)
    prm["conv4_w"], prm["conv4_b"] = conv_p(keys[3], 3, 3, 40, 80)
    prm["fc1_w"], prm["fc1_b"] = lin_p(keys[4], 80, 40)
    prm["fc2_w"], prm["fc2_b"] = lin_p(keys[5], 40, 1)
    return prm


if __name__ == "__main__":
    key = jax.random.PRNGKey(0)
    kx, ky, kp = jax.random.split(key, 3)

    N, H, W = 2, 16, 16
    x = jax.random.normal(kx, (N, H, W), jnp.float32)
    y = jax.random.normal(ky, (N, H, W), jnp.float32)
    params = init_params(kp)

    out = jax.block_until_ready(forward_pallas(x, y, params))
    assert out.shape == (N, 1), out.shape

    ref = jax.block_until_ready(forward_reference(x, y, params))
    np.testing.assert_allclose(np.asarray(out), np.asarray(ref),
                               rtol=2e-3, atol=2e-3)

    print("KERNEL_OK")
</pallas_src>

<mosaic_0001>
module attributes {stable_mosaic.version = 11 : i64} {
  func.func @kernel(%arg0: i32, %arg1: memref<2x64x50xf32, #tpu.memory_space<vmem>>, %arg2: memref<50x10xf32, #tpu.memory_space<vmem>>, %arg3: memref<1x10xf32, #tpu.memory_space<vmem>>, %arg4: memref<9x10x20xf32, #tpu.memory_space<vmem>>, %arg5: memref<1x20xf32, #tpu.memory_space<vmem>>, %arg6: memref<9x20x40xf32, #tpu.memory_space<vmem>>, %arg7: memref<1x40xf32, #tpu.memory_space<vmem>>, %arg8: memref<9x40x80xf32, #tpu.memory_space<vmem>>, %arg9: memref<1x80xf32, #tpu.memory_space<vmem>>, %arg10: memref<80x40xf32, #tpu.memory_space<vmem>>, %arg11: memref<1x40xf32, #tpu.memory_space<vmem>>, %arg12: memref<40x1xf32, #tpu.memory_space<vmem>>, %arg13: memref<1x1xf32, #tpu.memory_space<vmem>>, %arg14: memref<1x1x2xf32, #tpu.memory_space<vmem>>, %arg15: memref<2x10x10x10xf32, #tpu.memory_space<vmem>>, %arg16: memref<2x6x6x20xf32, #tpu.memory_space<vmem>>, %arg17: memref<2x4x4x40xf32, #tpu.memory_space<vmem>>) attributes {dimension_semantics = [#tpu.dimension_semantics<parallel>], iteration_bounds = array<i64: 1>, scalar_prefetch = 0 : i64, scratch_operands = 3 : i64, tpu.core_type = #tpu.core_type<tc>, window_params = [{transform_indices = @transform_0, window_bounds = array<i64: 2, 64, 50>}, {pipeline_mode = #tpu.pipeline_mode<synchronous>, transform_indices = @transform_1, window_bounds = array<i64: 50, 10>}, {pipeline_mode = #tpu.pipeline_mode<synchronous>, transform_indices = @transform_2, window_bounds = array<i64: 1, 10>}, {pipeline_mode = #tpu.pipeline_mode<synchronous>, transform_indices = @transform_3, window_bounds = array<i64: 9, 10, 20>}, {pipeline_mode = #tpu.pipeline_mode<synchronous>, transform_indices = @transform_4, window_bounds = array<i64: 1, 20>}, {pipeline_mode = #tpu.pipeline_mode<synchronous>, transform_indices = @transform_5, window_bounds = array<i64: 9, 20, 40>}, {pipeline_mode = #tpu.pipeline_mode<synchronous>, transform_indices = @transform_6, window_bounds = array<i64: 1, 40>}, {pipeline_mode = #tpu.pipeline_mode<synchronous>, transform_indices = @transform_7, window_bounds = array<i64: 9, 40, 80>}, {pipeline_mode = #tpu.pipeline_mode<synchronous>, transform_indices = @transform_8, window_bounds = array<i64: 1, 80>}, {pipeline_mode = #tpu.pipeline_mode<synchronous>, transform_indices = @transform_9, window_bounds = array<i64: 80, 40>}, {pipeline_mode = #tpu.pipeline_mode<synchronous>, transform_indices = @transform_10, window_bounds = array<i64: 1, 40>}, {pipeline_mode = #tpu.pipeline_mode<synchronous>, transform_indices = @transform_11, window_bounds = array<i64: 40, 1>}, {pipeline_mode = #tpu.pipeline_mode<synchronous>, transform_indices = @transform_12, window_bounds = array<i64: 1, 1>}, {transform_indices = @transform_13, window_bounds = array<i64: 1, 1, 2>}]} {
    %c0 = arith.constant 0 : index
    %c0_0 = arith.constant 0 : index
    %c0_1 = arith.constant 0 : index
    %0 = vector.load %arg1[%c0, %c0_0, %c0_1] : memref<2x64x50xf32, #tpu.memory_space<vmem>>, vector<2x64x50xf32>
    %1 = vector.shape_cast %0 : vector<2x64x50xf32> to vector<128x50xf32>
    %c0_2 = arith.constant 0 : index
    %c0_3 = arith.constant 0 : index
    %2 = vector.load %arg2[%c0_2, %c0_3] : memref<50x10xf32, #tpu.memory_space<vmem>>, vector<50x10xf32>
    %cst = arith.constant dense<0.000000e+00> : vector<128x10xf32>
    %3 = tpu.matmul %1, %2, %cst {dimension_numbers = #tpu.dot_dimension_numbers<[1], [0], [0], [1], [0, 0, 1, 1], [], []>} : vector<128x50xf32>, vector<50x10xf32>, vector<128x10xf32> -> vector<128x10xf32>
    %c0_4 = arith.constant 0 : index
    %c0_5 = arith.constant 0 : index
    %4 = vector.load %arg3[%c0_4, %c0_5] : memref<1x10xf32, #tpu.memory_space<vmem>>, vector<1x10xf32>
    %5 = vector.broadcast %4 : vector<1x10xf32> to vector<128x10xf32>
    %6 = arith.addf %3, %5 : vector<128x10xf32>
    %cst_6 = arith.constant 0.000000e+00 : f32
    %7 = vector.broadcast %cst_6 : f32 to vector<128x10xf32>
    %8 = arith.cmpf oge, %6, %7 : vector<128x10xf32>
    %cst_7 = arith.constant 2.000000e-01 : f32
    %9 = vector.broadcast %cst_7 : f32 to vector<128x10xf32>
    %10 = arith.mulf %9, %6 : vector<128x10xf32>
    %11 = arith.select %8, %6, %10 : vector<128x10xi1>, vector<128x10xf32>
    %12 = vector.shape_cast %11 : vector<128x10xf32> to vector<2x8x8x10xf32>
    %cst_8 = arith.constant 0.000000e+00 : f32
    %13 = vector.broadcast %cst_8 : f32 to vector<2x1x10x10xf32>
    %cst_9 = arith.constant 0.000000e+00 : f32
    %14 = vector.broadcast %cst_9 : f32 to vector<2x10x1x10xf32>
    %c0_10 = arith.constant 0 : index
    %c0_11 = arith.constant 0 : index
    %c0_12 = arith.constant 0 : index
    %c0_13 = arith.constant 0 : index
    %15 = vector.load %arg15[%c0_10, %c0_11, %c0_12, %c0_13] : memref<2x10x10x10xf32, #tpu.memory_space<vmem>>, vector<2x1x10x10xf32>
    tpu.vector_store %arg15[%c0_10, %c0_11, %c0_12, %c0_13], %13 {strides = array<i32>} : memref<2x10x10x10xf32, #tpu.memory_space<vmem>>, vector<2x1x10x10xf32>,
    %c0_14 = arith.constant 0 : index
    %c9 = arith.constant 9 : index
    %c0_15 = arith.constant 0 : index
    %c0_16 = arith.constant 0 : index
    %16 = vector.load %arg15[%c0_14, %c9, %c0_15, %c0_16] : memref<2x10x10x10xf32, #tpu.memory_space<vmem>>, vector<2x1x10x10xf32>
    tpu.vector_store %arg15[%c0_14, %c9, %c0_15, %c0_16], %13 {strides = array<i32>} : memref<2x10x10x10xf32, #tpu.memory_space<vmem>>, vector<2x1x10x10xf32>,
    %c0_17 = arith.constant 0 : index
    %c0_18 = arith.constant 0 : index
    %c0_19 = arith.constant 0 : index
    %c0_20 = arith.constant 0 : index
    %17 = vector.load %arg15[%c0_17, %c0_18, %c0_19, %c0_20] : memref<2x10x10x10xf32, #tpu.memory_space<vmem>>, vector<2x10x1x10xf32>
    tpu.vector_store %arg15[%c0_17, %c0_18, %c0_19, %c0_20], %14 {strides = array<i32>} : memref<2x10x10x10xf32, #tpu.memory_space<vmem>>, vector<2x10x1x10xf32>,
    %c0_21 = arith.constant 0 : index
    %c0_22 = arith.constant 0 : index
    %c9_23 = arith.constant 9 : index
    %c0_24 = arith.constant 0 : index
    %18 = vector.load %arg15[%c0_21, %c0_22, %c9_23, %c0_24] : memref<2x10x10x10xf32, #tpu.memory_space<vmem>>, vector<2x10x1x10xf32>
    tpu.vector_store %arg15[%c0_21, %c0_22, %c9_23, %c0_24], %14 {strides = array<i32>} : memref<2x10x10x10xf32, #tpu.memory_space<vmem>>, vector<2x10x1x10xf32>,
    %c0_25 = arith.constant 0 : index
    %c1 = arith.constant 1 : index
    %c1_26 = arith.constant 1 : index
    %c0_27 = arith.constant 0 : index
    %19 = vector.load %arg15[%c0_25, %c1, %c1_26, %c0_27] : memref<2x10x10x10xf32, #tpu.memory_space<vmem>>, vector<2x8x8x10xf32>
    tpu.vector_store %arg15[%c0_25, %c1, %c1_26, %c0_27], %12 {strides = array<i32>} : memref<2x10x10x10xf32, #tpu.memory_space<vmem>>, vector<2x8x8x10xf32>,
    %cst_28 = arith.constant 0.000000e+00 : f32
    %20 = vector.broadcast %cst_28 : f32 to vector<32x20xf32>
    %c0_29 = arith.constant 0 : index
    %c0_30 = arith.constant 0 : index
    %c0_31 = arith.constant 0 : index
    %c0_32 = arith.constant 0 : index
    %21 = tpu.strided_load %arg15[%c0_29, %c0_30, %c0_31, %c0_32] {strides = array<i32: 1, 2, 2, 1>} : memref<2x10x10x10xf32, #tpu.memory_space<vmem>>, vector<2x4x4x10xf32>
    %22 = vector.shape_cast %21 : vector<2x4x4x10xf32> to vector<32x10xf32>
    %c0_33 = arith.constant 0 : index
    %c0_34 = arith.constant 0 : index
    %c0_35 = arith.constant 0 : index
    %23 = vector.load %arg4[%c0_33, %c0_34, %c0_35] : memref<9x10x20xf32, #tpu.memory_space<vmem>>, vector<1x10x20xf32>
    %24 = vector.shape_cast %23 : vector<1x10x20xf32> to vector<10x20xf32>
    %cst_36 = arith.constant dense<0.000000e+00> : vector<32x20xf32>
    %25 = tpu.matmul %22, %24, %cst_36 {dimension_numbers = #tpu.dot_dimension_numbers<[1], [0], [0], [1], [0, 0, 1, 1], [], []>} : vector<32x10xf32>, vector<10x20xf32>, vector<32x20xf32> -> vector<32x20xf32>
    %26 = arith.addf %20, %25 : vector<32x20xf32>
    %c0_37 = arith.constant 0 : index
    %c0_38 = arith.constant 0 : index
    %c1_39 = arith.constant 1 : index
    %c0_40 = arith.constant 0 : index
    %27 = tpu.strided_load %arg15[%c0_37, %c0_38, %c1_39, %c0_40] {strides = array<i32: 1, 2, 2, 1>} : memref<2x10x10x10xf32, #tpu.memory_space<vmem>>, vector<2x4x4x10xf32>
    %28 = vector.shape_cast %27 : vector<2x4x4x10xf32> to vector<32x10xf32>
    %c1_41 = arith.constant 1 : index
    %c0_42 = arith.constant 0 : index
    %c0_43 = arith.constant 0 : index
    %29 = vector.load %arg4[%c1_41, %c0_42, %c0_43] : memref<9x10x20xf32, #tpu.memory_space<vmem>>, vector<1x10x20xf32>
    %30 = vector.shape_cast %29 : vector<1x10x20xf32> to vector<10x20xf32>
    %cst_44 = arith.constant dense<0.000000e+00> : vector<32x20xf32>
    %31 = tpu.matmul %28, %30, %cst_44 {dimension_numbers = #tpu.dot_dimension_numbers<[1], [0], [0], [1], [0, 0, 1, 1], [], []>} : vector<32x10xf32>, vector<10x20xf32>, vector<32x20xf32> -> vector<32x20xf32>
    %32 = arith.addf %26, %31 : vector<32x20xf32>
    %c0_45 = arith.constant 0 : index
    %c0_46 = arith.constant 0 : index
    %c2 = arith.constant 2 : index
    %c0_47 = arith.constant 0 : index
    %33 = tpu.strided_load %arg15[%c0_45, %c0_46, %c2, %c0_47] {strides = array<i32: 1, 2, 2, 1>} : memref<2x10x10x10xf32, #tpu.memory_space<vmem>>, vector<2x4x4x10xf32>
    %34 = vector.shape_cast %33 : vector<2x4x4x10xf32> to vector<32x10xf32>
    %c2_48 = arith.constant 2 : index
    %c0_49 = arith.constant 0 : index
    %c0_50 = arith.constant 0 : index
    %35 = vector.load %arg4[%c2_48, %c0_49, %c0_50] : memref<9x10x20xf32, #tpu.memory_space<vmem>>, vector<1x10x20xf32>
    %36 = vector.shape_cast %35 : vector<1x10x20xf32> to vector<10x20xf32>
    %cst_51 = arith.constant dense<0.000000e+00> : vector<32x20xf32>
    %37 = tpu.matmul %34, %36, %cst_51 {dimension_numbers = #tpu.dot_dimension_numbers<[1], [0], [0], [1], [0, 0, 1, 1], [], []>} : vector<32x10xf32>, vector<10x20xf32>, vector<32x20xf32> -> vector<32x20xf32>
    %38 = arith.addf %32, %37 : vector<32x20xf32>
    %c0_52 = arith.constant 0 : index
    %c1_53 = arith.constant 1 : index
    %c0_54 = arith.constant 0 : index
    %c0_55 = arith.constant 0 : index
    %39 = tpu.strided_load %arg15[%c0_52, %c1_53, %c0_54, %c0_55] {strides = array<i32: 1, 2, 2, 1>} : memref<2x10x10x10xf32, #tpu.memory_space<vmem>>, vector<2x4x4x10xf32>
    %40 = vector.shape_cast %39 : vector<2x4x4x10xf32> to vector<32x10xf32>
    %c3 = arith.constant 3 : index
    %c0_56 = arith.constant 0 : index
    %c0_57 = arith.constant 0 : index
    %41 = vector.load %arg4[%c3, %c0_56, %c0_57] : memref<9x10x20xf32, #tpu.memory_space<vmem>>, vector<1x10x20xf32>
    %42 = vector.shape_cast %41 : vector<1x10x20xf32> to vector<10x20xf32>
    %cst_58 = arith.constant dense<0.000000e+00> : vector<32x20xf32>
    %43 = tpu.matmul %40, %42, %cst_58 {dimension_numbers = #tpu.dot_dimension_numbers<[1], [0], [0], [1], [0, 0, 1, 1], [], []>} : vector<32x10xf32>, vector<10x20xf32>, vector<32x20xf32> -> vector<32x20xf32>
    %44 = arith.addf %38, %43 : vector<32x20xf32>
    %c0_59 = arith.constant 0 : index
    %c1_60 = arith.constant 1 : index
    %c1_61 = arith.constant 1 : index
    %c0_62 = arith.constant 0 : index
    %45 = tpu.strided_load %arg15[%c0_59, %c1_60, %c1_61, %c0_62] {strides = array<i32: 1, 2, 2, 1>} : memref<2x10x10x10xf32, #tpu.memory_space<vmem>>, vector<2x4x4x10xf32>
    %46 = vector.shape_cast %45 : vector<2x4x4x10xf32> to vector<32x10xf32>
    %c4 = arith.constant 4 : index
    %c0_63 = arith.constant 0 : index
    %c0_64 = arith.constant 0 : index
    %47 = vector.load %arg4[%c4, %c0_63, %c0_64] : memref<9x10x20xf32, #tpu.memory_space<vmem>>, vector<1x10x20xf32>
    %48 = vector.shape_cast %47 : vector<1x10x20xf32> to vector<10x20xf32>
    %cst_65 = arith.constant dense<0.000000e+00> : vector<32x20xf32>
    %49 = tpu.matmul %46, %48, %cst_65 {dimension_numbers = #tpu.dot_dimension_numbers<[1], [0], [0], [1], [0, 0, 1, 1], [], []>} : vector<32x10xf32>, vector<10x20xf32>, vector<32x20xf32> -> vector<32x20xf32>
    %50 = arith.addf %44, %49 : vector<32x20xf32>
    %c0_66 = arith.constant 0 : index
    %c1_67 = arith.constant 1 : index
    %c2_68 = arith.constant 2 : index
    %c0_69 = arith.constant 0 : index
    %51 = tpu.strided_load %arg15[%c0_66, %c1_67, %c2_68, %c0_69] {strides = array<i32: 1, 2, 2, 1>} : memref<2x10x10x10xf32, #tpu.memory_space<vmem>>, vector<2x4x4x10xf32>
    %52 = vector.shape_cast %51 : vector<2x4x4x10xf32> to vector<32x10xf32>
    %c5 = arith.constant 5 : index
    %c0_70 = arith.constant 0 : index
    %c0_71 = arith.constant 0 : index
    %53 = vector.load %arg4[%c5, %c0_70, %c0_71] : memref<9x10x20xf32, #tpu.memory_space<vmem>>, vector<1x10x20xf32>
    %54 = vector.shape_cast %53 : vector<1x10x20xf32> to vector<10x20xf32>
    %cst_72 = arith.constant dense<0.000000e+00> : vector<32x20xf32>
    %55 = tpu.matmul %52, %54, %cst_72 {dimension_numbers = #tpu.dot_dimension_numbers<[1], [0], [0], [1], [0, 0, 1, 1], [], []>} : vector<32x10xf32>, vector<10x20xf32>, vector<32x20xf32> -> vector<32x20xf32>
    %56 = arith.addf %50, %55 : vector<32x20xf32>
    %c0_73 = arith.constant 0 : index
    %c2_74 = arith.constant 2 : index
    %c0_75 = arith.constant 0 : index
    %c0_76 = arith.constant 0 : index
    %57 = tpu.strided_load %arg15[%c0_73, %c2_74, %c0_75, %c0_76] {strides = array<i32: 1, 2, 2, 1>} : memref<2x10x10x10xf32, #tpu.memory_space<vmem>>, vector<2x4x4x10xf32>
    %58 = vector.shape_cast %57 : vector<2x4x4x10xf32> to vector<32x10xf32>
    %c6 = arith.constant 6 : index
    %c0_77 = arith.constant 0 : index
    %c0_78 = arith.constant 0 : index
    %59 = vector.load %arg4[%c6, %c0_77, %c0_78] : memref<9x10x20xf32, #tpu.memory_space<vmem>>, vector<1x10x20xf32>
    %60 = vector.shape_cast %59 : vector<1x10x20xf32> to vector<10x20xf32>
    %cst_79 = arith.constant dense<0.000000e+00> : vector<32x20xf32>
    %61 = tpu.matmul %58, %60, %cst_79 {dimension_numbers = #tpu.dot_dimension_numbers<[1], [0], [0], [1], [0, 0, 1, 1], [], []>} : vector<32x10xf32>, vector<10x20xf32>, vector<32x20xf32> -> vector<32x20xf32>
    %62 = arith.addf %56, %61 : vector<32x20xf32>
    %c0_80 = arith.constant 0 : index
    %c2_81 = arith.constant 2 : index
    %c1_82 = arith.constant 1 : index
    %c0_83 = arith.constant 0 : index
    %63 = tpu.strided_load %arg15[%c0_80, %c2_81, %c1_82, %c0_83] {strides = array<i32: 1, 2, 2, 1>} : memref<2x10x10x10xf32, #tpu.memory_space<vmem>>, vector<2x4x4x10xf32>
    %64 = vector.shape_cast %63 : vector<2x4x4x10xf32> to vector<32x10xf32>
    %c7 = arith.constant 7 : index
    %c0_84 = arith.constant 0 : index
    %c0_85 = arith.constant 0 : index
    %65 = vector.load %arg4[%c7, %c0_84, %c0_85] : memref<9x10x20xf32, #tpu.memory_space<vmem>>, vector<1x10x20xf32>
    %66 = vector.shape_cast %65 : vector<1x10x20xf32> to vector<10x20xf32>
    %cst_86 = arith.constant dense<0.000000e+00> : vector<32x20xf32>
    %67 = tpu.matmul %64, %66, %cst_86 {dimension_numbers = #tpu.dot_dimension_numbers<[1], [0], [0], [1], [0, 0, 1, 1], [], []>} : vector<32x10xf32>, vector<10x20xf32>, vector<32x20xf32> -> vector<32x20xf32>
    %68 = arith.addf %62, %67 : vector<32x20xf32>
    %c0_87 = arith.constant 0 : index
    %c2_88 = arith.constant 2 : index
    %c2_89 = arith.constant 2 : index
    %c0_90 = arith.constant 0 : index
    %69 = tpu.strided_load %arg15[%c0_87, %c2_88, %c2_89, %c0_90] {strides = array<i32: 1, 2, 2, 1>} : memref<2x10x10x10xf32, #tpu.memory_space<vmem>>, vector<2x4x4x10xf32>
    %70 = vector.shape_cast %69 : vector<2x4x4x10xf32> to vector<32x10xf32>
    %c8 = arith.constant 8 : index
    %c0_91 = arith.constant 0 : index
    %c0_92 = arith.constant 0 : index
    %71 = vector.load %arg4[%c8, %c0_91, %c0_92] : memref<9x10x20xf32, #tpu.memory_space<vmem>>, vector<1x10x20xf32>
    %72 = vector.shape_cast %71 : vector<1x10x20xf32> to vector<10x20xf32>
    %cst_93 = arith.constant dense<0.000000e+00> : vector<32x20xf32>
    %73 = tpu.matmul %70, %72, %cst_93 {dimension_numbers = #tpu.dot_dimension_numbers<[1], [0], [0], [1], [0, 0, 1, 1], [], []>} : vector<32x10xf32>, vector<10x20xf32>, vector<32x20xf32> -> vector<32x20xf32>
    %74 = arith.addf %68, %73 : vector<32x20xf32>
    %c0_94 = arith.constant 0 : index
    %c0_95 = arith.constant 0 : index
    %75 = vector.load %arg5[%c0_94, %c0_95] : memref<1x20xf32, #tpu.memory_space<vmem>>, vector<1x20xf32>
    %76 = vector.broadcast %75 : vector<1x20xf32> to vector<32x20xf32>
    %77 = arith.addf %74, %76 : vector<32x20xf32>
    %cst_96 = arith.constant 0.000000e+00 : f32
    %78 = vector.broadcast %cst_96 : f32 to vector<32x20xf32>
    %79 = arith.cmpf oge, %77, %78 : vector<32x20xf32>
    %cst_97 = arith.constant 2.000000e-01 : f32
    %80 = vector.broadcast %cst_97 : f32 to vector<32x20xf32>
    %81 = arith.mulf %80, %77 : vector<32x20xf32>
    %82 = arith.select %79, %77, %81 : vector<32x20xi1>, vector<32x20xf32>
    %83 = vector.shape_cast %82 : vector<32x20xf32> to vector<2x4x4x20xf32>
    %cst_98 = arith.constant 0.000000e+00 : f32
    %84 = vector.broadcast %cst_98 : f32 to vector<2x1x6x20xf32>
    %cst_99 = arith.constant 0.000000e+00 : f32
    %85 = vector.broadcast %cst_99 : f32 to vector<2x6x1x20xf32>
    %c0_100 = arith.constant 0 : index
    %c0_101 = arith.constant 0 : index
    %c0_102 = arith.constant 0 : index
    %c0_103 = arith.constant 0 : index
    %86 = vector.load %arg16[%c0_100, %c0_101, %c0_102, %c0_103] : memref<2x6x6x20xf32, #tpu.memory_space<vmem>>, vector<2x1x6x20xf32>
    tpu.vector_store %arg16[%c0_100, %c0_101, %c0_102, %c0_103], %84 {strides = array<i32>} : memref<2x6x6x20xf32, #tpu.memory_space<vmem>>, vector<2x1x6x20xf32>,
    %c0_104 = arith.constant 0 : index
    %c5_105 = arith.constant 5 : index
    %c0_106 = arith.constant 0 : index
    %c0_107 = arith.constant 0 : index
    %87 = vector.load %arg16[%c0_104, %c5_105, %c0_106, %c0_107] : memref<2x6x6x20xf32, #tpu.memory_space<vmem>>, vector<2x1x6x20xf32>
    tpu.vector_store %arg16[%c0_104, %c5_105, %c0_106, %c0_107], %84 {strides = array<i32>} : memref<2x6x6x20xf32, #tpu.memory_space<vmem>>, vector<2x1x6x20xf32>,
    %c0_108 = arith.constant 0 : index
    %c0_109 = arith.constant 0 : index
    %c0_110 = arith.constant 0 : index
    %c0_111 = arith.constant 0 : index
    %88 = vector.load %arg16[%c0_108, %c0_109, %c0_110, %c0_111] : memref<2x6x6x20xf32, #tpu.memory_space<vmem>>, vector<2x6x1x20xf32>
    tpu.vector_store %arg16[%c0_108, %c0_109, %c0_110, %c0_111], %85 {strides = array<i32>} : memref<2x6x6x20xf32, #tpu.memory_space<vmem>>, vector<2x6x1x20xf32>,
    %c0_112 = arith.constant 0 : index
    %c0_113 = arith.constant 0 : index
    %c5_114 = arith.constant 5 : index
    %c0_115 = arith.constant 0 : index
    %89 = vector.load %arg16[%c0_112, %c0_113, %c5_114, %c0_115] : memref<2x6x6x20xf32, #tpu.memory_space<vmem>>, vector<2x6x1x20xf32>
    tpu.vector_store %arg16[%c0_112, %c0_113, %c5_114, %c0_115], %85 {strides = array<i32>} : memref<2x6x6x20xf32, #tpu.memory_space<vmem>>, vector<2x6x1x20xf32>,
    %c0_116 = arith.constant 0 : index
    %c1_117 = arith.constant 1 : index
    %c1_118 = arith.constant 1 : index
    %c0_119 = arith.constant 0 : index
    %90 = vector.load %arg16[%c0_116, %c1_117, %c1_118, %c0_119] : memref<2x6x6x20xf32, #tpu.memory_space<vmem>>, vector<2x4x4x20xf32>
    tpu.vector_store %arg16[%c0_116, %c1_117, %c1_118, %c0_119], %83 {strides = array<i32>} : memref<2x6x6x20xf32, #tpu.memory_space<vmem>>, vector<2x4x4x20xf32>,
    %cst_120 = arith.constant 0.000000e+00 : f32
    %91 = vector.broadcast %cst_120 : f32 to vector<8x40xf32>
    %c0_121 = arith.constant 0 : index
    %c0_122 = arith.constant 0 : index
    %c0_123 = arith.constant 0 : index
    %c0_124 = arith.constant 0 : index
    %92 = tpu.strided_load %arg16[%c0_121, %c0_122, %c0_123, %c0_124] {strides = array<i32: 1, 2, 2, 1>} : memref<2x6x6x20xf32, #tpu.memory_space<vmem>>, vector<2x2x2x20xf32>
    %93 = vector.shape_cast %92 : vector<2x2x2x20xf32> to vector<8x20xf32>
    %c0_125 = arith.constant 0 : index
    %c0_126 = arith.constant 0 : index
    %c0_127 = arith.constant 0 : index
    %94 = vector.load %arg6[%c0_125, %c0_126, %c0_127] : memref<9x20x40xf32, #tpu.memory_space<vmem>>, vector<1x20x40xf32>
    %95 = vector.shape_cast %94 : vector<1x20x40xf32> to vector<20x40xf32>
    %cst_128 = arith.constant dense<0.000000e+00> : vector<8x40xf32>
    %96 = tpu.matmul %93, %95, %cst_128 {dimension_numbers = #tpu.dot_dimension_numbers<[1], [0], [0], [1], [0, 0, 1, 1], [], []>} : vector<8x20xf32>, vector<20x40xf32>, vector<8x40xf32> -> vector<8x40xf32>
    %97 = arith.addf %91, %96 : vector<8x40xf32>
    %c0_129 = arith.constant 0 : index
    %c0_130 = arith.constant 0 : index
    %c1_131 = arith.constant 1 : index
    %c0_132 = arith.constant 0 : index
    %98 = tpu.strided_load %arg16[%c0_129, %c0_130, %c1_131, %c0_132] {strides = array<i32: 1, 2, 2, 1>} : memref<2x6x6x20xf32, #tpu.memory_space<vmem>>, vector<2x2x2x20xf32>
    %99 = vector.shape_cast %98 : vector<2x2x2x20xf32> to vector<8x20xf32>
    %c1_133 = arith.constant 1 : index
    %c0_134 = arith.constant 0 : index
    %c0_135 = arith.constant 0 : index
    %100 = vector.load %arg6[%c1_133, %c0_134, %c0_135] : memref<9x20x40xf32, #tpu.memory_space<vmem>>, vector<1x20x40xf32>
    %101 = vector.shape_cast %100 : vector<1x20x40xf32> to vector<20x40xf32>
    %cst_136 = arith.constant dense<0.000000e+00> : vector<8x40xf32>
    %102 = tpu.matmul %99, %101, %cst_136 {dimension_numbers = #tpu.dot_dimension_numbers<[1], [0], [0], [1], [0, 0, 1, 1], [], []>} : vector<8x20xf32>, vector<20x40xf32>, vector<8x40xf32> -> vector<8x40xf32>
    %103 = arith.addf %97, %102 : vector<8x40xf32>
    %c0_137 = arith.constant 0 : index
    %c0_138 = arith.constant 0 : index
    %c2_139 = arith.constant 2 : index
    %c0_140 = arith.constant 0 : index
    %104 = tpu.strided_load %arg16[%c0_137, %c0_138, %c2_139, %c0_140] {strides = array<i32: 1, 2, 2, 1>} : memref<2x6x6x20xf32, #tpu.memory_space<vmem>>, vector<2x2x2x20xf32>
    %105 = vector.shape_cast %104 : vector<2x2x2x20xf32> to vector<8x20xf32>
    %c2_141 = arith.constant 2 : index
    %c0_142 = arith.constant 0 : index
    %c0_143 = arith.constant 0 : index
    %106 = vector.load %arg6[%c2_141, %c0_142, %c0_143] : memref<9x20x40xf32, #tpu.memory_space<vmem>>, vector<1x20x40xf32>
    %107 = vector.shape_cast %106 : vector<1x20x40xf32> to vector<20x40xf32>
    %cst_144 = arith.constant dense<0.000000e+00> : vector<8x40xf32>
    %108 = tpu.matmul %105, %107, %cst_144 {dimension_numbers = #tpu.dot_dimension_numbers<[1], [0], [0], [1], [0, 0, 1, 1], [], []>} : vector<8x20xf32>, vector<20x40xf32>, vector<8x40xf32> -> vector<8x40xf32>
    %109 = arith.addf %103, %108 : vector<8x40xf32>
    %c0_145 = arith.constant 0 : index
    %c1_146 = arith.constant 1 : index
    %c0_147 = arith.constant 0 : index
    %c0_148 = arith.constant 0 : index
    %110 = tpu.strided_load %arg16[%c0_145, %c1_146, %c0_147, %c0_148] {strides = array<i32: 1, 2, 2, 1>} : memref<2x6x6x20xf32, #tpu.memory_space<vmem>>, vector<2x2x2x20xf32>
    %111 = vector.shape_cast %110 : vector<2x2x2x20xf32> to vector<8x20xf32>
    %c3_149 = arith.constant 3 : index
    %c0_150 = arith.constant 0 : index
    %c0_151 = arith.constant 0 : index
    %112 = vector.load %arg6[%c3_149, %c0_150, %c0_151] : memref<9x20x40xf32, #tpu.memory_space<vmem>>, vector<1x20x40xf32>
    %113 = vector.shape_cast %112 : vector<1x20x40xf32> to vector<20x40xf32>
    %cst_152 = arith.constant dense<0.000000e+00> : vector<8x40xf32>
    %114 = tpu.matmul %111, %113, %cst_152 {dimension_numbers = #tpu.dot_dimension_numbers<[1], [0], [0], [1], [0, 0, 1, 1], [], []>} : vector<8x20xf32>, vector<20x40xf32>, vector<8x40xf32> -> vector<8x40xf32>
    %115 = arith.addf %109, %114 : vector<8x40xf32>
    %c0_153 = arith.constant 0 : index
    %c1_154 = arith.constant 1 : index
    %c1_155 = arith.constant 1 : index
    %c0_156 = arith.constant 0 : index
    %116 = tpu.strided_load %arg16[%c0_153, %c1_154, %c1_155, %c0_156] {strides = array<i32: 1, 2, 2, 1>} : memref<2x6x6x20xf32, #tpu.memory_space<vmem>>, vector<2x2x2x20xf32>
    %117 = vector.shape_cast %116 : vector<2x2x2x20xf32> to vector<8x20xf32>
    %c4_157 = arith.constant 4 : index
    %c0_158 = arith.constant 0 : index
    %c0_159 = arith.constant 0 : index
    %118 = vector.load %arg6[%c4_157, %c0_158, %c0_159] : memref<9x20x40xf32, #tpu.memory_space<vmem>>, vector<1x20x40xf32>
    %119 = vector.shape_cast %118 : vector<1x20x40xf32> to vector<20x40xf32>
    %cst_160 = arith.constant dense<0.000000e+00> : vector<8x40xf32>
    %120 = tpu.matmul %117, %119, %cst_160 {dimension_numbers = #tpu.dot_dimension_numbers<[1], [0], [0], [1], [0, 0, 1, 1], [], []>} : vector<8x20xf32>, vector<20x40xf32>, vector<8x40xf32> -> vector<8x40xf32>
    %121 = arith.addf %115, %120 : vector<8x40xf32>
    %c0_161 = arith.constant 0 : index
    %c1_162 = arith.constant 1 : index
    %c2_163 = arith.constant 2 : index
    %c0_164 = arith.constant 0 : index
    %122 = tpu.strided_load %arg16[%c0_161, %c1_162, %c2_163, %c0_164] {strides = array<i32: 1, 2, 2, 1>} : memref<2x6x6x20xf32, #tpu.memory_space<vmem>>, vector<2x2x2x20xf32>
    %123 = vector.shape_cast %122 : vector<2x2x2x20xf32> to vector<8x20xf32>
    %c5_165 = arith.constant 5 : index
    %c0_166 = arith.constant 0 : index
    %c0_167 = arith.constant 0 : index
    %124 = vector.load %arg6[%c5_165, %c0_166, %c0_167] : memref<9x20x40xf32, #tpu.memory_space<vmem>>, vector<1x20x40xf32>
    %125 = vector.shape_cast %124 : vector<1x20x40xf32> to vector<20x40xf32>
    %cst_168 = arith.constant dense<0.000000e+00> : vector<8x40xf32>
    %126 = tpu.matmul %123, %125, %cst_168 {dimension_numbers = #tpu.dot_dimension_numbers<[1], [0], [0], [1], [0, 0, 1, 1], [], []>} : vector<8x20xf32>, vector<20x40xf32>, vector<8x40xf32> -> vector<8x40xf32>
    %127 = arith.addf %121, %126 : vector<8x40xf32>
    %c0_169 = arith.constant 0 : index
    %c2_170 = arith.constant 2 : index
    %c0_171 = arith.constant 0 : index
    %c0_172 = arith.constant 0 : index
    %128 = tpu.strided_load %arg16[%c0_169, %c2_170, %c0_171, %c0_172] {strides = array<i32: 1, 2, 2, 1>} : memref<2x6x6x20xf32, #tpu.memory_space<vmem>>, vector<2x2x2x20xf32>
    %129 = vector.shape_cast %128 : vector<2x2x2x20xf32> to vector<8x20xf32>
    %c6_173 = arith.constant 6 : index
    %c0_174 = arith.constant 0 : index
    %c0_175 = arith.constant 0 : index
    %130 = vector.load %arg6[%c6_173, %c0_174, %c0_175] : memref<9x20x40xf32, #tpu.memory_space<vmem>>, vector<1x20x40xf32>
    %131 = vector.shape_cast %130 : vector<1x20x40xf32> to vector<20x40xf32>
    %cst_176 = arith.constant dense<0.000000e+00> : vector<8x40xf32>
    %132 = tpu.matmul %129, %131, %cst_176 {dimension_numbers = #tpu.dot_dimension_numbers<[1], [0], [0], [1], [0, 0, 1, 1], [], []>} : vector<8x20xf32>, vector<20x40xf32>, vector<8x40xf32> -> vector<8x40xf32>
    %133 = arith.addf %127, %132 : vector<8x40xf32>
    %c0_177 = arith.constant 0 : index
    %c2_178 = arith.constant 2 : index
    %c1_179 = arith.constant 1 : index
    %c0_180 = arith.constant 0 : index
    %134 = tpu.strided_load %arg16[%c0_177, %c2_178, %c1_179, %c0_180] {strides = array<i32: 1, 2, 2, 1>} : memref<2x6x6x20xf32, #tpu.memory_space<vmem>>, vector<2x2x2x20xf32>
    %135 = vector.shape_cast %134 : vector<2x2x2x20xf32> to vector<8x20xf32>
    %c7_181 = arith.constant 7 : index
    %c0_182 = arith.constant 0 : index
    %c0_183 = arith.constant 0 : index
    %136 = vector.load %arg6[%c7_181, %c0_182, %c0_183] : memref<9x20x40xf32, #tpu.memory_space<vmem>>, vector<1x20x40xf32>
    %137 = vector.shape_cast %136 : vector<1x20x40xf32> to vector<20x40xf32>
    %cst_184 = arith.constant dense<0.000000e+00> : vector<8x40xf32>
    %138 = tpu.matmul %135, %137, %cst_184 {dimension_numbers = #tpu.dot_dimension_numbers<[1], [0], [0], [1], [0, 0, 1, 1], [], []>} : vector<8x20xf32>, vector<20x40xf32>, vector<8x40xf32> -> vector<8x40xf32>
    %139 = arith.addf %133, %138 : vector<8x40xf32>
    %c0_185 = arith.constant 0 : index
    %c2_186 = arith.constant 2 : index
    %c2_187 = arith.constant 2 : index
    %c0_188 = arith.constant 0 : index
    %140 = tpu.strided_load %arg16[%c0_185, %c2_186, %c2_187, %c0_188] {strides = array<i32: 1, 2, 2, 1>} : memref<2x6x6x20xf32, #tpu.memory_space<vmem>>, vector<2x2x2x20xf32>
    %141 = vector.shape_cast %140 : vector<2x2x2x20xf32> to vector<8x20xf32>
    %c8_189 = arith.constant 8 : index
    %c0_190 = arith.constant 0 : index
    %c0_191 = arith.constant 0 : index
    %142 = vector.load %arg6[%c8_189, %c0_190, %c0_191] : memref<9x20x40xf32, #tpu.memory_space<vmem>>, vector<1x20x40xf32>
    %143 = vector.shape_cast %142 : vector<1x20x40xf32> to vector<20x40xf32>
    %cst_192 = arith.constant dense<0.000000e+00> : vector<8x40xf32>
    %144 = tpu.matmul %141, %143, %cst_192 {dimension_numbers = #tpu.dot_dimension_numbers<[1], [0], [0], [1], [0, 0, 1, 1], [], []>} : vector<8x20xf32>, vector<20x40xf32>, vector<8x40xf32> -> vector<8x40xf32>
    %145 = arith.addf %139, %144 : vector<8x40xf32>
    %c0_193 = arith.constant 0 : index
    %c0_194 = arith.constant 0 : index
    %146 = vector.load %arg7[%c0_193, %c0_194] : memref<1x40xf32, #tpu.memory_space<vmem>>, vector<1x40xf32>
    %147 = vector.broadcast %146 : vector<1x40xf32> to vector<8x40xf32>
    %148 = arith.addf %145, %147 : vector<8x40xf32>
    %cst_195 = arith.constant 0.000000e+00 : f32
    %149 = vector.broadcast %cst_195 : f32 to vector<8x40xf32>
    %150 = arith.cmpf oge, %148, %149 : vector<8x40xf32>
    %cst_196 = arith.constant 2.000000e-01 : f32
    %151 = vector.broadcast %cst_196 : f32 to vector<8x40xf32>
    %152 = arith.mulf %151, %148 : vector<8x40xf32>
    %153 = arith.select %150, %148, %152 : vector<8x40xi1>, vector<8x40xf32>
    %154 = vector.shape_cast %153 : vector<8x40xf32> to vector<2x2x2x40xf32>
    %cst_197 = arith.constant 0.000000e+00 : f32
    %155 = vector.broadcast %cst_197 : f32 to vector<2x1x4x40xf32>
    %cst_198 = arith.constant 0.000000e+00 : f32
    %156 = vector.broadcast %cst_198 : f32 to vector<2x4x1x40xf32>
    %c0_199 = arith.constant 0 : index
    %c0_200 = arith.constant 0 : index
    %c0_201 = arith.constant 0 : index
    %c0_202 = arith.constant 0 : index
    %157 = vector.load %arg17[%c0_199, %c0_200, %c0_201, %c0_202] : memref<2x4x4x40xf32, #tpu.memory_space<vmem>>, vector<2x1x4x40xf32>
    tpu.vector_store %arg17[%c0_199, %c0_200, %c0_201, %c0_202], %155 {strides = array<i32>} : memref<2x4x4x40xf32, #tpu.memory_space<vmem>>, vector<2x1x4x40xf32>,
    %c0_203 = arith.constant 0 : index
    %c3_204 = arith.constant 3 : index
    %c0_205 = arith.constant 0 : index
    %c0_206 = arith.constant 0 : index
    %158 = vector.load %arg17[%c0_203, %c3_204, %c0_205, %c0_206] : memref<2x4x4x40xf32, #tpu.memory_space<vmem>>, vector<2x1x4x40xf32>
    tpu.vector_store %arg17[%c0_203, %c3_204, %c0_205, %c0_206], %155 {strides = array<i32>} : memref<2x4x4x40xf32, #tpu.memory_space<vmem>>, vector<2x1x4x40xf32>,
    %c0_207 = arith.constant 0 : index
    %c0_208 = arith.constant 0 : index
    %c0_209 = arith.constant 0 : index
    %c0_210 = arith.constant 0 : index
    %159 = vector.load %arg17[%c0_207, %c0_208, %c0_209, %c0_210] : memref<2x4x4x40xf32, #tpu.memory_space<vmem>>, vector<2x4x1x40xf32>
    tpu.vector_store %arg17[%c0_207, %c0_208, %c0_209, %c0_210], %156 {strides = array<i32>} : memref<2x4x4x40xf32, #tpu.memory_space<vmem>>, vector<2x4x1x40xf32>,
    %c0_211 = arith.constant 0 : index
    %c0_212 = arith.constant 0 : index
    %c3_213 = arith.constant 3 : index
    %c0_214 = arith.constant 0 : index
    %160 = vector.load %arg17[%c0_211, %c0_212, %c3_213, %c0_214] : memref<2x4x4x40xf32, #tpu.memory_space<vmem>>, vector<2x4x1x40xf32>
    tpu.vector_store %arg17[%c0_211, %c0_212, %c3_213, %c0_214], %156 {strides = array<i32>} : memref<2x4x4x40xf32, #tpu.memory_space<vmem>>, vector<2x4x1x40xf32>,
    %c0_215 = arith.constant 0 : index
    %c1_216 = arith.constant 1 : index
    %c1_217 = arith.constant 1 : index
    %c0_218 = arith.constant 0 : index
    %161 = vector.load %arg17[%c0_215, %c1_216, %c1_217, %c0_218] : memref<2x4x4x40xf32, #tpu.memory_space<vmem>>, vector<2x2x2x40xf32>
    tpu.vector_store %arg17[%c0_215, %c1_216, %c1_217, %c0_218], %154 {strides = array<i32>} : memref<2x4x4x40xf32, #tpu.memory_space<vmem>>, vector<2x2x2x40xf32>,
    %cst_219 = arith.constant 0.000000e+00 : f32
    %162 = vector.broadcast %cst_219 : f32 to vector<2x80xf32>
    %c0_220 = arith.constant 0 : index
    %c0_221 = arith.constant 0 : index
    %c0_222 = arith.constant 0 : index
    %c0_223 = arith.constant 0 : index
    %163 = tpu.strided_load %arg17[%c0_220, %c0_221, %c0_222, %c0_223] {strides = array<i32: 1, 2, 2, 1>} : memref<2x4x4x40xf32, #tpu.memory_space<vmem>>, vector<2x1x1x40xf32>
    %164 = vector.shape_cast %163 : vector<2x1x1x40xf32> to vector<2x40xf32>
    %c0_224 = arith.constant 0 : index
    %c0_225 = arith.constant 0 : index
    %c0_226 = arith.constant 0 : index
    %165 = vector.load %arg8[%c0_224, %c0_225, %c0_226] : memref<9x40x80xf32, #tpu.memory_space<vmem>>, vector<1x40x80xf32>
    %166 = vector.shape_cast %165 : vector<1x40x80xf32> to vector<40x80xf32>
    %cst_227 = arith.constant dense<0.000000e+00> : vector<2x80xf32>
    %167 = tpu.matmul %164, %166, %cst_227 {dimension_numbers = #tpu.dot_dimension_numbers<[1], [0], [0], [1], [0, 0, 1, 1], [], []>} : vector<2x40xf32>, vector<40x80xf32>, vector<2x80xf32> -> vector<2x80xf32>
    %168 = arith.addf %162, %167 : vector<2x80xf32>
    %c0_228 = arith.constant 0 : index
    %c0_229 = arith.constant 0 : index
    %c1_230 = arith.constant 1 : index
    %c0_231 = arith.constant 0 : index
    %169 = tpu.strided_load %arg17[%c0_228, %c0_229, %c1_230, %c0_231] {strides = array<i32: 1, 2, 2, 1>} : memref<2x4x4x40xf32, #tpu.memory_space<vmem>>, vector<2x1x1x40xf32>
    %170 = vector.shape_cast %169 : vector<2x1x1x40xf32> to vector<2x40xf32>
    %c1_232 = arith.constant 1 : index
    %c0_233 = arith.constant 0 : index
    %c0_234 = arith.constant 0 : index
    %171 = vector.load %arg8[%c1_232, %c0_233, %c0_234] : memref<9x40x80xf32, #tpu.memory_space<vmem>>, vector<1x40x80xf32>
    %172 = vector.shape_cast %171 : vector<1x40x80xf32> to vector<40x80xf32>
    %cst_235 = arith.constant dense<0.000000e+00> : vector<2x80xf32>
    %173 = tpu.matmul %170, %172, %cst_235 {dimension_numbers = #tpu.dot_dimension_numbers<[1], [0], [0], [1], [0, 0, 1, 1], [], []>} : vector<2x40xf32>, vector<40x80xf32>, vector<2x80xf32> -> vector<2x80xf32>
    %174 = arith.addf %168, %173 : vector<2x80xf32>
    %c0_236 = arith.constant 0 : index
    %c0_237 = arith.constant 0 : index
    %c2_238 = arith.constant 2 : index
    %c0_239 = arith.constant 0 : index
    %175 = tpu.strided_load %arg17[%c0_236, %c0_237, %c2_238, %c0_239] {strides = array<i32: 1, 2, 2, 1>} : memref<2x4x4x40xf32, #tpu.memory_space<vmem>>, vector<2x1x1x40xf32>
    %176 = vector.shape_cast %175 : vector<2x1x1x40xf32> to vector<2x40xf32>
    %c2_240 = arith.constant 2 : index
    %c0_241 = arith.constant 0 : index
    %c0_242 = arith.constant 0 : index
    %177 = vector.load %arg8[%c2_240, %c0_241, %c0_242] : memref<9x40x80xf32, #tpu.memory_space<vmem>>, vector<1x40x80xf32>
    %178 = vector.shape_cast %177 : vector<1x40x80xf32> to vector<40x80xf32>
    %cst_243 = arith.constant dense<0.000000e+00> : vector<2x80xf32>
    %179 = tpu.matmul %176, %178, %cst_243 {dimension_numbers = #tpu.dot_dimension_numbers<[1], [0], [0], [1], [0, 0, 1, 1], [], []>} : vector<2x40xf32>, vector<40x80xf32>, vector<2x80xf32> -> vector<2x80xf32>
    %180 = arith.addf %174, %179 : vector<2x80xf32>
    %c0_244 = arith.constant 0 : index
    %c1_245 = arith.constant 1 : index
    %c0_246 = arith.constant 0 : index
    %c0_247 = arith.constant 0 : index
    %181 = tpu.strided_load %arg17[%c0_244, %c1_245, %c0_246, %c0_247] {strides = array<i32: 1, 2, 2, 1>} : memref<2x4x4x40xf32, #tpu.memory_space<vmem>>, vector<2x1x1x40xf32>
    %182 = vector.shape_cast %181 : vector<2x1x1x40xf32> to vector<2x40xf32>
    %c3_248 = arith.constant 3 : index
    %c0_249 = arith.constant 0 : index
    %c0_250 = arith.constant 0 : index
    %183 = vector.load %arg8[%c3_248, %c0_249, %c0_250] : memref<9x40x80xf32, #tpu.memory_space<vmem>>, vector<1x40x80xf32>
    %184 = vector.shape_cast %183 : vector<1x40x80xf32> to vector<40x80xf32>
    %cst_251 = arith.constant dense<0.000000e+00> : vector<2x80xf32>
    %185 = tpu.matmul %182, %184, %cst_251 {dimension_numbers = #tpu.dot_dimension_numbers<[1], [0], [0], [1], [0, 0, 1, 1], [], []>} : vector<2x40xf32>, vector<40x80xf32>, vector<2x80xf32> -> vector<2x80xf32>
    %186 = arith.addf %180, %185 : vector<2x80xf32>
    %c0_252 = arith.constant 0 : index
    %c1_253 = arith.constant 1 : index
    %c1_254 = arith.constant 1 : index
    %c0_255 = arith.constant 0 : index
    %187 = tpu.strided_load %arg17[%c0_252, %c1_253, %c1_254, %c0_255] {strides = array<i32: 1, 2, 2, 1>} : memref<2x4x4x40xf32, #tpu.memory_space<vmem>>, vector<2x1x1x40xf32>
    %188 = vector.shape_cast %187 : vector<2x1x1x40xf32> to vector<2x40xf32>
    %c4_256 = arith.constant 4 : index
    %c0_257 = arith.constant 0 : index
    %c0_258 = arith.constant 0 : index
    %189 = vector.load %arg8[%c4_256, %c0_257, %c0_258] : memref<9x40x80xf32, #tpu.memory_space<vmem>>, vector<1x40x80xf32>
    %190 = vector.shape_cast %189 : vector<1x40x80xf32> to vector<40x80xf32>
    %cst_259 = arith.constant dense<0.000000e+00> : vector<2x80xf32>
    %191 = tpu.matmul %188, %190, %cst_259 {dimension_numbers = #tpu.dot_dimension_numbers<[1], [0], [0], [1], [0, 0, 1, 1], [], []>} : vector<2x40xf32>, vector<40x80xf32>, vector<2x80xf32> -> vector<2x80xf32>
    %192 = arith.addf %186, %191 : vector<2x80xf32>
    %c0_260 = arith.constant 0 : index
    %c1_261 = arith.constant 1 : index
    %c2_262 = arith.constant 2 : index
    %c0_263 = arith.constant 0 : index
    %193 = tpu.strided_load %arg17[%c0_260, %c1_261, %c2_262, %c0_263] {strides = array<i32: 1, 2, 2, 1>} : memref<2x4x4x40xf32, #tpu.memory_space<vmem>>, vector<2x1x1x40xf32>
    %194 = vector.shape_cast %193 : vector<2x1x1x40xf32> to vector<2x40xf32>
    %c5_264 = arith.constant 5 : index
    %c0_265 = arith.constant 0 : index
    %c0_266 = arith.constant 0 : index
    %195 = vector.load %arg8[%c5_264, %c0_265, %c0_266] : memref<9x40x80xf32, #tpu.memory_space<vmem>>, vector<1x40x80xf32>
    %196 = vector.shape_cast %195 : vector<1x40x80xf32> to vector<40x80xf32>
    %cst_267 = arith.constant dense<0.000000e+00> : vector<2x80xf32>
    %197 = tpu.matmul %194, %196, %cst_267 {dimension_numbers = #tpu.dot_dimension_numbers<[1], [0], [0], [1], [0, 0, 1, 1], [], []>} : vector<2x40xf32>, vector<40x80xf32>, vector<2x80xf32> -> vector<2x80xf32>
    %198 = arith.addf %192, %197 : vector<2x80xf32>
    %c0_268 = arith.constant 0 : index
    %c2_269 = arith.constant 2 : index
    %c0_270 = arith.constant 0 : index
    %c0_271 = arith.constant 0 : index
    %199 = tpu.strided_load %arg17[%c0_268, %c2_269, %c0_270, %c0_271] {strides = array<i32: 1, 2, 2, 1>} : memref<2x4x4x40xf32, #tpu.memory_space<vmem>>, vector<2x1x1x40xf32>
    %200 = vector.shape_cast %199 : vector<2x1x1x40xf32> to vector<2x40xf32>
    %c6_272 = arith.constant 6 : index
    %c0_273 = arith.constant 0 : index
    %c0_274 = arith.constant 0 : index
    %201 = vector.load %arg8[%c6_272, %c0_273, %c0_274] : memref<9x40x80xf32, #tpu.memory_space<vmem>>, vector<1x40x80xf32>
    %202 = vector.shape_cast %201 : vector<1x40x80xf32> to vector<40x80xf32>
    %cst_275 = arith.constant dense<0.000000e+00> : vector<2x80xf32>
    %203 = tpu.matmul %200, %202, %cst_275 {dimension_numbers = #tpu.dot_dimension_numbers<[1], [0], [0], [1], [0, 0, 1, 1], [], []>} : vector<2x40xf32>, vector<40x80xf32>, vector<2x80xf32> -> vector<2x80xf32>
    %204 = arith.addf %198, %203 : vector<2x80xf32>
    %c0_276 = arith.constant 0 : index
    %c2_277 = arith.constant 2 : index
    %c1_278 = arith.constant 1 : index
    %c0_279 = arith.constant 0 : index
    %205 = tpu.strided_load %arg17[%c0_276, %c2_277, %c1_278, %c0_279] {strides = array<i32: 1, 2, 2, 1>} : memref<2x4x4x40xf32, #tpu.memory_space<vmem>>, vector<2x1x1x40xf32>
    %206 = vector.shape_cast %205 : vector<2x1x1x40xf32> to vector<2x40xf32>
    %c7_280 = arith.constant 7 : index
    %c0_281 = arith.constant 0 : index
    %c0_282 = arith.constant 0 : index
    %207 = vector.load %arg8[%c7_280, %c0_281, %c0_282] : memref<9x40x80xf32, #tpu.memory_space<vmem>>, vector<1x40x80xf32>
    %208 = vector.shape_cast %207 : vector<1x40x80xf32> to vector<40x80xf32>
    %cst_283 = arith.constant dense<0.000000e+00> : vector<2x80xf32>
    %209 = tpu.matmul %206, %208, %cst_283 {dimension_numbers = #tpu.dot_dimension_numbers<[1], [0], [0], [1], [0, 0, 1, 1], [], []>} : vector<2x40xf32>, vector<40x80xf32>, vector<2x80xf32> -> vector<2x80xf32>
    %210 = arith.addf %204, %209 : vector<2x80xf32>
    %c0_284 = arith.constant 0 : index
    %c2_285 = arith.constant 2 : index
    %c2_286 = arith.constant 2 : index
    %c0_287 = arith.constant 0 : index
    %211 = tpu.strided_load %arg17[%c0_284, %c2_285, %c2_286, %c0_287] {strides = array<i32: 1, 2, 2, 1>} : memref<2x4x4x40xf32, #tpu.memory_space<vmem>>, vector<2x1x1x40xf32>
    %212 = vector.shape_cast %211 : vector<2x1x1x40xf32> to vector<2x40xf32>
    %c8_288 = arith.constant 8 : index
    %c0_289 = arith.constant 0 : index
    %c0_290 = arith.constant 0 : index
    %213 = vector.load %arg8[%c8_288, %c0_289, %c0_290] : memref<9x40x80xf32, #tpu.memory_space<vmem>>, vector<1x40x80xf32>
    %214 = vector.shape_cast %213 : vector<1x40x80xf32> to vector<40x80xf32>
    %cst_291 = arith.constant dense<0.000000e+00> : vector<2x80xf32>
    %215 = tpu.matmul %212, %214, %cst_291 {dimension_numbers = #tpu.dot_dimension_numbers<[1], [0], [0], [1], [0, 0, 1, 1], [], []>} : vector<2x40xf32>, vector<40x80xf32>, vector<2x80xf32> -> vector<2x80xf32>
    %216 = arith.addf %210, %215 : vector<2x80xf32>
    %c0_292 = arith.constant 0 : index
    %c0_293 = arith.constant 0 : index
    %217 = vector.load %arg9[%c0_292, %c0_293] : memref<1x80xf32, #tpu.memory_space<vmem>>, vector<1x80xf32>
    %218 = vector.broadcast %217 : vector<1x80xf32> to vector<2x80xf32>
    %219 = arith.addf %216, %218 : vector<2x80xf32>
    %cst_294 = arith.constant 0.000000e+00 : f32
    %220 = vector.broadcast %cst_294 : f32 to vector<2x80xf32>
    %221 = arith.cmpf oge, %219, %220 : vector<2x80xf32>
    %cst_295 = arith.constant 2.000000e-01 : f32
    %222 = vector.broadcast %cst_295 : f32 to vector<2x80xf32>
    %223 = arith.mulf %222, %219 : vector<2x80xf32>
    %224 = arith.select %221, %219, %223 : vector<2x80xi1>, vector<2x80xf32>
    %225 = vector.shape_cast %224 : vector<2x80xf32> to vector<2x1x1x80xf32>
    %cst_296 = arith.constant dense<0.000000e+00> : vector<2x80xf32>
    %226 = vector.multi_reduction <add>, %225, %cst_296 [1, 2] : vector<2x1x1x80xf32> to vector<2x80xf32>
    %cst_297 = arith.constant 1.000000e+00 : f32
    %227 = vector.broadcast %cst_297 : f32 to vector<2x80xf32>
    %228 = arith.divf %226, %227 : vector<2x80xf32>
    %c0_298 = arith.constant 0 : index
    %c0_299 = arith.constant 0 : index
    %229 = vector.load %arg10[%c0_298, %c0_299] : memref<80x40xf32, #tpu.memory_space<vmem>>, vector<80x40xf32>
    %cst_300 = arith.constant dense<0.000000e+00> : vector<2x40xf32>
    %230 = tpu.matmul %228, %229, %cst_300 {dimension_numbers = #tpu.dot_dimension_numbers<[1], [0], [0], [1], [0, 0, 1, 1], [], []>} : vector<2x80xf32>, vector<80x40xf32>, vector<2x40xf32> -> vector<2x40xf32>
    %c0_301 = arith.constant 0 : index
    %c0_302 = arith.constant 0 : index
    %231 = vector.load %arg11[%c0_301, %c0_302] : memref<1x40xf32, #tpu.memory_space<vmem>>, vector<1x40xf32>
    %232 = vector.broadcast %231 : vector<1x40xf32> to vector<2x40xf32>
    %233 = arith.addf %230, %232 : vector<2x40xf32>
    %cst_303 = arith.constant 0.000000e+00 : f32
    %234 = vector.broadcast %cst_303 : f32 to vector<2x40xf32>
    %235 = arith.cmpf oge, %233, %234 : vector<2x40xf32>
    %cst_304 = arith.constant 2.000000e-01 : f32
    %236 = vector.broadcast %cst_304 : f32 to vector<2x40xf32>
    %237 = arith.mulf %236, %233 : vector<2x40xf32>
    %238 = arith.select %235, %233, %237 : vector<2x40xi1>, vector<2x40xf32>
    %c0_305 = arith.constant 0 : index
    %c0_306 = arith.constant 0 : index
    %239 = vector.load %arg12[%c0_305, %c0_306] : memref<40x1xf32, #tpu.memory_space<vmem>>, vector<40x1xf32>
    %cst_307 = arith.constant dense<0.000000e+00> : vector<2x1xf32>
    %240 = tpu.matmul %238, %239, %cst_307 {dimension_numbers = #tpu.dot_dimension_numbers<[1], [0], [0], [1], [0, 0, 1, 1], [], []>} : vector<2x40xf32>, vector<40x1xf32>, vector<2x1xf32> -> vector<2x1xf32>
    %c0_308 = arith.constant 0 : index
    %c0_309 = arith.constant 0 : index
    %241 = vector.load %arg13[%c0_308, %c0_309] : memref<1x1xf32, #tpu.memory_space<vmem>>, vector<1x1xf32>
    %242 = vector.broadcast %241 : vector<1x1xf32> to vector<2x1xf32>
    %243 = arith.addf %240, %242 : vector<2x1xf32>
    %244 = vector.shape_cast %243 : vector<2x1xf32> to vector<1x1x2xf32>
    %c0_310 = arith.constant 0 : index
    %c0_311 = arith.constant 0 : index
    %c0_312 = arith.constant 0 : index
    %245 = vector.load %arg14[%c0_310, %c0_311, %c0_312] : memref<1x1x2xf32, #tpu.memory_space<vmem>>, vector<1x1x2xf32>
    tpu.vector_store %arg14[%c0_310, %c0_311, %c0_312], %244 {strides = array<i32>} : memref<1x1x2xf32, #tpu.memory_space<vmem>>, vector<1x1x2xf32>,
    return
  }
  func.func @transform_0(%arg0: i32) -> (i32, i32, i32) {
    %c0_i32 = arith.constant 0 : i32
    %c0_i32_0 = arith.constant 0 : i32
    %c0_i32_1 = arith.constant 0 : i32
    return %arg0, %c0_i32, %c0_i32_0 : i32, i32, i32
  }
  func.func @transform_1(%arg0: i32) -> (i32, i32) {
    %c0_i32 = arith.constant 0 : i32
    %c0_i32_0 = arith.constant 0 : i32
    %c0_i32_1 = arith.constant 0 : i32
    return %c0_i32, %c0_i32_0 : i32, i32
  }
  func.func @transform_2(%arg0: i32) -> (i32, i32) {
    %c0_i32 = arith.constant 0 : i32
    %c0_i32_0 = arith.constant 0 : i32
    %c0_i32_1 = arith.constant 0 : i32
    return %c0_i32, %c0_i32_0 : i32, i32
  }
  func.func @transform_3(%arg0: i32) -> (i32, i32, i32) {
    %c0_i32 = arith.constant 0 : i32
    %c0_i32_0 = arith.constant 0 : i32
    %c0_i32_1 = arith.constant 0 : i32
    %c0_i32_2 = arith.constant 0 : i32
    return %c0_i32, %c0_i32_0, %c0_i32_1 : i32, i32, i32
  }
  func.func @transform_4(%arg0: i32) -> (i32, i32) {
    %c0_i32 = arith.constant 0 : i32
    %c0_i32_0 = arith.constant 0 : i32
    %c0_i32_1 = arith.constant 0 : i32
    return %c0_i32, %c0_i32_0 : i32, i32
  }
  func.func @transform_5(%arg0: i32) -> (i32, i32, i32) {
    %c0_i32 = arith.constant 0 : i32
    %c0_i32_0 = arith.constant 0 : i32
    %c0_i32_1 = arith.constant 0 : i32
    %c0_i32_2 = arith.constant 0 : i32
    return %c0_i32, %c0_i32_0, %c0_i32_1 : i32, i32, i32
  }
  func.func @transform_6(%arg0: i32) -> (i32, i32) {
    %c0_i32 = arith.constant 0 : i32
    %c0_i32_0 = arith.constant 0 : i32
    %c0_i32_1 = arith.constant 0 : i32
    return %c0_i32, %c0_i32_0 : i32, i32
  }
  func.func @transform_7(%arg0: i32) -> (i32, i32, i32) {
    %c0_i32 = arith.constant 0 : i32
    %c0_i32_0 = arith.constant 0 : i32
    %c0_i32_1 = arith.constant 0 : i32
    %c0_i32_2 = arith.constant 0 : i32
    return %c0_i32, %c0_i32_0, %c0_i32_1 : i32, i32, i32
  }
  func.func @transform_8(%arg0: i32) -> (i32, i32) {
    %c0_i32 = arith.constant 0 : i32
    %c0_i32_0 = arith.constant 0 : i32
    %c0_i32_1 = arith.constant 0 : i32
    return %c0_i32, %c0_i32_0 : i32, i32
  }
  func.func @transform_9(%arg0: i32) -> (i32, i32) {
    %c0_i32 = arith.constant 0 : i32
    %c0_i32_0 = arith.constant 0 : i32
    %c0_i32_1 = arith.constant 0 : i32
    return %c0_i32, %c0_i32_0 : i32, i32
  }
  func.func @transform_10(%arg0: i32) -> (i32, i32) {
    %c0_i32 = arith.constant 0 : i32
    %c0_i32_0 = arith.constant 0 : i32
    %c0_i32_1 = arith.constant 0 : i32
    return %c0_i32, %c0_i32_0 : i32, i32
  }
  func.func @transform_11(%arg0: i32) -> (i32, i32) {
    %c0_i32 = arith.constant 0 : i32
    %c0_i32_0 = arith.constant 0 : i32
    %c0_i32_1 = arith.constant 0 : i32
    return %c0_i32, %c0_i32_0 : i32, i32
  }
  func.func @transform_12(%arg0: i32) -> (i32, i32) {
    %c0_i32 = arith.constant 0 : i32
    %c0_i32_0 = arith.constant 0 : i32
    %c0_i32_1 = arith.constant 0 : i32
    return %c0_i32, %c0_i32_0 : i32, i32
  }
  func.func @transform_13(%arg0: i32) -> (i32, i32, i32) {
    %c0_i32 = arith.constant 0 : i32
    %c0_i32_0 = arith.constant 0 : i32
    %c0_i32_1 = arith.constant 0 : i32
    return %arg0, %c0_i32, %c0_i32_0 : i32, i32, i32
  }
}

</mosaic_0001>

<llo_original>
// kernel: custom-call.1
$region0: #{custom-call.1}
  %s0 = inlined_call_operand.vmem [shape: f32[20], index: 0, kind: output, shape index: {}]

// kernel: custom-call.2
$region0: #{custom-call.2}
  %s0 = inlined_call_operand.vmem [shape: f32[40], index: 0, kind: output, shape index: {}]

// kernel: custom-call.3
$region0: #{custom-call.3}
  %s0 = inlined_call_operand.vmem [shape: f32[80], index: 0, kind: output, shape index: {}]

// kernel: custom-call
$region0: #{custom-call}
  %s0 = inlined_call_operand.vmem [shape: f32[10], index: 0, kind: output, shape index: {}]

// kernel: forward_pallas.1
$region0: #{forward_pallas.1}
  #allocation0 [shape = 'u32[]', space=smem, size = 0x4, offset = 0x4, fixed_abs, tag = 'smem constant byte address 0x4 - core index']
  #allocation1 [shape = 'u32[144,128]{1,0:T(1,128)}', space=vmem, size = 0x12000, scoped, tag = 'internal scratch']
  #allocation2 [shape = 'f32[2,10,10,10]{3,2,1,0:T(8,128)}', space=vmem, size = 0x28000, scoped, tag = 'scratch operand']
  #allocation3 [shape = 'f32[2,6,6,20]{3,2,1,0:T(8,128)}', space=vmem, size = 0xc000, scoped, tag = 'scratch operand']
  #allocation4 [shape = 'f32[2,4,4,40]{3,2,1,0:T(4,128)}', space=vmem, size = 0x4000, scoped, tag = 'scratch operand']
  #allocation5 [shape = 'f32[1,1]{1,0:T(1,128)S(1)}', space=vmem, size = 0x200, scoped, tag = 'scoped memory for forward_pallas.1']
  %s0 = inlined_call_operand.vmem [shape: f32[2,64,50], index: 0, kind: input, shape index: {}]
  %s1 = inlined_call_operand.vmem [shape: f32[50,10], index: 1, kind: input, shape index: {}]
  %s2 = inlined_call_operand.vmem [shape: f32[1,10], index: 2, kind: input, shape index: {}]
  %s3 = inlined_call_operand.vmem [shape: f32[9,10,20], index: 3, kind: input, shape index: {}]
  %s4 = inlined_call_operand.vmem [shape: f32[1,20], index: 4, kind: input, shape index: {}]
  %s5 = inlined_call_operand.vmem [shape: f32[9,20,40], index: 5, kind: input, shape index: {}]
  %s6 = inlined_call_operand.vmem [shape: f32[1,40], index: 6, kind: input, shape index: {}]
  %s7 = inlined_call_operand.vmem [shape: f32[9,40,80], index: 7, kind: input, shape index: {}]
  %s8 = inlined_call_operand.vmem [shape: f32[1,80], index: 8, kind: input, shape index: {}]
  %s9 = inlined_call_operand.vmem [shape: f32[80,40], index: 9, kind: input, shape index: {}]
  %s10 = inlined_call_operand.vmem [shape: f32[1,40], index: 10, kind: input, shape index: {}]
  %s11 = inlined_call_operand.vmem [shape: f32[40,1], index: 11, kind: input, shape index: {}]
  %s12 = inlined_call_operand.<no memory space> [shape: f32[1,1], index: 12, kind: input, shape index: {}]
  %s13 = inlined_call_operand.hbm [shape: f32[1,1,2], index: 13, kind: output, shape index: {}]
  %s14 = sld [smem:[#allocation0]]
  $region62: #{forward_pallas.1} parent=0
    _
  %s16 = ssub.s32 1, %s14
  %s17 = scalar_select 0, %s16, %s14
  %v18 = vstv %s12
  %19 = vst [vmem:[#allocation5] sm:$0x1] %v18
  $region1: #{forward_pallas.1} parent=0
    #allocation6 [shape = 'u8[512]{0}', space=vmem, size = 0x400, scoped, tag = 'output window, operand 0, single buffered']
    #allocation7 [shape = 's32[1]{0}', space=sflag, size = 0x4, scoped, tag = 'scoped memory for forward_pallas.1']
    %20 = vsyncpa [#allocation7], 0
    // Predicated region
    $region2: #{forward_pallas.1} parent=1 // pred_check
      _
    $region3: #{forward_pallas.1} parent=1 // pred_check_branch
      %22 = sbr.rel (0) target = $region5
    $region4: #{forward_pallas.1} parent=1 // pred_region
      _
    $region5: #{forward_pallas.1} parent=1 // pred_fallthru
      _
    // Predicated region
    $region6: #{forward_pallas.1} parent=1 // pred_check
      _
    $region7: #{forward_pallas.1} parent=1 // pred_check_branch
      %24 = sbr.rel (0) target = $region9
    $region8: #{forward_pallas.1} parent=1 // pred_region
      _
    $region9: #{forward_pallas.1} parent=1 // pred_fallthru
      _
    // Predicated region
    $region10: #{forward_pallas.1} parent=1 // pred_check
      _
    $region11: #{forward_pallas.1} parent=1 // pred_check_branch
      %26 = sbr.rel (0) target = $region13
    $region12: #{forward_pallas.1} parent=1 // pred_region
      _
    $region13: #{forward_pallas.1} parent=1 // pred_fallthru
      _
    // Predicated region
    $region14: #{forward_pallas.1} parent=1 // pred_check
      _
    $region15: #{forward_pallas.1} parent=1 // pred_check_branch
      %28 = sbr.rel (0) target = $region17
    $region16: #{forward_pallas.1} parent=1 // pred_region
      _
    $region17: #{forward_pallas.1} parent=1 // pred_fallthru
      _
    // Predicated region
    $region18: #{forward_pallas.1} parent=1 // pred_check
      _
    $region19: #{forward_pallas.1} parent=1 // pred_check_branch
      %30 = sbr.rel (0) target = $region21
    $region20: #{forward_pallas.1} parent=1 // pred_region
      _
    $region21: #{forward_pallas.1} parent=1 // pred_fallthru
      _
    // Predicated region
    $region22: #{forward_pallas.1} parent=1 // pred_check
      _
    $region23: #{forward_pallas.1} parent=1 // pred_check_branch
      %32 = sbr.rel (0) target = $region25
    $region24: #{forward_pallas.1} parent=1 // pred_region
      _
    $region25: #{forward_pallas.1} parent=1 // pred_fallthru
      _
    // Predicated region
    $region26: #{forward_pallas.1} parent=1 // pred_check
      _
    $region27: #{forward_pallas.1} parent=1 // pred_check_branch
      %34 = sbr.rel (0) target = $region29
    $region28: #{forward_pallas.1} parent=1 // pred_region
      _
    $region29: #{forward_pallas.1} parent=1 // pred_fallthru
      _
    // Predicated region
    $region30: #{forward_pallas.1} parent=1 // pred_check
      _
    $region31: #{forward_pallas.1} parent=1 // pred_check_branch
      %36 = sbr.rel (0) target = $region33
    $region32: #{forward_pallas.1} parent=1 // pred_region
      _
    $region33: #{forward_pallas.1} parent=1 // pred_fallthru
      _
    // Predicated region
    $region34: #{forward_pallas.1} parent=1 // pred_check
      _
    $region35: #{forward_pallas.1} parent=1 // pred_check_branch
      %38 = sbr.rel (0) target = $region37
    $region36: #{forward_pallas.1} parent=1 // pred_region
      _
    $region37: #{forward_pallas.1} parent=1 // pred_fallthru
      _
    // Predicated region
    $region38: #{forward_pallas.1} parent=1 // pred_check
      _
    $region39: #{forward_pallas.1} parent=1 // pred_check_branch
      %40 = sbr.rel (0) target = $region41
    $region40: #{forward_pallas.1} parent=1 // pred_region
      _
    $region41: #{forward_pallas.1} parent=1 // pred_fallthru
      _
    // Predicated region
    $region42: #{forward_pallas.1} parent=1 // pred_check
      _
    $region43: #{forward_pallas.1} parent=1 // pred_check_branch
      %42 = sbr.rel (0) target = $region45
    $region44: #{forward_pallas.1} parent=1 // pred_region
      _
    $region45: #{forward_pallas.1} parent=1 // pred_fallthru
      _
    // Predicated region
    $region46: #{forward_pallas.1} parent=1 // pred_check
      _
    $region47: #{forward_pallas.1} parent=1 // pred_check_branch
      %44 = sbr.rel (0) target = $region49
    $region48: #{forward_pallas.1} parent=1 // pred_region
      _
    $region49: #{forward_pallas.1} parent=1 // pred_fallthru
      _
    // Predicated region
    $region50: #{forward_pallas.1} parent=1 // pred_check
      _
    $region51: #{forward_pallas.1} parent=1 // pred_check_branch
      %46 = sbr.rel (0) target = $region53
    $region52: #{forward_pallas.1} parent=1 // pred_region
      _
    $region53: #{forward_pallas.1} parent=1 // pred_fallthru
      _
    %v47 = vld [vmem:[%s0] sm:$0xff]
    %v48 = vld [vmem:[%s0 + $0x8] sm:$0xff]
    %v49 = vld [vmem:[%s0 + $0x10] sm:$0xff]
    %v50 = vld [vmem:[%s0 + $0x18] sm:$0xff]
    %v51 = vld [vmem:[%s0 + $0x20] sm:$0xff]
    %v52 = vld [vmem:[%s0 + $0x28] sm:$0xff]
    %v53 = vld [vmem:[%s0 + $0x30] sm:$0xff]
    %v54 = vld [vmem:[%s0 + $0x38] sm:$0xff]
    %v55 = vld [vmem:[%s0 + $0x40] sm:$0xff]
    %v56 = vld [vmem:[%s0 + $0x48] sm:$0xff]
    %v57 = vld [vmem:[%s0 + $0x50] sm:$0xff]
    %v58 = vld [vmem:[%s0 + $0x58] sm:$0xff]
    %v59 = vld [vmem:[%s0 + $0x60] sm:$0xff]
    %v60 = vld [vmem:[%s0 + $0x68] sm:$0xff]
    %v61 = vld [vmem:[%s0 + $0x70] sm:$0xff]
    %v62 = vld [vmem:[%s0 + $0x78] sm:$0xff]
    %v63 = vld [vmem:[%s1] sm:$0xff]
    %v64 = vld [vmem:[%s1 + $0x8] sm:$0xff]
    %v65 = vld [vmem:[%s1 + $0x10] sm:$0xff]
    %v66 = vld [vmem:[%s1 + $0x18] sm:$0xff]
    %v67 = vld [vmem:[%s1 + $0x20] sm:$0xff]
    %v68 = vld [vmem:[%s1 + $0x28] sm:$0xff]
    %v69 = vld [vmem:[%s1 + $0x30] sm:$0x3]
    %v70 = vld [vmem:[%s2] sm:$0x1]
    %v72 = vlaneseq
    %v73 = vshrl.u32 %v72, 7
    %v74 = vsub.s32 0, %v73
    %v75 = vrot.slane %v70, %v74
    %vm77 = vcmask 408576
    %v79 = vsel %vm77, %v47, 0
    %v82 = vsel %vm77, %v48, 0
    %v85 = vsel %vm77, %v49, 0
    %v88 = vsel %vm77, %v50, 0
    %v91 = vsel %vm77, %v51, 0
    %v94 = vsel %vm77, %v52, 0
    %v97 = vsel %vm77, %v53, 0
    %v100 = vsel %vm77, %v54, 0
    %v103 = vsel %vm77, %v55, 0
    %v106 = vsel %vm77, %v56, 0
    %v109 = vsel %vm77, %v57, 0
    %v112 = vsel %vm77, %v58, 0
    %v115 = vsel %vm77, %v59, 0
    %v118 = vsel %vm77, %v60, 0
    %v121 = vsel %vm77, %v61, 0
    %v124 = vsel %vm77, %v62, 0
    %vm126 = vcmask 1041408
    %v128 = vsel %vm126, %v69, 0
    %130 = vmatprep.subr.mxu0 0.0
    %131 = vmatpush1.msra.mxu0 0.0
    %132 = vmatprep.subr.mxu0 0.0
    %133 = vmatpush1.msra.mxu0 0.0
    %134 = vmatprep.subr.mxu0 0.0
    %135 = vmatpush1.msra.mxu0 0.0
    %136 = vmatprep.subr.mxu0 0.0
    %137 = vmatpush1.msra.mxu0 0.0
    %138 = vmatprep.subr.mxu0 0.0
    %139 = vmatpush1.msra.mxu0 0.0
    %140 = vmatprep.subr.mxu0 0.0
    %141 = vmatpush1.msra.mxu0 0.0
    %142 = vmatprep.subr.mxu0 0.0
    %143 = vmatpush1.msra.mxu0 0.0
    %144 = vmatprep.subr.mxu0 0.0
    %145 = vmatpush1.msra.mxu0 0.0
    %146 = vmatprep.subr.mxu0 0.0
    %147 = vmatpush1.msra.mxu0 0.0
    %148 = vmatprep.subr.mxu0 0.0
    %149 = vmatpush1.msra.mxu0 %v128
    %150 = vmatprep.subr.mxu0 0.0
    %151 = vmatpush1.msra.mxu0 %v68
    %152 = vmatprep.subr.mxu0 0.0
    %153 = vmatpush1.msra.mxu0 %v67
    %154 = vmatprep.subr.mxu0 0.0
    %155 = vmatpush1.msra.mxu0 %v66
    %156 = vmatprep.subr.mxu0 0.0
    %157 = vmatpush1.msra.mxu0 %v65
    %158 = vmatprep.subr.mxu0 0.0
    %159 = vmatpush1.msra.mxu0 %v64
    %160 = vmatprep.subr.mxu0 0.0
    %161 = vmatpush1.msra.mxu0 %v63
    %162 = vmatprep.subr.mxu0 0.0
    %163 = vmatpush2.msra.mxu0 0.0
    %164 = vmatprep.subr.mxu0 0.0
    %165 = vmatpush2.msra.mxu0 0.0
    %166 = vmatprep.subr.mxu0 0.0
    %167 = vmatpush2.msra.mxu0 0.0
    %168 = vmatprep.subr.mxu0 0.0
    %169 = vmatpush2.msra.mxu0 0.0
    %170 = vmatprep.subr.mxu0 0.0
    %171 = vmatpush2.msra.mxu0 0.0
    %172 = vmatprep.subr.mxu0 0.0
    %173 = vmatpush2.msra.mxu0 0.0
    %174 = vmatprep.subr.mxu0 0.0
    %175 = vmatpush2.msra.mxu0 0.0
    %176 = vmatprep.subr.mxu0 0.0
    %177 = vmatpush2.msra.mxu0 0.0
    %178 = vmatprep.subr.mxu0 0.0
    %179 = vmatpush2.msra.mxu0 0.0
    %180 = vmatprep.subr.mxu0 0.0
    %181 = vmatpush2.msra.mxu0 0.0
    %182 = vmatprep.subr.mxu0 0.0
    %183 = vmatpush2.msra.mxu0 0.0
    %184 = vmatprep.subr.mxu0 0.0
    %185 = vmatpush2.msra.mxu0 0.0
    %186 = vmatprep.subr.mxu0 0.0
    %187 = vmatpush2.msra.mxu0 0.0
    %188 = vmatprep.subr.mxu0 0.0
    %189 = vmatpush2.msra.mxu0 0.0
    %190 = vmatprep.subr.mxu0 0.0
    %191 = vmatpush2.msra.mxu0 0.0
    %192 = vmatprep.subr.mxu0 0.0
    %193 = vmatpush2.msra.mxu0 0.0
    %194 = vmatprep.mubr.f32.mxu0 0.0
    %195 = vmatmul.mubr.f32.gmra.mxu0 %v79
    %v196 = vpop.f32.mrf.mxu0
    %v197 = vadd.f32 %v75, %v196
    %v198 = vpop.f32.mrf.mxu0
    %199 = vmatprep.mubr.f32.mxu0 0.0
    %200 = vmatmul.mubr.f32.gmra.mxu0 %v82
    %v201 = vpop.f32.mrf.mxu0
    %v202 = vadd.f32 %v75, %v201
    %v203 = vpop.f32.mrf.mxu0
    %204 = vmatprep.mubr.f32.mxu0 0.0
    %205 = vmatmul.mubr.f32.gmra.mxu0 %v85
    %v206 = vpop.f32.mrf.mxu0
    %v207 = vadd.f32 %v75, %v206
    %v208 = vpop.f32.mrf.mxu0
    %209 = vmatprep.mubr.f32.mxu0 0.0
    %210 = vmatmul.mubr.f32.gmra.mxu0 %v88
    %v211 = vpop.f32.mrf.mxu0
    %v212 = vadd.f32 %v75, %v211
    %v213 = vpop.f32.mrf.mxu0
    %214 = vmatprep.mubr.f32.mxu0 0.0
    %215 = vmatmul.mubr.f32.gmra.mxu0 %v91
    %v216 = vpop.f32.mrf.mxu0
    %v217 = vadd.f32 %v75, %v216
    %v218 = vpop.f32.mrf.mxu0
    %219 = vmatprep.mubr.f32.mxu0 0.0
    %220 = vmatmul.mubr.f32.gmra.mxu0 %v94
    %v221 = vpop.f32.mrf.mxu0
    %v222 = vadd.f32 %v75, %v221
    %v223 = vpop.f32.mrf.mxu0
    %224 = vmatprep.mubr.f32.mxu0 0.0
    %225 = vmatmul.mubr.f32.gmra.mxu0 %v97
    %v226 = vpop.f32.mrf.mxu0
    %v227 = vadd.f32 %v75, %v226
    %v228 = vpop.f32.mrf.mxu0
    %229 = vmatprep.mubr.f32.mxu0 0.0
    %230 = vmatmul.mubr.f32.gmra.mxu0 %v100
    %v231 = vpop.f32.mrf.mxu0
    %v232 = vadd.f32 %v75, %v231
    %v233 = vpop.f32.mrf.mxu0
    %234 = vmatprep.mubr.f32.mxu0 0.0
    %235 = vmatmul.mubr.f32.gmra.mxu0 %v103
    %v236 = vpop.f32.mrf.mxu0
    %v237 = vadd.f32 %v75, %v236
    %v238 = vpop.f32.mrf.mxu0
    %239 = vmatprep.mubr.f32.mxu0 0.0
    %240 = vmatmul.mubr.f32.gmra.mxu0 %v106
    %v241 = vpop.f32.mrf.mxu0
    %v242 = vadd.f32 %v75, %v241
    %v243 = vpop.f32.mrf.mxu0
    %244 = vmatprep.mubr.f32.mxu0 0.0
    %245 = vmatmul.mubr.f32.gmra.mxu0 %v109
    %v246 = vpop.f32.mrf.mxu0
    %v247 = vadd.f32 %v75, %v246
    %v248 = vpop.f32.mrf.mxu0
    %249 = vmatprep.mubr.f32.mxu0 0.0
    %250 = vmatmul.mubr.f32.gmra.mxu0 %v112
    %v251 = vpop.f32.mrf.mxu0
    %v252 = vadd.f32 %v75, %v251
    %v253 = vpop.f32.mrf.mxu0
    %254 = vmatprep.mubr.f32.mxu0 0.0
    %255 = vmatmul.mubr.f32.gmra.mxu0 %v115
    %v256 = vpop.f32.mrf.mxu0
    %v257 = vadd.f32 %v75, %v256
    %v258 = vpop.f32.mrf.mxu0
    %259 = vmatprep.mubr.f32.mxu0 0.0
    %260 = vmatmul.mubr.f32.gmra.mxu0 %v118
    %v261 = vpop.f32.mrf.mxu0
    %v262 = vadd.f32 %v75, %v261
    %v263 = vpop.f32.mrf.mxu0
    %264 = vmatprep.mubr.f32.mxu0 0.0
    %265 = vmatmul.mubr.f32.gmra.mxu0 %v121
    %v266 = vpop.f32.mrf.mxu0
    %v267 = vadd.f32 %v75, %v266
    %v268 = vpop.f32.mrf.mxu0
    %269 = vmatprep.mubr.f32.mxu0 0.0
    %270 = vmatmul.mubr.f32.gmra.mxu0 %v124
    %v271 = vpop.f32.mrf.mxu0
    %v272 = vadd.f32 %v75, %v271
    %v273 = vpop.f32.mrf.mxu0
    %274 = vdwg.mxu0
    %vm275 = vcmp.ge.f32.partialorder %v197, 0.0
    %vm276 = vcmp.ge.f32.partialorder %v202, 0.0
    %vm277 = vcmp.ge.f32.partialorder %v207, 0.0
    %vm278 = vcmp.ge.f32.partialorder %v212, 0.0
    %vm279 = vcmp.ge.f32.partialorder %v217, 0.0
    %vm280 = vcmp.ge.f32.partialorder %v222, 0.0
    %vm281 = vcmp.ge.f32.partialorder %v227, 0.0
    %vm282 = vcmp.ge.f32.partialorder %v232, 0.0
    %vm283 = vcmp.ge.f32.partialorder %v237, 0.0
    %vm284 = vcmp.ge.f32.partialorder %v242, 0.0
    %vm285 = vcmp.ge.f32.partialorder %v247, 0.0
    %vm286 = vcmp.ge.f32.partialorder %v252, 0.0
    %vm287 = vcmp.ge.f32.partialorder %v257, 0.0
    %vm288 = vcmp.ge.f32.partialorder %v262, 0.0
    %vm289 = vcmp.ge.f32.partialorder %v267, 0.0
    %vm290 = vcmp.ge.f32.partialorder %v272, 0.0
    %v291 = vmul.f32 %v197, 0.2
    %v292 = vmul.f32 %v202, 0.2
    %v293 = vmul.f32 %v207, 0.2
    %v294 = vmul.f32 %v212, 0.2
    %v295 = vmul.f32 %v217, 0.2
    %v296 = vmul.f32 %v222, 0.2
    %v297 = vmul.f32 %v227, 0.2
    %v298 = vmul.f32 %v232, 0.2
    %v299 = vmul.f32 %v237, 0.2
    %v300 = vmul.f32 %v242, 0.2
    %v301 = vmul.f32 %v247, 0.2
    %v302 = vmul.f32 %v252, 0.2
    %v303 = vmul.f32 %v257, 0.2
    %v304 = vmul.f32 %v262, 0.2
    %v305 = vmul.f32 %v267, 0.2
    %v306 = vmul.f32 %v272, 0.2
    %v307 = vsel %vm275, %v197, %v291
    %v308 = vsel %vm276, %v202, %v292
    %v309 = vsel %vm277, %v207, %v293
    %v310 = vsel %vm278, %v212, %v294
    %v311 = vsel %vm279, %v217, %v295
    %v312 = vsel %vm280, %v222, %v296
    %v313 = vsel %vm281, %v227, %v297
    %v314 = vsel %vm282, %v232, %v298
    %v315 = vsel %vm283, %v237, %v299
    %v316 = vsel %vm284, %v242, %v300
    %v317 = vsel %vm285, %v247, %v301
    %v318 = vsel %vm286, %v252, %v302
    %v319 = vsel %vm287, %v257, %v303
    %v320 = vsel %vm288, %v262, %v304
    %v321 = vsel %vm289, %v267, %v305
    %v322 = vsel %vm290, %v272, %v306
    %vm323 = vcmask 80896
    %324 = vst.msk [vmem:[#allocation2] sm:$0xff] %vm323, 0.0
    %vm325 = vcmask 74752
    %326 = vst.msk [vmem:[#allocation2 + $0x8] sm:$0x3] %vm325, 0.0
    %327 = vst.msk [vmem:[#allocation2 + $0xa0] sm:$0xff] %vm323, 0.0
    %328 = vst.msk [vmem:[#allocation2 + $0xa8] sm:$0x3] %vm325, 0.0
    %s329 = scalar_lea.vmem [#allocation2], 144
    %330 = vst.msk [vmem:[%s329] sm:$0xff] %vm323, 0.0
    %331 = vst.msk [vmem:[%s329 + $0x8] sm:$0x3] %vm325, 0.0
    %332 = vst.msk [vmem:[%s329 + $0xa0] sm:$0xff] %vm323, 0.0
    %333 = vst.msk [vmem:[%s329 + $0xa8] sm:$0x3] %vm325, 0.0
    %vm334 = vcmask 73728
    %335 = vst.msk [vmem:[#allocation2] sm:$0x1] %vm334, 0.0
    %336 = vst.msk [vmem:[#allocation2 + $0x10] sm:$0x1] %vm334, 0.0
    %337 = vst.msk [vmem:[#allocation2 + $0x20] sm:$0x1] %vm334, 0.0
    %338 = vst.msk [vmem:[#allocation2 + $0x30] sm:$0x1] %vm334, 0.0
    %339 = vst.msk [vmem:[#allocation2 + $0x40] sm:$0x1] %vm334, 0.0
    %340 = vst.msk [vmem:[#allocation2 + $0x50] sm:$0x1] %vm334, 0.0
    %341 = vst.msk [vmem:[#allocation2 + $0x60] sm:$0x1] %vm334, 0.0
    %342 = vst.msk [vmem:[#allocation2 + $0x70] sm:$0x1] %vm334, 0.0
    %343 = vst.msk [vmem:[#allocation2 + $0x80] sm:$0x1] %vm334, 0.0
    %344 = vst.msk [vmem:[#allocation2 + $0x90] sm:$0x1] %vm334, 0.0
    %345 = vst.msk [vmem:[#allocation2 + $0xa0] sm:$0x1] %vm334, 0.0
    %346 = vst.msk [vmem:[#allocation2 + $0xb0] sm:$0x1] %vm334, 0.0
    %347 = vst.msk [vmem:[#allocation2 + $0xc0] sm:$0x1] %vm334, 0.0
    %348 = vst.msk [vmem:[#allocation2 + $0xd0] sm:$0x1] %vm334, 0.0
    %349 = vst.msk [vmem:[#allocation2 + $0xe0] sm:$0x1] %vm334, 0.0
    %350 = vst.msk [vmem:[#allocation2 + $0xf0] sm:$0x1] %vm334, 0.0
    %351 = vst.msk [vmem:[#allocation2 + $0x100] sm:$0x1] %vm334, 0.0
    %352 = vst.msk [vmem:[#allocation2 + $0x110] sm:$0x1] %vm334, 0.0
    %353 = vst.msk [vmem:[#allocation2 + $0x120] sm:$0x1] %vm334, 0.0
    %354 = vst.msk [vmem:[#allocation2 + $0x130] sm:$0x1] %vm334, 0.0
    %355 = vst.msk [vmem:[#allocation2 + $0x9] sm:$0x1] %vm334, 0.0
    %356 = vst.msk [vmem:[#allocation2 + $0x19] sm:$0x1] %vm334, 0.0
    %357 = vst.msk [vmem:[#allocation2 + $0x29] sm:$0x1] %vm334, 0.0
    %358 = vst.msk [vmem:[#allocation2 + $0x39] sm:$0x1] %vm334, 0.0
    %359 = vst.msk [vmem:[#allocation2 + $0x49] sm:$0x1] %vm334, 0.0
    %360 = vst.msk [vmem:[#allocation2 + $0x59] sm:$0x1] %vm334, 0.0
    %361 = vst.msk [vmem:[#allocation2 + $0x69] sm:$0x1] %vm334, 0.0
    %362 = vst.msk [vmem:[#allocation2 + $0x79] sm:$0x1] %vm334, 0.0
    %363 = vst.msk [vmem:[#allocation2 + $0x89] sm:$0x1] %vm334, 0.0
    %364 = vst.msk [vmem:[#allocation2 + $0x99] sm:$0x1] %vm334, 0.0
    %365 = vst.msk [vmem:[#allocation2 + $0xa9] sm:$0x1] %vm334, 0.0
    %366 = vst.msk [vmem:[#allocation2 + $0xb9] sm:$0x1] %vm334, 0.0
    %367 = vst.msk [vmem:[#allocation2 + $0xc9] sm:$0x1] %vm334, 0.0
    %368 = vst.msk [vmem:[#allocation2 + $0xd9] sm:$0x1] %vm334, 0.0
    %369 = vst.msk [vmem:[#allocation2 + $0xe9] sm:$0x1] %vm334, 0.0
    %370 = vst.msk [vmem:[#allocation2 + $0xf9] sm:$0x1] %vm334, 0.0
    %371 = vst.msk [vmem:[#allocation2 + $0x109] sm:$0x1] %vm334, 0.0
    %372 = vst.msk [vmem:[#allocation2 + $0x119] sm:$0x1] %vm334, 0.0
    %373 = vst.msk [vmem:[#allocation2 + $0x129] sm:$0x1] %vm334, 0.0
    %374 = vst.msk [vmem:[#allocation2 + $0x139] sm:$0x1] %vm334, 0.0
    %s375 = scalar_lea.vmem [#allocation2], 16
    %376 = vst.msk [vmem:[%s375 + $0x1] sm:$0xff] %vm323, %v307
    %377 = vst.msk [vmem:[%s375 + $0x11] sm:$0xff] %vm323, %v308
    %378 = vst.msk [vmem:[%s375 + $0x21] sm:$0xff] %vm323, %v309
    %379 = vst.msk [vmem:[%s375 + $0x31] sm:$0xff] %vm323, %v310
    %380 = vst.msk [vmem:[%s375 + $0x41] sm:$0xff] %vm323, %v311
    %381 = vst.msk [vmem:[%s375 + $0x51] sm:$0xff] %vm323, %v312
    %382 = vst.msk [vmem:[%s375 + $0x61] sm:$0xff] %vm323, %v313
    %383 = vst.msk [vmem:[%s375 + $0x71] sm:$0xff] %vm323, %v314
    %384 = vst.msk [vmem:[%s375 + $0xa1] sm:$0xff] %vm323, %v315
    %385 = vst.msk [vmem:[%s375 + $0xb1] sm:$0xff] %vm323, %v316
    %386 = vst.msk [vmem:[%s375 + $0xc1] sm:$0xff] %vm323, %v317
    %387 = vst.msk [vmem:[%s375 + $0xd1] sm:$0xff] %vm323, %v318
    %388 = vst.msk [vmem:[%s375 + $0xe1] sm:$0xff] %vm323, %v319
    %389 = vst.msk [vmem:[%s375 + $0xf1] sm:$0xff] %vm323, %v320
    %390 = vst.msk [vmem:[%s375 + $0x101] sm:$0xff] %vm323, %v321
    %391 = vst.msk [vmem:[%s375 + $0x111] sm:$0xff] %vm323, %v322
    %v392 = vld [vmem:[#allocation2] ss:$2 sm:$0xf]
    %s393 = scalar_lea.vmem [#allocation2], 32
    %v394 = vld [vmem:[%s393] ss:$2 sm:$0xf]
    %s395 = scalar_lea.vmem [#allocation2], 64
    %v396 = vld [vmem:[%s395] ss:$2 sm:$0xf]
    %s397 = scalar_lea.vmem [#allocation2], 96
    %v398 = vld [vmem:[%s397] ss:$2 sm:$0xf]
    %s399 = scalar_lea.vmem [#allocation2], 160
    %v400 = vld [vmem:[%s399] ss:$2 sm:$0xf]
    %s401 = scalar_lea.vmem [#allocation2], 192
    %v402 = vld [vmem:[%s401] ss:$2 sm:$0xf]
    %s403 = scalar_lea.vmem [#allocation2], 224
    %v404 = vld [vmem:[%s403] ss:$2 sm:$0xf]
    %s405 = scalar_lea.vmem [#allocation2], 256
    %v406 = vld [vmem:[%s405] ss:$2 sm:$0xf]
    %v407 = vld [vmem:[%s3] sm:$0xff]
    %v408 = vld [vmem:[%s3 + $0x8] sm:$0x3]
    %s409 = scalar_lea.vmem [#allocation2], 1
    %v410 = vld [vmem:[%s409] ss:$2 sm:$0xf]
    %s411 = scalar_lea.vmem [#allocation2], 33
    %v412 = vld [vmem:[%s411] ss:$2 sm:$0xf]
    %s413 = scalar_lea.vmem [#allocation2], 65
    %v414 = vld [vmem:[%s413] ss:$2 sm:$0xf]
    %s415 = scalar_lea.vmem [#allocation2], 97
    %v416 = vld [vmem:[%s415] ss:$2 sm:$0xf]
    %s417 = scalar_lea.vmem [#allocation2], 161
    %v418 = vld [vmem:[%s417] ss:$2 sm:$0xf]
    %s419 = scalar_lea.vmem [#allocation2], 193
    %v420 = vld [vmem:[%s419] ss:$2 sm:$0xf]
    %s421 = scalar_lea.vmem [#allocation2], 225
    %v422 = vld [vmem:[%s421] ss:$2 sm:$0xf]
    %s423 = scalar_lea.vmem [#allocation2], 257
    %v424 = vld [vmem:[%s423] ss:$2 sm:$0xf]
    %s425 = scalar_lea.vmem %s3, 16
    %v426 = vld [vmem:[%s425] sm:$0xff]
    %v427 = vld [vmem:[%s425 + $0x8] sm:$0x3]
    %v436 = vcombine.low %v410, %v412
    %v437 = vcombine.low %v414, %v416
    %v438 = vcombine.low %v418, %v420
    %v439 = vcombine.low %v422, %v424
    %v440 = vsel %vm323, %v436, 0
    %v442 = vsel %vm323, %v437, 0
    %v444 = vsel %vm323, %v438, 0
    %v446 = vsel %vm323, %v439, 0
    %v449 = vsel %vm126, %v427, 0
    %451 = vmatprep.subr.mxu0 0.0
    %452 = vmatpush1.msra.mxu0 0.0
    %453 = vmatprep.subr.mxu0 0.0
    %454 = vmatpush1.msra.mxu0 0.0
    %455 = vmatprep.subr.mxu0 0.0
    %456 = vmatpush1.msra.mxu0 0.0
    %457 = vmatprep.subr.mxu0 0.0
    %458 = vmatpush1.msra.mxu0 0.0
    %459 = vmatprep.subr.mxu0 0.0
    %460 = vmatpush1.msra.mxu0 0.0
    %461 = vmatprep.subr.mxu0 0.0
    %462 = vmatpush1.msra.mxu0 0.0
    %463 = vmatprep.subr.mxu0 0.0
    %464 = vmatpush1.msra.mxu0 0.0
    %465 = vmatprep.subr.mxu0 0.0
    %466 = vmatpush1.msra.mxu0 0.0
    %467 = vmatprep.subr.mxu0 0.0
    %468 = vmatpush1.msra.mxu0 0.0
    %469 = vmatprep.subr.mxu0 0.0
    %470 = vmatpush1.msra.mxu0 0.0
    %471 = vmatprep.subr.mxu0 0.0
    %472 = vmatpush1.msra.mxu0 0.0
    %473 = vmatprep.subr.mxu0 0.0
    %474 = vmatpush1.msra.mxu0 0.0
    %475 = vmatprep.subr.mxu0 0.0
    %476 = vmatpush1.msra.mxu0 0.0
    %477 = vmatprep.subr.mxu0 0.0
    %478 = vmatpush1.msra.mxu0 0.0
    %479 = vmatprep.subr.mxu0 0.0
    %480 = vmatpush1.msra.mxu0 %v449
    %481 = vmatprep.subr.mxu0 0.0
    %482 = vmatpush1.msra.mxu0 %v426
    %483 = vmatprep.subr.mxu0 0.0
    %484 = vmatpush2.msra.mxu0 0.0
    %485 = vmatprep.subr.mxu0 0.0
    %486 = vmatpush2.msra.mxu0 0.0
    %487 = vmatprep.subr.mxu0 0.0
    %488 = vmatpush2.msra.mxu0 0.0
    %489 = vmatprep.subr.mxu0 0.0
    %490 = vmatpush2.msra.mxu0 0.0
    %491 = vmatprep.subr.mxu0 0.0
    %492 = vmatpush2.msra.mxu0 0.0
    %493 = vmatprep.subr.mxu0 0.0
    %494 = vmatpush2.msra.mxu0 0.0
    %495 = vmatprep.subr.mxu0 0.0
    %496 = vmatpush2.msra.mxu0 0.0
    %497 = vmatprep.subr.mxu0 0.0
    %498 = vmatpush2.msra.mxu0 0.0
    %499 = vmatprep.subr.mxu0 0.0
    %500 = vmatpush2.msra.mxu0 0.0
    %501 = vmatprep.subr.mxu0 0.0
    %502 = vmatpush2.msra.mxu0 0.0
    %503 = vmatprep.subr.mxu0 0.0
    %504 = vmatpush2.msra.mxu0 0.0
    %505 = vmatprep.subr.mxu0 0.0
    %506 = vmatpush2.msra.mxu0 0.0
    %507 = vmatprep.subr.mxu0 0.0
    %508 = vmatpush2.msra.mxu0 0.0
    %509 = vmatprep.subr.mxu0 0.0
    %510 = vmatpush2.msra.mxu0 0.0
    %511 = vmatprep.subr.mxu0 0.0
    %512 = vmatpush2.msra.mxu0 0.0
    %513 = vmatprep.subr.mxu0 0.0
    %514 = vmatpush2.msra.mxu0 0.0
    %515 = vmatprep.mubr.f32.mxu0 0.0
    %516 = vmatmul.mubr.f32.gmra.mxu0 %v440
    %v517 = vpop.f32.mrf.mxu0
    %v518 = vadd.f32 0.0, %v517
    %v519 = vpop.f32.mrf.mxu0
    %520 = vmatprep.mubr.f32.mxu0 0.0
    %521 = vmatmul.mubr.f32.gmra.mxu0 %v442
    %v522 = vpop.f32.mrf.mxu0
    %v523 = vadd.f32 0.0, %v522
    %v524 = vpop.f32.mrf.mxu0
    %525 = vmatprep.mubr.f32.mxu0 0.0
    %526 = vmatmul.mubr.f32.gmra.mxu0 %v444
    %v527 = vpop.f32.mrf.mxu0
    %v528 = vadd.f32 0.0, %v527
    %v529 = vpop.f32.mrf.mxu0
    %530 = vmatprep.mubr.f32.mxu0 0.0
    %531 = vmatmul.mubr.f32.gmra.mxu0 %v446
    %v532 = vpop.f32.mrf.mxu0
    %v533 = vadd.f32 0.0, %v532
    %v534 = vpop.f32.mrf.mxu0
    %535 = vdwg.mxu0
    %v544 = vcombine.low %v392, %v394
    %v545 = vcombine.low %v396, %v398
    %v546 = vcombine.low %v400, %v402
    %v547 = vcombine.low %v404, %v406
    %v548 = vsel %vm323, %v544, 0
    %v550 = vsel %vm323, %v545, 0
    %v552 = vsel %vm323, %v546, 0
    %v554 = vsel %vm323, %v547, 0
    %v557 = vsel %vm126, %v408, 0
    %559 = vmatprep.subr.mxu0 0.0
    %560 = vmatpush1.msra.mxu0 0.0
    %561 = vmatprep.subr.mxu0 0.0
    %562 = vmatpush1.msra.mxu0 0.0
    %563 = vmatprep.subr.mxu0 0.0
    %564 = vmatpush1.msra.mxu0 0.0
    %565 = vmatprep.subr.mxu0 0.0
    %566 = vmatpush1.msra.mxu0 0.0
    %567 = vmatprep.subr.mxu0 0.0
    %568 = vmatpush1.msra.mxu0 0.0
    %569 = vmatprep.subr.mxu0 0.0
    %570 = vmatpush1.msra.mxu0 0.0
    %571 = vmatprep.subr.mxu0 0.0
    %572 = vmatpush1.msra.mxu0 0.0
    %573 = vmatprep.subr.mxu0 0.0
    %574 = vmatpush1.msra.mxu0 0.0
    %575 = vmatprep.subr.mxu0 0.0
    %576 = vmatpush1.msra.mxu0 0.0
    %577 = vmatprep.subr.mxu0 0.0
    %578 = vmatpush1.msra.mxu0 0.0
    %579 = vmatprep.subr.mxu0 0.0
    %580 = vmatpush1.msra.mxu0 0.0
    %581 = vmatprep.subr.mxu0 0.0
    %582 = vmatpush1.msra.mxu0 0.0
    %583 = vmatprep.subr.mxu0 0.0
    %584 = vmatpush1.msra.mxu0 0.0
    %585 = vmatprep.subr.mxu0 0.0
    %586 = vmatpush1.msra.mxu0 0.0
    %587 = vmatprep.subr.mxu0 0.0
    %588 = vmatpush1.msra.mxu0 %v557
    %589 = vmatprep.subr.mxu0 0.0
    %590 = vmatpush1.msra.mxu0 %v407
    %591 = vmatprep.subr.mxu0 0.0
    %592 = vmatpush2.msra.mxu0 0.0
    %593 = vmatprep.subr.mxu0 0.0
    %594 = vmatpush2.msra.mxu0 0.0
    %595 = vmatprep.subr.mxu0 0.0
    %596 = vmatpush2.msra.mxu0 0.0
    %597 = vmatprep.subr.mxu0 0.0
    %598 = vmatpush2.msra.mxu0 0.0
    %599 = vmatprep.subr.mxu0 0.0
    %600 = vmatpush2.msra.mxu0 0.0
    %601 = vmatprep.subr.mxu0 0.0
    %602 = vmatpush2.msra.mxu0 0.0
    %603 = vmatprep.subr.mxu0 0.0
    %604 = vmatpush2.msra.mxu0 0.0
    %605 = vmatprep.subr.mxu0 0.0
    %606 = vmatpush2.msra.mxu0 0.0
    %607 = vmatprep.subr.mxu0 0.0
    %608 = vmatpush2.msra.mxu0 0.0
    %609 = vmatprep.subr.mxu0 0.0
    %610 = vmatpush2.msra.mxu0 0.0
    %611 = vmatprep.subr.mxu0 0.0
    %612 = vmatpush2.msra.mxu0 0.0
    %613 = vmatprep.subr.mxu0 0.0
    %614 = vmatpush2.msra.mxu0 0.0
    %615 = vmatprep.subr.mxu0 0.0
    %616 = vmatpush2.msra.mxu0 0.0
    %617 = vmatprep.subr.mxu0 0.0
    %618 = vmatpush2.msra.mxu0 0.0
    %619 = vmatprep.subr.mxu0 0.0
    %620 = vmatpush2.msra.mxu0 0.0
    %621 = vmatprep.subr.mxu0 0.0
    %622 = vmatpush2.msra.mxu0 0.0
    %623 = vmatprep.mubr.f32.mxu0 0.0
    %624 = vmatmul.mubr.f32.gmra.mxu0 %v548
    %v625 = vpop.f32.mrf.mxu0
    %v626 = vadd.f32 %v518, %v625
    %v627 = vpop.f32.mrf.mxu0
    %628 = vmatprep.mubr.f32.mxu0 0.0
    %629 = vmatmul.mubr.f32.gmra.mxu0 %v550
    %v630 = vpop.f32.mrf.mxu0
    %v631 = vadd.f32 %v523, %v630
    %v632 = vpop.f32.mrf.mxu0
    %633 = vmatprep.mubr.f32.mxu0 0.0
    %634 = vmatmul.mubr.f32.gmra.mxu0 %v552
    %v635 = vpop.f32.mrf.mxu0
    %v636 = vadd.f32 %v528, %v635
    %v637 = vpop.f32.mrf.mxu0
    %638 = vmatprep.mubr.f32.mxu0 0.0
    %639 = vmatmul.mubr.f32.gmra.mxu0 %v554
    %v640 = vpop.f32.mrf.mxu0
    %v641 = vadd.f32 %v533, %v640
    %v642 = vpop.f32.mrf.mxu0
    %643 = vdwg.mxu0
    %s644 = scalar_lea.vmem [#allocation2], 2
    %v645 = vld [vmem:[%s644] ss:$2 sm:$0xf]
    %s646 = scalar_lea.vmem [#allocation2], 34
    %v647 = vld [vmem:[%s646] ss:$2 sm:$0xf]
    %s648 = scalar_lea.vmem [#allocation2], 66
    %v649 = vld [vmem:[%s648] ss:$2 sm:$0xf]
    %s650 = scalar_lea.vmem [#allocation2], 98
    %v651 = vld [vmem:[%s650] ss:$2 sm:$0xf]
    %s652 = scalar_lea.vmem [#allocation2], 162
    %v653 = vld [vmem:[%s652] ss:$2 sm:$0xf]
    %s654 = scalar_lea.vmem [#allocation2], 194
    %v655 = vld [vmem:[%s654] ss:$2 sm:$0xf]
    %s656 = scalar_lea.vmem [#allocation2], 226
    %v657 = vld [vmem:[%s656] ss:$2 sm:$0xf]
    %s658 = scalar_lea.vmem [#allocation2], 258
    %v659 = vld [vmem:[%s658] ss:$2 sm:$0xf]
    %s660 = scalar_lea.vmem %s3, 32
    %v661 = vld [vmem:[%s660] sm:$0xff]
    %v662 = vld [vmem:[%s660 + $0x8] sm:$0x3]
    %v671 = vcombine.low %v645, %v647
    %v672 = vcombine.low %v649, %v651
    %v673 = vcombine.low %v653, %v655
    %v674 = vcombine.low %v657, %v659
    %v675 = vsel %vm323, %v671, 0
    %v677 = vsel %vm323, %v672, 0
    %v679 = vsel %vm323, %v673, 0
    %v681 = vsel %vm323, %v674, 0
    %v684 = vsel %vm126, %v662, 0
    %686 = vmatprep.subr.mxu0 0.0
    %687 = vmatpush1.msra.mxu0 0.0
    %688 = vmatprep.subr.mxu0 0.0
    %689 = vmatpush1.msra.mxu0 0.0
    %690 = vmatprep.subr.mxu0 0.0
    %691 = vmatpush1.msra.mxu0 0.0
    %692 = vmatprep.subr.mxu0 0.0
    %693 = vmatpush1.msra.mxu0 0.0
    %694 = vmatprep.subr.mxu0 0.0
    %695 = vmatpush1.msra.mxu0 0.0
    %696 = vmatprep.subr.mxu0 0.0
    %697 = vmatpush1.msra.mxu0 0.0
    %698 = vmatprep.subr.mxu0 0.0
    %699 = vmatpush1.msra.mxu0 0.0
    %700 = vmatprep.subr.mxu0 0.0
    %701 = vmatpush1.msra.mxu0 0.0
    %702 = vmatprep.subr.mxu0 0.0
    %703 = vmatpush1.msra.mxu0 0.0
    %704 = vmatprep.subr.mxu0 0.0
    %705 = vmatpush1.msra.mxu0 0.0
    %706 = vmatprep.subr.mxu0 0.0
    %707 = vmatpush1.msra.mxu0 0.0
    %708 = vmatprep.subr.mxu0 0.0
    %709 = vmatpush1.msra.mxu0 0.0
    %710 = vmatprep.subr.mxu0 0.0
    %711 = vmatpush1.msra.mxu0 0.0
    %712 = vmatprep.subr.mxu0 0.0
    %713 = vmatpush1.msra.mxu0 0.0
    %714 = vmatprep.subr.mxu0 0.0
    %715 = vmatpush1.msra.mxu0 %v684
    %716 = vmatprep.subr.mxu0 0.0
    %717 = vmatpush1.msra.mxu0 %v661
    %718 = vmatprep.subr.mxu0 0.0
    %719 = vmatpush2.msra.mxu0 0.0
    %720 = vmatprep.subr.mxu0 0.0
    %721 = vmatpush2.msra.mxu0 0.0
    %722 = vmatprep.subr.mxu0 0.0
    %723 = vmatpush2.msra.mxu0 0.0
    %724 = vmatprep.subr.mxu0 0.0
    %725 = vmatpush2.msra.mxu0 0.0
    %726 = vmatprep.subr.mxu0 0.0
    %727 = vmatpush2.msra.mxu0 0.0
    %728 = vmatprep.subr.mxu0 0.0
    %729 = vmatpush2.msra.mxu0 0.0
    %730 = vmatprep.subr.mxu0 0.0
    %731 = vmatpush2.msra.mxu0 0.0
    %732 = vmatprep.subr.mxu0 0.0
    %733 = vmatpush2.msra.mxu0 0.0
    %734 = vmatprep.subr.mxu0 0.0
    %735 = vmatpush2.msra.mxu0 0.0
    %736 = vmatprep.subr.mxu0 0.0
    %737 = vmatpush2.msra.mxu0 0.0
    %738 = vmatprep.subr.mxu0 0.0
    %739 = vmatpush2.msra.mxu0 0.0
    %740 = vmatprep.subr.mxu0 0.0
    %741 = vmatpush2.msra.mxu0 0.0
    %742 = vmatprep.subr.mxu0 0.0
    %743 = vmatpush2.msra.mxu0 0.0
    %744 = vmatprep.subr.mxu0 0.0
    %745 = vmatpush2.msra.mxu0 0.0
    %746 = vmatprep.subr.mxu0 0.0
    %747 = vmatpush2.msra.mxu0 0.0
    %748 = vmatprep.subr.mxu0 0.0
    %749 = vmatpush2.msra.mxu0 0.0
    %750 = vmatprep.mubr.f32.mxu0 0.0
    %751 = vmatmul.mubr.f32.gmra.mxu0 %v675
    %v752 = vpop.f32.mrf.mxu0
    %v753 = vadd.f32 0.0, %v752
    %v754 = vpop.f32.mrf.mxu0
    %755 = vmatprep.mubr.f32.mxu0 0.0
    %756 = vmatmul.mubr.f32.gmra.mxu0 %v677
    %v757 = vpop.f32.mrf.mxu0
    %v758 = vadd.f32 0.0, %v757
    %v759 = vpop.f32.mrf.mxu0
    %760 = vmatprep.mubr.f32.mxu0 0.0
    %761 = vmatmul.mubr.f32.gmra.mxu0 %v679
    %v762 = vpop.f32.mrf.mxu0
    %v763 = vadd.f32 0.0, %v762
    %v764 = vpop.f32.mrf.mxu0
    %765 = vmatprep.mubr.f32.mxu0 0.0
    %766 = vmatmul.mubr.f32.gmra.mxu0 %v681
    %v767 = vpop.f32.mrf.mxu0
    %v768 = vadd.f32 0.0, %v767
    %v769 = vpop.f32.mrf.mxu0
    %770 = vdwg.mxu0
    %v771 = vadd.f32 %v626, %v753
    %v772 = vadd.f32 %v631, %v758
    %v773 = vadd.f32 %v636, %v763
    %v774 = vadd.f32 %v641, %v768
    %v775 = vld [vmem:[%s375] ss:$2 sm:$0xf]
    %s776 = scalar_lea.vmem %s375, 32 [#allocation2]
    %v777 = vld [vmem:[%s776] ss:$2 sm:$0xf]
    %s778 = scalar_lea.vmem %s375, 64 [#allocation2]
    %v779 = vld [vmem:[%s778] ss:$2 sm:$0xf]
    %s780 = scalar_lea.vmem %s375, 96 [#allocation2]
    %v781 = vld [vmem:[%s780] ss:$2 sm:$0xf]
    %s782 = scalar_lea.vmem %s375, 160 [#allocation2]
    %v783 = vld [vmem:[%s782] ss:$2 sm:$0xf]
    %s784 = scalar_lea.vmem %s375, 192 [#allocation2]
    %v785 = vld [vmem:[%s784] ss:$2 sm:$0xf]
    %s786 = scalar_lea.vmem %s375, 224 [#allocation2]
    %v787 = vld [vmem:[%s786] ss:$2 sm:$0xf]
    %s788 = scalar_lea.vmem %s375, 256 [#allocation2]
    %v789 = vld [vmem:[%s788] ss:$2 sm:$0xf]
    %s790 = scalar_lea.vmem %s3, 48
    %v791 = vld [vmem:[%s790] sm:$0xff]
    %v792 = vld [vmem:[%s790 + $0x8] sm:$0x3]
    %v801 = vcombine.low %v775, %v777
    %v802 = vcombine.low %v779, %v781
    %v803 = vcombine.low %v783, %v785
    %v804 = vcombine.low %v787, %v789
    %v805 = vsel %vm323, %v801, 0
    %v807 = vsel %vm323, %v802, 0
    %v809 = vsel %vm323, %v803, 0
    %v811 = vsel %vm323, %v804, 0
    %v814 = vsel %vm126, %v792, 0
    %816 = vmatprep.subr.mxu0 0.0
    %817 = vmatpush1.msra.mxu0 0.0
    %818 = vmatprep.subr.mxu0 0.0
    %819 = vmatpush1.msra.mxu0 0.0
    %820 = vmatprep.subr.mxu0 0.0
    %821 = vmatpush1.msra.mxu0 0.0
    %822 = vmatprep.subr.mxu0 0.0
    %823 = vmatpush1.msra.mxu0 0.0
    %824 = vmatprep.subr.mxu0 0.0
    %825 = vmatpush1.msra.mxu0 0.0
    %826 = vmatprep.subr.mxu0 0.0
    %827 = vmatpush1.msra.mxu0 0.0
    %828 = vmatprep.subr.mxu0 0.0
    %829 = vmatpush1.msra.mxu0 0.0
    %830 = vmatprep.subr.mxu0 0.0
    %831 = vmatpush1.msra.mxu0 0.0
    %832 = vmatprep.subr.mxu0 0.0
    %833 = vmatpush1.msra.mxu0 0.0
    %834 = vmatprep.subr.mxu0 0.0
    %835 = vmatpush1.msra.mxu0 0.0
    %836 = vmatprep.subr.mxu0 0.0
    %837 = vmatpush1.msra.mxu0 0.0
    %838 = vmatprep.subr.mxu0 0.0
    %839 = vmatpush1.msra.mxu0 0.0
    %840 = vmatprep.subr.mxu0 0.0
    %841 = vmatpush1.msra.mxu0 0.0
    %842 = vmatprep.subr.mxu0 0.0
    %843 = vmatpush1.msra.mxu0 0.0
    %844 = vmatprep.subr.mxu0 0.0
    %845 = vmatpush1.msra.mxu0 %v814
    %846 = vmatprep.subr.mxu0 0.0
    %847 = vmatpush1.msra.mxu0 %v791
    %848 = vmatprep.subr.mxu0 0.0
    %849 = vmatpush2.msra.mxu0 0.0
    %850 = vmatprep.subr.mxu0 0.0
    %851 = vmatpush2.msra.mxu0 0.0
    %852 = vmatprep.subr.mxu0 0.0
    %853 = vmatpush2.msra.mxu0 0.0
    %854 = vmatprep.subr.mxu0 0.0
    %855 = vmatpush2.msra.mxu0 0.0
    %856 = vmatprep.subr.mxu0 0.0
    %857 = vmatpush2.msra.mxu0 0.0
    %858 = vmatprep.subr.mxu0 0.0
    %859 = vmatpush2.msra.mxu0 0.0
    %860 = vmatprep.subr.mxu0 0.0
    %861 = vmatpush2.msra.mxu0 0.0
    %862 = vmatprep.subr.mxu0 0.0
    %863 = vmatpush2.msra.mxu0 0.0
    %864 = vmatprep.subr.mxu0 0.0
    %865 = vmatpush2.msra.mxu0 0.0
    %866 = vmatprep.subr.mxu0 0.0
    %867 = vmatpush2.msra.mxu0 0.0
    %868 = vmatprep.subr.mxu0 0.0
    %869 = vmatpush2.msra.mxu0 0.0
    %870 = vmatprep.subr.mxu0 0.0
    %871 = vmatpush2.msra.mxu0 0.0
    %872 = vmatprep.subr.mxu0 0.0
    %873 = vmatpush2.msra.mxu0 0.0
    %874 = vmatprep.subr.mxu0 0.0
    %875 = vmatpush2.msra.mxu0 0.0
    %876 = vmatprep.subr.mxu0 0.0
    %877 = vmatpush2.msra.mxu0 0.0
    %878 = vmatprep.subr.mxu0 0.0
    %879 = vmatpush2.msra.mxu0 0.0
    %880 = vmatprep.mubr.f32.mxu0 0.0
    %881 = vmatmul.mubr.f32.gmra.mxu0 %v805
    %v882 = vpop.f32.mrf.mxu0
    %v883 = vadd.f32 0.0, %v882
    %v884 = vpop.f32.mrf.mxu0
    %885 = vmatprep.mubr.f32.mxu0 0.0
    %886 = vmatmul.mubr.f32.gmra.mxu0 %v807
    %v887 = vpop.f32.mrf.mxu0
    %v888 = vadd.f32 0.0, %v887
    %v889 = vpop.f32.mrf.mxu0
    %890 = vmatprep.mubr.f32.mxu0 0.0
    %891 = vmatmul.mubr.f32.gmra.mxu0 %v809
    %v892 = vpop.f32.mrf.mxu0
    %v893 = vadd.f32 0.0, %v892
    %v894 = vpop.f32.mrf.mxu0
    %895 = vmatprep.mubr.f32.mxu0 0.0
    %896 = vmatmul.mubr.f32.gmra.mxu0 %v811
    %v897 = vpop.f32.mrf.mxu0
    %v898 = vadd.f32 0.0, %v897
    %v899 = vpop.f32.mrf.mxu0
    %900 = vdwg.mxu0
    %v901 = vadd.f32 %v771, %v883
    %v902 = vadd.f32 %v772, %v888
    %v903 = vadd.f32 %v773, %v893
    %v904 = vadd.f32 %v774, %v898
    %s905 = scalar_lea.vmem %s375, 1 [#allocation2]
    %v906 = vld [vmem:[%s905] ss:$2 sm:$0xf]
    %s907 = scalar_lea.vmem %s375, 33 [#allocation2]
    %v908 = vld [vmem:[%s907] ss:$2 sm:$0xf]
    %s909 = scalar_lea.vmem %s375, 65 [#allocation2]
    %v910 = vld [vmem:[%s909] ss:$2 sm:$0xf]
    %s911 = scalar_lea.vmem %s375, 97 [#allocation2]
    %v912 = vld [vmem:[%s911] ss:$2 sm:$0xf]
    %s913 = scalar_lea.vmem %s375, 161 [#allocation2]
    %v914 = vld [vmem:[%s913] ss:$2 sm:$0xf]
    %s915 = scalar_lea.vmem %s375, 193 [#allocation2]
    %v916 = vld [vmem:[%s915] ss:$2 sm:$0xf]
    %s917 = scalar_lea.vmem %s375, 225 [#allocation2]
    %v918 = vld [vmem:[%s917] ss:$2 sm:$0xf]
    %s919 = scalar_lea.vmem %s375, 257 [#allocation2]
    %v920 = vld [vmem:[%s919] ss:$2 sm:$0xf]
    %s921 = scalar_lea.vmem %s3, 64
    %v922 = vld [vmem:[%s921] sm:$0xff]
    %v923 = vld [vmem:[%s921 + $0x8] sm:$0x3]
    %v932 = vcombine.low %v906, %v908
    %v933 = vcombine.low %v910, %v912
    %v934 = vcombine.low %v914, %v916
    %v935 = vcombine.low %v918, %v920
    %v936 = vsel %vm323, %v932, 0
    %v938 = vsel %vm323, %v933, 0
    %v940 = vsel %vm323, %v934, 0
    %v942 = vsel %vm323, %v935, 0
    %v945 = vsel %vm126, %v923, 0
    %947 = vmatprep.subr.mxu0 0.0
    %948 = vmatpush1.msra.mxu0 0.0
    %949 = vmatprep.subr.mxu0 0.0
    %950 = vmatpush1.msra.mxu0 0.0
    %951 = vmatprep.subr.mxu0 0.0
    %952 = vmatpush1.msra.mxu0 0.0
    %953 = vmatprep.subr.mxu0 0.0
    %954 = vmatpush1.msra.mxu0 0.0
    %955 = vmatprep.subr.mxu0 0.0
    %956 = vmatpush1.msra.mxu0 0.0
    %957 = vmatprep.subr.mxu0 0.0
    %958 = vmatpush1.msra.mxu0 0.0
    %959 = vmatprep.subr.mxu0 0.0
    %960 = vmatpush1.msra.mxu0 0.0
    %961 = vmatprep.subr.mxu0 0.0
    %962 = vmatpush1.msra.mxu0 0.0
    %963 = vmatprep.subr.mxu0 0.0
    %964 = vmatpush1.msra.mxu0 0.0
    %965 = vmatprep.subr.mxu0 0.0
    %966 = vmatpush1.msra.mxu0 0.0
    %967 = vmatprep.subr.mxu0 0.0
    %968 = vmatpush1.msra.mxu0 0.0
    %969 = vmatprep.subr.mxu0 0.0
    %970 = vmatpush1.msra.mxu0 0.0
    %971 = vmatprep.subr.mxu0 0.0
    %972 = vmatpush1.msra.mxu0 0.0
    %973 = vmatprep.subr.mxu0 0.0
    %974 = vmatpush1.msra.mxu0 0.0
    %975 = vmatprep.subr.mxu0 0.0
    %976 = vmatpush1.msra.mxu0 %v945
    %977 = vmatprep.subr.mxu0 0.0
    %978 = vmatpush1.msra.mxu0 %v922
    %979 = vmatprep.subr.mxu0 0.0
    %980 = vmatpush2.msra.mxu0 0.0
    %981 = vmatprep.subr.mxu0 0.0
    %982 = vmatpush2.msra.mxu0 0.0
    %983 = vmatprep.subr.mxu0 0.0
    %984 = vmatpush2.msra.mxu0 0.0
    %985 = vmatprep.subr.mxu0 0.0
    %986 = vmatpush2.msra.mxu0 0.0
    %987 = vmatprep.subr.mxu0 0.0
    %988 = vmatpush2.msra.mxu0 0.0
    %989 = vmatprep.subr.mxu0 0.0
    %990 = vmatpush2.msra.mxu0 0.0
    %991 = vmatprep.subr.mxu0 0.0
    %992 = vmatpush2.msra.mxu0 0.0
    %993 = vmatprep.subr.mxu0 0.0
    %994 = vmatpush2.msra.mxu0 0.0
    %995 = vmatprep.subr.mxu0 0.0
    %996 = vmatpush2.msra.mxu0 0.0
    %997 = vmatprep.subr.mxu0 0.0
    %998 = vmatpush2.msra.mxu0 0.0
    %999 = vmatprep.subr.mxu0 0.0
    %1000 = vmatpush2.msra.mxu0 0.0
    %1001 = vmatprep.subr.mxu0 0.0
    %1002 = vmatpush2.msra.mxu0 0.0
    %1003 = vmatprep.subr.mxu0 0.0
    %1004 = vmatpush2.msra.mxu0 0.0
    %1005 = vmatprep.subr.mxu0 0.0
    %1006 = vmatpush2.msra.mxu0 0.0
    %1007 = vmatprep.subr.mxu0 0.0
    %1008 = vmatpush2.msra.mxu0 0.0
    %1009 = vmatprep.subr.mxu0 0.0
    %1010 = vmatpush2.msra.mxu0 0.0
    %1011 = vmatprep.mubr.f32.mxu0 0.0
    %1012 = vmatmul.mubr.f32.gmra.mxu0 %v936
    %v1013 = vpop.f32.mrf.mxu0
    %v1014 = vadd.f32 0.0, %v1013
    %v1015 = vpop.f32.mrf.mxu0
    %1016 = vmatprep.mubr.f32.mxu0 0.0
    %1017 = vmatmul.mubr.f32.gmra.mxu0 %v938
    %v1018 = vpop.f32.mrf.mxu0
    %v1019 = vadd.f32 0.0, %v1018
    %v1020 = vpop.f32.mrf.mxu0
    %1021 = vmatprep.mubr.f32.mxu0 0.0
    %1022 = vmatmul.mubr.f32.gmra.mxu0 %v940
    %v1023 = vpop.f32.mrf.mxu0
    %v1024 = vadd.f32 0.0, %v1023
    %v1025 = vpop.f32.mrf.mxu0
    %1026 = vmatprep.mubr.f32.mxu0 0.0
    %1027 = vmatmul.mubr.f32.gmra.mxu0 %v942
    %v1028 = vpop.f32.mrf.mxu0
    %v1029 = vadd.f32 0.0, %v1028
    %v1030 = vpop.f32.mrf.mxu0
    %1031 = vdwg.mxu0
    %v1032 = vadd.f32 %v901, %v1014
    %v1033 = vadd.f32 %v902, %v1019
    %v1034 = vadd.f32 %v903, %v1024
    %v1035 = vadd.f32 %v904, %v1029
    %s1036 = scalar_lea.vmem %s375, 2 [#allocation2]
    %v1037 = vld [vmem:[%s1036] ss:$2 sm:$0xf]
    %s1038 = scalar_lea.vmem %s375, 34 [#allocation2]
    %v1039 = vld [vmem:[%s1038] ss:$2 sm:$0xf]
    %s1040 = scalar_lea.vmem %s375, 66 [#allocation2]
    %v1041 = vld [vmem:[%s1040] ss:$2 sm:$0xf]
    %s1042 = scalar_lea.vmem %s375, 98 [#allocation2]
    %v1043 = vld [vmem:[%s1042] ss:$2 sm:$0xf]
    %s1044 = scalar_lea.vmem %s375, 162 [#allocation2]
    %v1045 = vld [vmem:[%s1044] ss:$2 sm:$0xf]
    %s1046 = scalar_lea.vmem %s375, 194 [#allocation2]
    %v1047 = vld [vmem:[%s1046] ss:$2 sm:$0xf]
    %s1048 = scalar_lea.vmem %s375, 226 [#allocation2]
    %v1049 = vld [vmem:[%s1048] ss:$2 sm:$0xf]
    %s1050 = scalar_lea.vmem %s375, 258 [#allocation2]
    %v1051 = vld [vmem:[%s1050] ss:$2 sm:$0xf]
    %s1052 = scalar_lea.vmem %s3, 80
    %v1053 = vld [vmem:[%s1052] sm:$0xff]
    %v1054 = vld [vmem:[%s1052 + $0x8] sm:$0x3]
    %v1063 = vcombine.low %v1037, %v1039
    %v1064 = vcombine.low %v1041, %v1043
    %v1065 = vcombine.low %v1045, %v1047
    %v1066 = vcombine.low %v1049, %v1051
    %v1067 = vsel %vm323, %v1063, 0
    %v1069 = vsel %vm323, %v1064, 0
    %v1071 = vsel %vm323, %v1065, 0
    %v1073 = vsel %vm323, %v1066, 0
    %v1076 = vsel %vm126, %v1054, 0
    %1078 = vmatprep.subr.mxu0 0.0
    %1079 = vmatpush1.msra.mxu0 0.0
    %1080 = vmatprep.subr.mxu0 0.0
    %1081 = vmatpush1.msra.mxu0 0.0
    %1082 = vmatprep.subr.mxu0 0.0
    %1083 = vmatpush1.msra.mxu0 0.0
    %1084 = vmatprep.subr.mxu0 0.0
    %1085 = vmatpush1.msra.mxu0 0.0
    %1086 = vmatprep.subr.mxu0 0.0
    %1087 = vmatpush1.msra.mxu0 0.0
    %1088 = vmatprep.subr.mxu0 0.0
    %1089 = vmatpush1.msra.mxu0 0.0
    %1090 = vmatprep.subr.mxu0 0.0
    %1091 = vmatpush1.msra.mxu0 0.0
    %1092 = vmatprep.subr.mxu0 0.0
    %1093 = vmatpush1.msra.mxu0 0.0
    %1094 = vmatprep.subr.mxu0 0.0
    %1095 = vmatpush1.msra.mxu0 0.0
    %1096 = vmatprep.subr.mxu0 0.0
    %1097 = vmatpush1.msra.mxu0 0.0
    %1098 = vmatprep.subr.mxu0 0.0
    %1099 = vmatpush1.msra.mxu0 0.0
    %1100 = vmatprep.subr.mxu0 0.0
    %1101 = vmatpush1.msra.mxu0 0.0
    %1102 = vmatprep.subr.mxu0 0.0
    %1103 = vmatpush1.msra.mxu0 0.0
    %1104 = vmatprep.subr.mxu0 0.0
    %1105 = vmatpush1.msra.mxu0 0.0
    %1106 = vmatprep.subr.mxu0 0.0
    %1107 = vmatpush1.msra.mxu0 %v1076
    %1108 = vmatprep.subr.mxu0 0.0
    %1109 = vmatpush1.msra.mxu0 %v1053
    %1110 = vmatprep.subr.mxu0 0.0
    %1111 = vmatpush2.msra.mxu0 0.0
    %1112 = vmatprep.subr.mxu0 0.0
    %1113 = vmatpush2.msra.mxu0 0.0
    %1114 = vmatprep.subr.mxu0 0.0
    %1115 = vmatpush2.msra.mxu0 0.0
    %1116 = vmatprep.subr.mxu0 0.0
    %1117 = vmatpush2.msra.mxu0 0.0
    %1118 = vmatprep.subr.mxu0 0.0
    %1119 = vmatpush2.msra.mxu0 0.0
    %1120 = vmatprep.subr.mxu0 0.0
    %1121 = vmatpush2.msra.mxu0 0.0
    %1122 = vmatprep.subr.mxu0 0.0
    %1123 = vmatpush2.msra.mxu0 0.0
    %1124 = vmatprep.subr.mxu0 0.0
    %1125 = vmatpush2.msra.mxu0 0.0
    %1126 = vmatprep.subr.mxu0 0.0
    %1127 = vmatpush2.msra.mxu0 0.0
    %1128 = vmatprep.subr.mxu0 0.0
    %1129 = vmatpush2.msra.mxu0 0.0
    %1130 = vmatprep.subr.mxu0 0.0
    %1131 = vmatpush2.msra.mxu0 0.0
    %1132 = vmatprep.subr.mxu0 0.0
    %1133 = vmatpush2.msra.mxu0 0.0
    %1134 = vmatprep.subr.mxu0 0.0
    %1135 = vmatpush2.msra.mxu0 0.0
    %1136 = vmatprep.subr.mxu0 0.0
    %1137 = vmatpush2.msra.mxu0 0.0
    %1138 = vmatprep.subr.mxu0 0.0
    %1139 = vmatpush2.msra.mxu0 0.0
    %1140 = vmatprep.subr.mxu0 0.0
    %1141 = vmatpush2.msra.mxu0 0.0
    %1142 = vmatprep.mubr.f32.mxu0 0.0
    %1143 = vmatmul.mubr.f32.gmra.mxu0 %v1067
    %v1144 = vpop.f32.mrf.mxu0
    %v1145 = vadd.f32 0.0, %v1144
    %v1146 = vpop.f32.mrf.mxu0
    %1147 = vmatprep.mubr.f32.mxu0 0.0
    %1148 = vmatmul.mubr.f32.gmra.mxu0 %v1069
    %v1149 = vpop.f32.mrf.mxu0
    %v1150 = vadd.f32 0.0, %v1149
    %v1151 = vpop.f32.mrf.mxu0
    %1152 = vmatprep.mubr.f32.mxu0 0.0
    %1153 = vmatmul.mubr.f32.gmra.mxu0 %v1071
    %v1154 = vpop.f32.mrf.mxu0
    %v1155 = vadd.f32 0.0, %v1154
    %v1156 = vpop.f32.mrf.mxu0
    %1157 = vmatprep.mubr.f32.mxu0 0.0
    %1158 = vmatmul.mubr.f32.gmra.mxu0 %v1073
    %v1159 = vpop.f32.mrf.mxu0
    %v1160 = vadd.f32 0.0, %v1159
    %v1161 = vpop.f32.mrf.mxu0
    %1162 = vdwg.mxu0
    %v1163 = vadd.f32 %v1032, %v1145
    %v1164 = vadd.f32 %v1033, %v1150
    %v1165 = vadd.f32 %v1034, %v1155
    %v1166 = vadd.f32 %v1035, %v1160
    %s1167 = scalar_lea.vmem [#allocation2], 32
    %v1168 = vld [vmem:[%s1167] ss:$2 sm:$0xf]
    %s1169 = scalar_lea.vmem %s1167, 32 [#allocation2]
    %v1170 = vld [vmem:[%s1169] ss:$2 sm:$0xf]
    %s1171 = scalar_lea.vmem %s1167, 64 [#allocation2]
    %v1172 = vld [vmem:[%s1171] ss:$2 sm:$0xf]
    %s1173 = scalar_lea.vmem %s1167, 96 [#allocation2]
    %v1174 = vld [vmem:[%s1173] ss:$2 sm:$0xf]
    %s1175 = scalar_lea.vmem %s1167, 160 [#allocation2]
    %v1176 = vld [vmem:[%s1175] ss:$2 sm:$0xf]
    %s1177 = scalar_lea.vmem %s1167, 192 [#allocation2]
    %v1178 = vld [vmem:[%s1177] ss:$2 sm:$0xf]
    %s1179 = scalar_lea.vmem %s1167, 224 [#allocation2]
    %v1180 = vld [vmem:[%s1179] ss:$2 sm:$0xf]
    %s1181 = scalar_lea.vmem %s1167, 256 [#allocation2]
    %v1182 = vld [vmem:[%s1181] ss:$2 sm:$0xf]
    %s1183 = scalar_lea.vmem %s3, 96
    %v1184 = vld [vmem:[%s1183] sm:$0xff]
    %v1185 = vld [vmem:[%s1183 + $0x8] sm:$0x3]
    %v1194 = vcombine.low %v1168, %v1170
    %v1195 = vcombine.low %v1172, %v1174
    %v1196 = vcombine.low %v1176, %v1178
    %v1197 = vcombine.low %v1180, %v1182
    %v1198 = vsel %vm323, %v1194, 0
    %v1200 = vsel %vm323, %v1195, 0
    %v1202 = vsel %vm323, %v1196, 0
    %v1204 = vsel %vm323, %v1197, 0
    %v1207 = vsel %vm126, %v1185, 0
    %1209 = vmatprep.subr.mxu0 0.0
    %1210 = vmatpush1.msra.mxu0 0.0
    %1211 = vmatprep.subr.mxu0 0.0
    %1212 = vmatpush1.msra.mxu0 0.0
    %1213 = vmatprep.subr.mxu0 0.0
    %1214 = vmatpush1.msra.mxu0 0.0
    %1215 = vmatprep.subr.mxu0 0.0
    %1216 = vmatpush1.msra.mxu0 0.0
    %1217 = vmatprep.subr.mxu0 0.0
    %1218 = vmatpush1.msra.mxu0 0.0
    %1219 = vmatprep.subr.mxu0 0.0
    %1220 = vmatpush1.msra.mxu0 0.0
    %1221 = vmatprep.subr.mxu0 0.0
    %1222 = vmatpush1.msra.mxu0 0.0
    %1223 = vmatprep.subr.mxu0 0.0
    %1224 = vmatpush1.msra.mxu0 0.0
    %1225 = vmatprep.subr.mxu0 0.0
    %1226 = vmatpush1.msra.mxu0 0.0
    %1227 = vmatprep.subr.mxu0 0.0
    %1228 = vmatpush1.msra.mxu0 0.0
    %1229 = vmatprep.subr.mxu0 0.0
    %1230 = vmatpush1.msra.mxu0 0.0
    %1231 = vmatprep.subr.mxu0 0.0
    %1232 = vmatpush1.msra.mxu0 0.0
    %1233 = vmatprep.subr.mxu0 0.0
    %1234 = vmatpush1.msra.mxu0 0.0
    %1235 = vmatprep.subr.mxu0 0.0
    %1236 = vmatpush1.msra.mxu0 0.0
    %1237 = vmatprep.subr.mxu0 0.0
    %1238 = vmatpush1.msra.mxu0 %v1207
    %1239 = vmatprep.subr.mxu0 0.0
    %1240 = vmatpush1.msra.mxu0 %v1184
    %1241 = vmatprep.subr.mxu0 0.0
    %1242 = vmatpush2.msra.mxu0 0.0
    %1243 = vmatprep.subr.mxu0 0.0
    %1244 = vmatpush2.msra.mxu0 0.0
    %1245 = vmatprep.subr.mxu0 0.0
    %1246 = vmatpush2.msra.mxu0 0.0
    %1247 = vmatprep.subr.mxu0 0.0
    %1248 = vmatpush2.msra.mxu0 0.0
    %1249 = vmatprep.subr.mxu0 0.0
    %1250 = vmatpush2.msra.mxu0 0.0
    %1251 = vmatprep.subr.mxu0 0.0
    %1252 = vmatpush2.msra.mxu0 0.0
    %1253 = vmatprep.subr.mxu0 0.0
    %1254 = vmatpush2.msra.mxu0 0.0
    %1255 = vmatprep.subr.mxu0 0.0
    %1256 = vmatpush2.msra.mxu0 0.0
    %1257 = vmatprep.subr.mxu0 0.0
    %1258 = vmatpush2.msra.mxu0 0.0
    %1259 = vmatprep.subr.mxu0 0.0
    %1260 = vmatpush2.msra.mxu0 0.0
    %1261 = vmatprep.subr.mxu0 0.0
    %1262 = vmatpush2.msra.mxu0 0.0
    %1263 = vmatprep.subr.mxu0 0.0
    %1264 = vmatpush2.msra.mxu0 0.0
    %1265 = vmatprep.subr.mxu0 0.0
    %1266 = vmatpush2.msra.mxu0 0.0
    %1267 = vmatprep.subr.mxu0 0.0
    %1268 = vmatpush2.msra.mxu0 0.0
    %1269 = vmatprep.subr.mxu0 0.0
    %1270 = vmatpush2.msra.mxu0 0.0
    %1271 = vmatprep.subr.mxu0 0.0
    %1272 = vmatpush2.msra.mxu0 0.0
    %1273 = vmatprep.mubr.f32.mxu0 0.0
    %1274 = vmatmul.mubr.f32.gmra.mxu0 %v1198
    %v1275 = vpop.f32.mrf.mxu0
    %v1276 = vadd.f32 0.0, %v1275
    %v1277 = vpop.f32.mrf.mxu0
    %1278 = vmatprep.mubr.f32.mxu0 0.0
    %1279 = vmatmul.mubr.f32.gmra.mxu0 %v1200
    %v1280 = vpop.f32.mrf.mxu0
    %v1281 = vadd.f32 0.0, %v1280
    %v1282 = vpop.f32.mrf.mxu0
    %1283 = vmatprep.mubr.f32.mxu0 0.0
    %1284 = vmatmul.mubr.f32.gmra.mxu0 %v1202
    %v1285 = vpop.f32.mrf.mxu0
    %v1286 = vadd.f32 0.0, %v1285
    %v1287 = vpop.f32.mrf.mxu0
    %1288 = vmatprep.mubr.f32.mxu0 0.0
    %1289 = vmatmul.mubr.f32.gmra.mxu0 %v1204
    %v1290 = vpop.f32.mrf.mxu0
    %v1291 = vadd.f32 0.0, %v1290
    %v1292 = vpop.f32.mrf.mxu0
    %1293 = vdwg.mxu0
    %v1294 = vadd.f32 %v1163, %v1276
    %v1295 = vadd.f32 %v1164, %v1281
    %v1296 = vadd.f32 %v1165, %v1286
    %v1297 = vadd.f32 %v1166, %v1291
    %s1298 = scalar_lea.vmem %s1167, 1 [#allocation2]
    %v1299 = vld [vmem:[%s1298] ss:$2 sm:$0xf]
    %s1300 = scalar_lea.vmem %s1167, 33 [#allocation2]
    %v1301 = vld [vmem:[%s1300] ss:$2 sm:$0xf]
    %s1302 = scalar_lea.vmem %s1167, 65 [#allocation2]
    %v1303 = vld [vmem:[%s1302] ss:$2 sm:$0xf]
    %s1304 = scalar_lea.vmem %s1167, 97 [#allocation2]
    %v1305 = vld [vmem:[%s1304] ss:$2 sm:$0xf]
    %s1306 = scalar_lea.vmem %s1167, 161 [#allocation2]
    %v1307 = vld [vmem:[%s1306] ss:$2 sm:$0xf]
    %s1308 = scalar_lea.vmem %s1167, 193 [#allocation2]
    %v1309 = vld [vmem:[%s1308] ss:$2 sm:$0xf]
    %s1310 = scalar_lea.vmem %s1167, 225 [#allocation2]
    %v1311 = vld [vmem:[%s1310] ss:$2 sm:$0xf]
    %s1312 = scalar_lea.vmem %s1167, 257 [#allocation2]
    %v1313 = vld [vmem:[%s1312] ss:$2 sm:$0xf]
    %s1314 = scalar_lea.vmem %s3, 112
    %v1315 = vld [vmem:[%s1314] sm:$0xff]
    %v1316 = vld [vmem:[%s1314 + $0x8] sm:$0x3]
    %v1325 = vcombine.low %v1299, %v1301
    %v1326 = vcombine.low %v1303, %v1305
    %v1327 = vcombine.low %v1307, %v1309
    %v1328 = vcombine.low %v1311, %v1313
    %v1329 = vsel %vm323, %v1325, 0
    %v1331 = vsel %vm323, %v1326, 0
    %v1333 = vsel %vm323, %v1327, 0
    %v1335 = vsel %vm323, %v1328, 0
    %v1338 = vsel %vm126, %v1316, 0
    %1340 = vmatprep.subr.mxu0 0.0
    %1341 = vmatpush1.msra.mxu0 0.0
    %1342 = vmatprep.subr.mxu0 0.0
    %1343 = vmatpush1.msra.mxu0 0.0
    %1344 = vmatprep.subr.mxu0 0.0
    %1345 = vmatpush1.msra.mxu0 0.0
    %1346 = vmatprep.subr.mxu0 0.0
    %1347 = vmatpush1.msra.mxu0 0.0
    %1348 = vmatprep.subr.mxu0 0.0
    %1349 = vmatpush1.msra.mxu0 0.0
    %1350 = vmatprep.subr.mxu0 0.0
    %1351 = vmatpush1.msra.mxu0 0.0
    %1352 = vmatprep.subr.mxu0 0.0
    %1353 = vmatpush1.msra.mxu0 0.0
    %1354 = vmatprep.subr.mxu0 0.0
    %1355 = vmatpush1.msra.mxu0 0.0
    %1356 = vmatprep.subr.mxu0 0.0
    %1357 = vmatpush1.msra.mxu0 0.0
    %1358 = vmatprep.subr.mxu0 0.0
    %1359 = vmatpush1.msra.mxu0 0.0
    %1360 = vmatprep.subr.mxu0 0.0
    %1361 = vmatpush1.msra.mxu0 0.0
    %1362 = vmatprep.subr.mxu0 0.0
    %1363 = vmatpush1.msra.mxu0 0.0
    %1364 = vmatprep.subr.mxu0 0.0
    %1365 = vmatpush1.msra.mxu0 0.0
    %1366 = vmatprep.subr.mxu0 0.0
    %1367 = vmatpush1.msra.mxu0 0.0
    %1368 = vmatprep.subr.mxu0 0.0
    %1369 = vmatpush1.msra.mxu0 %v1338
    %1370 = vmatprep.subr.mxu0 0.0
    %1371 = vmatpush1.msra.mxu0 %v1315
    %1372 = vmatprep.subr.mxu0 0.0
    %1373 = vmatpush2.msra.mxu0 0.0
    %1374 = vmatprep.subr.mxu0 0.0
    %1375 = vmatpush2.msra.mxu0 0.0
    %1376 = vmatprep.subr.mxu0 0.0
    %1377 = vmatpush2.msra.mxu0 0.0
    %1378 = vmatprep.subr.mxu0 0.0
    %1379 = vmatpush2.msra.mxu0 0.0
    %1380 = vmatprep.subr.mxu0 0.0
    %1381 = vmatpush2.msra.mxu0 0.0
    %1382 = vmatprep.subr.mxu0 0.0
    %1383 = vmatpush2.msra.mxu0 0.0
    %1384 = vmatprep.subr.mxu0 0.0
    %1385 = vmatpush2.msra.mxu0 0.0
    %1386 = vmatprep.subr.mxu0 0.0
    %1387 = vmatpush2.msra.mxu0 0.0
    %1388 = vmatprep.subr.mxu0 0.0
    %1389 = vmatpush2.msra.mxu0 0.0
    %1390 = vmatprep.subr.mxu0 0.0
    %1391 = vmatpush2.msra.mxu0 0.0
    %1392 = vmatprep.subr.mxu0 0.0
    %1393 = vmatpush2.msra.mxu0 0.0
    %1394 = vmatprep.subr.mxu0 0.0
    %1395 = vmatpush2.msra.mxu0 0.0
    %1396 = vmatprep.subr.mxu0 0.0
    %1397 = vmatpush2.msra.mxu0 0.0
    %1398 = vmatprep.subr.mxu0 0.0
    %1399 = vmatpush2.msra.mxu0 0.0
    %1400 = vmatprep.subr.mxu0 0.0
    %1401 = vmatpush2.msra.mxu0 0.0
    %1402 = vmatprep.subr.mxu0 0.0
    %1403 = vmatpush2.msra.mxu0 0.0
    %1404 = vmatprep.mubr.f32.mxu0 0.0
    %1405 = vmatmul.mubr.f32.gmra.mxu0 %v1329
    %v1406 = vpop.f32.mrf.mxu0
    %v1407 = vadd.f32 0.0, %v1406
    %v1408 = vpop.f32.mrf.mxu0
    %1409 = vmatprep.mubr.f32.mxu0 0.0
    %1410 = vmatmul.mubr.f32.gmra.mxu0 %v1331
    %v1411 = vpop.f32.mrf.mxu0
    %v1412 = vadd.f32 0.0, %v1411
    %v1413 = vpop.f32.mrf.mxu0
    %1414 = vmatprep.mubr.f32.mxu0 0.0
    %1415 = vmatmul.mubr.f32.gmra.mxu0 %v1333
    %v1416 = vpop.f32.mrf.mxu0
    %v1417 = vadd.f32 0.0, %v1416
    %v1418 = vpop.f32.mrf.mxu0
    %1419 = vmatprep.mubr.f32.mxu0 0.0
    %1420 = vmatmul.mubr.f32.gmra.mxu0 %v1335
    %v1421 = vpop.f32.mrf.mxu0
    %v1422 = vadd.f32 0.0, %v1421
    %v1423 = vpop.f32.mrf.mxu0
    %1424 = vdwg.mxu0
    %v1425 = vadd.f32 %v1294, %v1407
    %v1426 = vadd.f32 %v1295, %v1412
    %v1427 = vadd.f32 %v1296, %v1417
    %v1428 = vadd.f32 %v1297, %v1422
    %s1429 = scalar_lea.vmem %s1167, 2 [#allocation2]
    %v1430 = vld [vmem:[%s1429] ss:$2 sm:$0xf]
    %s1431 = scalar_lea.vmem %s1167, 34 [#allocation2]
    %v1432 = vld [vmem:[%s1431] ss:$2 sm:$0xf]
    %s1433 = scalar_lea.vmem %s1167, 66 [#allocation2]
    %v1434 = vld [vmem:[%s1433] ss:$2 sm:$0xf]
    %s1435 = scalar_lea.vmem %s1167, 98 [#allocation2]
    %v1436 = vld [vmem:[%s1435] ss:$2 sm:$0xf]
    %s1437 = scalar_lea.vmem %s1167, 162 [#allocation2]
    %v1438 = vld [vmem:[%s1437] ss:$2 sm:$0xf]
    %s1439 = scalar_lea.vmem %s1167, 194 [#allocation2]
    %v1440 = vld [vmem:[%s1439] ss:$2 sm:$0xf]
    %s1441 = scalar_lea.vmem %s1167, 226 [#allocation2]
    %v1442 = vld [vmem:[%s1441] ss:$2 sm:$0xf]
    %s1443 = scalar_lea.vmem %s1167, 258 [#allocation2]
    %v1444 = vld [vmem:[%s1443] ss:$2 sm:$0xf]
    %s1445 = scalar_lea.vmem %s3, 128
    %v1446 = vld [vmem:[%s1445] sm:$0xff]
    %v1447 = vld [vmem:[%s1445 + $0x8] sm:$0x3]
    %v1456 = vcombine.low %v1430, %v1432
    %v1457 = vcombine.low %v1434, %v1436
    %v1458 = vcombine.low %v1438, %v1440
    %v1459 = vcombine.low %v1442, %v1444
    %v1460 = vsel %vm323, %v1456, 0
    %v1462 = vsel %vm323, %v1457, 0
    %v1464 = vsel %vm323, %v1458, 0
    %v1466 = vsel %vm323, %v1459, 0
    %v1469 = vsel %vm126, %v1447, 0
    %1471 = vmatprep.subr.mxu0 0.0
    %1472 = vmatpush1.msra.mxu0 0.0
    %1473 = vmatprep.subr.mxu0 0.0
    %1474 = vmatpush1.msra.mxu0 0.0
    %1475 = vmatprep.subr.mxu0 0.0
    %1476 = vmatpush1.msra.mxu0 0.0
    %1477 = vmatprep.subr.mxu0 0.0
    %1478 = vmatpush1.msra.mxu0 0.0
    %1479 = vmatprep.subr.mxu0 0.0
    %1480 = vmatpush1.msra.mxu0 0.0
    %1481 = vmatprep.subr.mxu0 0.0
    %1482 = vmatpush1.msra.mxu0 0.0
    %1483 = vmatprep.subr.mxu0 0.0
    %1484 = vmatpush1.msra.mxu0 0.0
    %1485 = vmatprep.subr.mxu0 0.0
    %1486 = vmatpush1.msra.mxu0 0.0
    %1487 = vmatprep.subr.mxu0 0.0
    %1488 = vmatpush1.msra.mxu0 0.0
    %1489 = vmatprep.subr.mxu0 0.0
    %1490 = vmatpush1.msra.mxu0 0.0
    %1491 = vmatprep.subr.mxu0 0.0
    %1492 = vmatpush1.msra.mxu0 0.0
    %1493 = vmatprep.subr.mxu0 0.0
    %1494 = vmatpush1.msra.mxu0 0.0
    %1495 = vmatprep.subr.mxu0 0.0
    %1496 = vmatpush1.msra.mxu0 0.0
    %1497 = vmatprep.subr.mxu0 0.0
    %1498 = vmatpush1.msra.mxu0 0.0
    %1499 = vmatprep.subr.mxu0 0.0
    %1500 = vmatpush1.msra.mxu0 %v1469
    %1501 = vmatprep.subr.mxu0 0.0
    %1502 = vmatpush1.msra.mxu0 %v1446
    %1503 = vmatprep.subr.mxu0 0.0
    %1504 = vmatpush2.msra.mxu0 0.0
    %1505 = vmatprep.subr.mxu0 0.0
    %1506 = vmatpush2.msra.mxu0 0.0
    %1507 = vmatprep.subr.mxu0 0.0
    %1508 = vmatpush2.msra.mxu0 0.0
    %1509 = vmatprep.subr.mxu0 0.0
    %1510 = vmatpush2.msra.mxu0 0.0
    %1511 = vmatprep.subr.mxu0 0.0
    %1512 = vmatpush2.msra.mxu0 0.0
    %1513 = vmatprep.subr.mxu0 0.0
    %1514 = vmatpush2.msra.mxu0 0.0
    %1515 = vmatprep.subr.mxu0 0.0
    %1516 = vmatpush2.msra.mxu0 0.0
    %1517 = vmatprep.subr.mxu0 0.0
    %1518 = vmatpush2.msra.mxu0 0.0
    %1519 = vmatprep.subr.mxu0 0.0
    %1520 = vmatpush2.msra.mxu0 0.0
    %1521 = vmatprep.subr.mxu0 0.0
    %1522 = vmatpush2.msra.mxu0 0.0
    %1523 = vmatprep.subr.mxu0 0.0
    %1524 = vmatpush2.msra.mxu0 0.0
    %1525 = vmatprep.subr.mxu0 0.0
    %1526 = vmatpush2.msra.mxu0 0.0
    %1527 = vmatprep.subr.mxu0 0.0
    %1528 = vmatpush2.msra.mxu0 0.0
    %1529 = vmatprep.subr.mxu0 0.0
    %1530 = vmatpush2.msra.mxu0 0.0
    %1531 = vmatprep.subr.mxu0 0.0
    %1532 = vmatpush2.msra.mxu0 0.0
    %1533 = vmatprep.subr.mxu0 0.0
    %1534 = vmatpush2.msra.mxu0 0.0
    %1535 = vmatprep.mubr.f32.mxu0 0.0
    %1536 = vmatmul.mubr.f32.gmra.mxu0 %v1460
    %v1537 = vpop.f32.mrf.mxu0
    %v1538 = vadd.f32 0.0, %v1537
    %v1539 = vpop.f32.mrf.mxu0
    %1540 = vmatprep.mubr.f32.mxu0 0.0
    %1541 = vmatmul.mubr.f32.gmra.mxu0 %v1462
    %v1542 = vpop.f32.mrf.mxu0
    %v1543 = vadd.f32 0.0, %v1542
    %v1544 = vpop.f32.mrf.mxu0
    %1545 = vmatprep.mubr.f32.mxu0 0.0
    %1546 = vmatmul.mubr.f32.gmra.mxu0 %v1464
    %v1547 = vpop.f32.mrf.mxu0
    %v1548 = vadd.f32 0.0, %v1547
    %v1549 = vpop.f32.mrf.mxu0
    %1550 = vmatprep.mubr.f32.mxu0 0.0
    %1551 = vmatmul.mubr.f32.gmra.mxu0 %v1466
    %v1552 = vpop.f32.mrf.mxu0
    %v1553 = vadd.f32 0.0, %v1552
    %v1554 = vpop.f32.mrf.mxu0
    %1555 = vdwg.mxu0
    %v1556 = vadd.f32 %v1425, %v1538
    %v1557 = vadd.f32 %v1426, %v1543
    %v1558 = vadd.f32 %v1427, %v1548
    %v1559 = vadd.f32 %v1428, %v1553
    %v1560 = vld [vmem:[%s4] sm:$0x1]
    %v1562 = vlaneseq
    %v1563 = vshrl.u32 %v1562, 7
    %v1564 = vsub.s32 0, %v1563
    %v1565 = vrot.slane %v1560, %v1564
    %v1567 = vadd.f32 %v1556, %v1565
    %v1568 = vadd.f32 %v1557, %v1565
    %v1569 = vadd.f32 %v1558, %v1565
    %v1570 = vadd.f32 %v1559, %v1565
    %vm1571 = vcmp.ge.f32.partialorder %v1567, 0.0
    %vm1572 = vcmp.ge.f32.partialorder %v1568, 0.0
    %vm1573 = vcmp.ge.f32.partialorder %v1569, 0.0
    %vm1574 = vcmp.ge.f32.partialorder %v1570, 0.0
    %v1575 = vmul.f32 %v1567, 0.2
    %v1576 = vmul.f32 %v1568, 0.2
    %v1577 = vmul.f32 %v1569, 0.2
    %v1578 = vmul.f32 %v1570, 0.2
    %v1579 = vsel %vm1571, %v1567, %v1575
    %v1580 = vsel %vm1572, %v1568, %v1576
    %v1581 = vsel %vm1573, %v1569, %v1577
    %v1582 = vsel %vm1574, %v1570, %v1578
    %v1587 = vcombine.high %v1579, %v1579
    %v1588 = vcombine.high %v1580, %v1580
    %v1589 = vcombine.high %v1581, %v1581
    %v1590 = vcombine.high %v1582, %v1582
    %vm1595 = vcmask 160768
    %1596 = vst.msk [vmem:[#allocation3] sm:$0x3f] %vm1595, 0.0
    %1597 = vst.msk [vmem:[#allocation3 + $0x30] sm:$0x3f] %vm1595, 0.0
    %s1598 = scalar_lea.vmem [#allocation3], 40
    %1599 = vst.msk [vmem:[%s1598] sm:$0x3f] %vm1595, 0.0
    %1600 = vst.msk [vmem:[%s1598 + $0x30] sm:$0x3f] %vm1595, 0.0
    %vm1601 = vcmask 155648
    %1602 = vst.msk [vmem:[#allocation3] sm:$0x1] %vm1601, 0.0
    %1603 = vst.msk [vmem:[#allocation3 + $0x8] sm:$0x1] %vm1601, 0.0
    %1604 = vst.msk [vmem:[#allocation3 + $0x10] sm:$0x1] %vm1601, 0.0
    %1605 = vst.msk [vmem:[#allocation3 + $0x18] sm:$0x1] %vm1601, 0.0
    %1606 = vst.msk [vmem:[#allocation3 + $0x20] sm:$0x1] %vm1601, 0.0
    %1607 = vst.msk [vmem:[#allocation3 + $0x28] sm:$0x1] %vm1601, 0.0
    %1608 = vst.msk [vmem:[#allocation3 + $0x30] sm:$0x1] %vm1601, 0.0
    %1609 = vst.msk [vmem:[#allocation3 + $0x38] sm:$0x1] %vm1601, 0.0
    %1610 = vst.msk [vmem:[#allocation3 + $0x40] sm:$0x1] %vm1601, 0.0
    %1611 = vst.msk [vmem:[#allocation3 + $0x48] sm:$0x1] %vm1601, 0.0
    %1612 = vst.msk [vmem:[#allocation3 + $0x50] sm:$0x1] %vm1601, 0.0
    %1613 = vst.msk [vmem:[#allocation3 + $0x58] sm:$0x1] %vm1601, 0.0
    %1614 = vst.msk [vmem:[#allocation3 + $0x5] sm:$0x1] %vm1601, 0.0
    %1615 = vst.msk [vmem:[#allocation3 + $0xd] sm:$0x1] %vm1601, 0.0
    %1616 = vst.msk [vmem:[#allocation3 + $0x15] sm:$0x1] %vm1601, 0.0
    %1617 = vst.msk [vmem:[#allocation3 + $0x1d] sm:$0x1] %vm1601, 0.0
    %1618 = vst.msk [vmem:[#allocation3 + $0x25] sm:$0x1] %vm1601, 0.0
    %1619 = vst.msk [vmem:[#allocation3 + $0x2d] sm:$0x1] %vm1601, 0.0
    %1620 = vst.msk [vmem:[#allocation3 + $0x35] sm:$0x1] %vm1601, 0.0
    %1621 = vst.msk [vmem:[#allocation3 + $0x3d] sm:$0x1] %vm1601, 0.0
    %1622 = vst.msk [vmem:[#allocation3 + $0x45] sm:$0x1] %vm1601, 0.0
    %1623 = vst.msk [vmem:[#allocation3 + $0x4d] sm:$0x1] %vm1601, 0.0
    %1624 = vst.msk [vmem:[#allocation3 + $0x55] sm:$0x1] %vm1601, 0.0
    %1625 = vst.msk [vmem:[#allocation3 + $0x5d] sm:$0x1] %vm1601, 0.0
    %s1626 = scalar_lea.vmem [#allocation3], 8
    %vm1627 = vcmask 158720
    %1628 = vst.msk [vmem:[%s1626 + $0x1] sm:$0xf] %vm1627, %v1579
    %1629 = vst.msk [vmem:[%s1626 + $0x9] sm:$0xf] %vm1627, %v1587
    %1630 = vst.msk [vmem:[%s1626 + $0x11] sm:$0xf] %vm1627, %v1580
    %1631 = vst.msk [vmem:[%s1626 + $0x19] sm:$0xf] %vm1627, %v1588
    %1632 = vst.msk [vmem:[%s1626 + $0x31] sm:$0xf] %vm1627, %v1581
    %1633 = vst.msk [vmem:[%s1626 + $0x39] sm:$0xf] %vm1627, %v1589
    %1634 = vst.msk [vmem:[%s1626 + $0x41] sm:$0xf] %vm1627, %v1582
    %1635 = vst.msk [vmem:[%s1626 + $0x49] sm:$0xf] %vm1627, %v1590
    %v1636 = vld [vmem:[#allocation3] ss:$2 sm:$0x3]
    %s1637 = scalar_lea.vmem [#allocation3], 16
    %v1638 = vld [vmem:[%s1637] ss:$2 sm:$0x3]
    %s1639 = scalar_lea.vmem [#allocation3], 48
    %v1640 = vld [vmem:[%s1639] ss:$2 sm:$0x3]
    %s1641 = scalar_lea.vmem [#allocation3], 64
    %v1642 = vld [vmem:[%s1641] ss:$2 sm:$0x3]
    %v1643 = vld [vmem:[%s5] sm:$0xff]
    %v1644 = vld [vmem:[%s5 + $0x8] sm:$0xff]
    %v1645 = vld [vmem:[%s5 + $0x10] sm:$0xf]
    %s1646 = scalar_lea.vmem [#allocation3], 1
    %v1647 = vld [vmem:[%s1646] ss:$2 sm:$0x3]
    %s1648 = scalar_lea.vmem [#allocation3], 17
    %v1649 = vld [vmem:[%s1648] ss:$2 sm:$0x3]
    %s1650 = scalar_lea.vmem [#allocation3], 49
    %v1651 = vld [vmem:[%s1650] ss:$2 sm:$0x3]
    %s1652 = scalar_lea.vmem [#allocation3], 65
    %v1653 = vld [vmem:[%s1652] ss:$2 sm:$0x3]
    %s1654 = scalar_lea.vmem %s5, 24
    %v1655 = vld [vmem:[%s1654] sm:$0xff]
    %v1656 = vld [vmem:[%s1654 + $0x8] sm:$0xff]
    %v1657 = vld [vmem:[%s1654 + $0x10] sm:$0xf]
    %v1662 = vcombine.low %v1647, %v1649
    %v1663 = vcombine.low %v1651, %v1653
    %v1665 = vunpack.c.l.s4 1983009808
    %v1666 = vunpack.c.0.s8 %v1665
    %v1667 = vlaneseq
    %v1668 = vshrl.u32 %v1667, 7
    %v1669 = vsub.s32 %v1666, %v1668
    %v1670 = vrot.slane %v1662, %v1669
    %v1672 = vunpack.c.l.s4 1983009808
    %v1673 = vunpack.c.0.s8 %v1672
    %v1674 = vlaneseq
    %v1675 = vshrl.u32 %v1674, 7
    %v1676 = vsub.s32 %v1673, %v1675
    %v1677 = vrot.slane %v1663, %v1676
    %v1678 = vcombine.low %v1670, %v1677
    %vm1679 = vcmask 162816
    %v1680 = vsel %vm1679, %v1678, 0
    %vm1682 = vcmask 1043456
    %v1684 = vsel %vm1682, %v1657, 0
    %1686 = vmatprep.subr.mxu0 0.0
    %1687 = vmatpush1.msra.mxu0 0.0
    %1688 = vmatprep.subr.mxu0 0.0
    %1689 = vmatpush1.msra.mxu0 0.0
    %1690 = vmatprep.subr.mxu0 0.0
    %1691 = vmatpush1.msra.mxu0 0.0
    %1692 = vmatprep.subr.mxu0 0.0
    %1693 = vmatpush1.msra.mxu0 0.0
    %1694 = vmatprep.subr.mxu0 0.0
    %1695 = vmatpush1.msra.mxu0 0.0
    %1696 = vmatprep.subr.mxu0 0.0
    %1697 = vmatpush1.msra.mxu0 0.0
    %1698 = vmatprep.subr.mxu0 0.0
    %1699 = vmatpush1.msra.mxu0 0.0
    %1700 = vmatprep.subr.mxu0 0.0
    %1701 = vmatpush1.msra.mxu0 0.0
    %1702 = vmatprep.subr.mxu0 0.0
    %1703 = vmatpush1.msra.mxu0 0.0
    %1704 = vmatprep.subr.mxu0 0.0
    %1705 = vmatpush1.msra.mxu0 0.0
    %1706 = vmatprep.subr.mxu0 0.0
    %1707 = vmatpush1.msra.mxu0 0.0
    %1708 = vmatprep.subr.mxu0 0.0
    %1709 = vmatpush1.msra.mxu0 0.0
    %1710 = vmatprep.subr.mxu0 0.0
    %1711 = vmatpush1.msra.mxu0 0.0
    %1712 = vmatprep.subr.mxu0 0.0
    %1713 = vmatpush1.msra.mxu0 %v1684
    %1714 = vmatprep.subr.mxu0 0.0
    %1715 = vmatpush1.msra.mxu0 %v1656
    %1716 = vmatprep.subr.mxu0 0.0
    %1717 = vmatpush1.msra.mxu0 %v1655
    %1718 = vmatprep.subr.mxu0 0.0
    %1719 = vmatpush2.msra.mxu0 0.0
    %1720 = vmatprep.subr.mxu0 0.0
    %1721 = vmatpush2.msra.mxu0 0.0
    %1722 = vmatprep.subr.mxu0 0.0
    %1723 = vmatpush2.msra.mxu0 0.0
    %1724 = vmatprep.subr.mxu0 0.0
    %1725 = vmatpush2.msra.mxu0 0.0
    %1726 = vmatprep.subr.mxu0 0.0
    %1727 = vmatpush2.msra.mxu0 0.0
    %1728 = vmatprep.subr.mxu0 0.0
    %1729 = vmatpush2.msra.mxu0 0.0
    %1730 = vmatprep.subr.mxu0 0.0
    %1731 = vmatpush2.msra.mxu0 0.0
    %1732 = vmatprep.subr.mxu0 0.0
    %1733 = vmatpush2.msra.mxu0 0.0
    %1734 = vmatprep.subr.mxu0 0.0
    %1735 = vmatpush2.msra.mxu0 0.0
    %1736 = vmatprep.subr.mxu0 0.0
    %1737 = vmatpush2.msra.mxu0 0.0
    %1738 = vmatprep.subr.mxu0 0.0
    %1739 = vmatpush2.msra.mxu0 0.0
    %1740 = vmatprep.subr.mxu0 0.0
    %1741 = vmatpush2.msra.mxu0 0.0
    %1742 = vmatprep.subr.mxu0 0.0
    %1743 = vmatpush2.msra.mxu0 0.0
    %1744 = vmatprep.subr.mxu0 0.0
    %1745 = vmatpush2.msra.mxu0 0.0
    %1746 = vmatprep.subr.mxu0 0.0
    %1747 = vmatpush2.msra.mxu0 0.0
    %1748 = vmatprep.subr.mxu0 0.0
    %1749 = vmatpush2.msra.mxu0 0.0
    %1750 = vmatprep.mubr.f32.mxu0 0.0
    %1751 = vmatmul.mubr.f32.gmra.mxu0 %v1680
    %v1752 = vpop.f32.mrf.mxu0
    %v1753 = vadd.f32 0.0, %v1752
    %v1754 = vpop.f32.mrf.mxu0
    %1755 = vdwg.mxu0
    %v1760 = vcombine.low %v1636, %v1638
    %v1761 = vcombine.low %v1640, %v1642
    %v1763 = vunpack.c.l.s4 1983009808
    %v1764 = vunpack.c.0.s8 %v1763
    %v1765 = vlaneseq
    %v1766 = vshrl.u32 %v1765, 7
    %v1767 = vsub.s32 %v1764, %v1766
    %v1768 = vrot.slane %v1760, %v1767
    %v1770 = vunpack.c.l.s4 1983009808
    %v1771 = vunpack.c.0.s8 %v1770
    %v1772 = vlaneseq
    %v1773 = vshrl.u32 %v1772, 7
    %v1774 = vsub.s32 %v1771, %v1773
    %v1775 = vrot.slane %v1761, %v1774
    %v1776 = vcombine.low %v1768, %v1775
    %v1777 = vsel %vm1679, %v1776, 0
    %v1780 = vsel %vm1682, %v1645, 0
    %1782 = vmatprep.subr.mxu0 0.0
    %1783 = vmatpush1.msra.mxu0 0.0
    %1784 = vmatprep.subr.mxu0 0.0
    %1785 = vmatpush1.msra.mxu0 0.0
    %1786 = vmatprep.subr.mxu0 0.0
    %1787 = vmatpush1.msra.mxu0 0.0
    %1788 = vmatprep.subr.mxu0 0.0
    %1789 = vmatpush1.msra.mxu0 0.0
    %1790 = vmatprep.subr.mxu0 0.0
    %1791 = vmatpush1.msra.mxu0 0.0
    %1792 = vmatprep.subr.mxu0 0.0
    %1793 = vmatpush1.msra.mxu0 0.0
    %1794 = vmatprep.subr.mxu0 0.0
    %1795 = vmatpush1.msra.mxu0 0.0
    %1796 = vmatprep.subr.mxu0 0.0
    %1797 = vmatpush1.msra.mxu0 0.0
    %1798 = vmatprep.subr.mxu0 0.0
    %1799 = vmatpush1.msra.mxu0 0.0
    %1800 = vmatprep.subr.mxu0 0.0
    %1801 = vmatpush1.msra.mxu0 0.0
    %1802 = vmatprep.subr.mxu0 0.0
    %1803 = vmatpush1.msra.mxu0 0.0
    %1804 = vmatprep.subr.mxu0 0.0
    %1805 = vmatpush1.msra.mxu0 0.0
    %1806 = vmatprep.subr.mxu0 0.0
    %1807 = vmatpush1.msra.mxu0 0.0
    %1808 = vmatprep.subr.mxu0 0.0
    %1809 = vmatpush1.msra.mxu0 %v1780
    %1810 = vmatprep.subr.mxu0 0.0
    %1811 = vmatpush1.msra.mxu0 %v1644
    %1812 = vmatprep.subr.mxu0 0.0
    %1813 = vmatpush1.msra.mxu0 %v1643
    %1814 = vmatprep.subr.mxu0 0.0
    %1815 = vmatpush2.msra.mxu0 0.0
    %1816 = vmatprep.subr.mxu0 0.0
    %1817 = vmatpush2.msra.mxu0 0.0
    %1818 = vmatprep.subr.mxu0 0.0
    %1819 = vmatpush2.msra.mxu0 0.0
    %1820 = vmatprep.subr.mxu0 0.0
    %1821 = vmatpush2.msra.mxu0 0.0
    %1822 = vmatprep.subr.mxu0 0.0
    %1823 = vmatpush2.msra.mxu0 0.0
    %1824 = vmatprep.subr.mxu0 0.0
    %1825 = vmatpush2.msra.mxu0 0.0
    %1826 = vmatprep.subr.mxu0 0.0
    %1827 = vmatpush2.msra.mxu0 0.0
    %1828 = vmatprep.subr.mxu0 0.0
    %1829 = vmatpush2.msra.mxu0 0.0
    %1830 = vmatprep.subr.mxu0 0.0
    %1831 = vmatpush2.msra.mxu0 0.0
    %1832 = vmatprep.subr.mxu0 0.0
    %1833 = vmatpush2.msra.mxu0 0.0
    %1834 = vmatprep.subr.mxu0 0.0
    %1835 = vmatpush2.msra.mxu0 0.0
    %1836 = vmatprep.subr.mxu0 0.0
    %1837 = vmatpush2.msra.mxu0 0.0
    %1838 = vmatprep.subr.mxu0 0.0
    %1839 = vmatpush2.msra.mxu0 0.0
    %1840 = vmatprep.subr.mxu0 0.0
    %1841 = vmatpush2.msra.mxu0 0.0
    %1842 = vmatprep.subr.mxu0 0.0
    %1843 = vmatpush2.msra.mxu0 0.0
    %1844 = vmatprep.subr.mxu0 0.0
    %1845 = vmatpush2.msra.mxu0 0.0
    %1846 = vmatprep.mubr.f32.mxu0 0.0
    %1847 = vmatmul.mubr.f32.gmra.mxu0 %v1777
    %v1848 = vpop.f32.mrf.mxu0
    %v1849 = vadd.f32 %v1753, %v1848
    %v1850 = vpop.f32.mrf.mxu0
    %1851 = vdwg.mxu0
    %s1852 = scalar_lea.vmem [#allocation3], 2
    %v1853 = vld [vmem:[%s1852] ss:$2 sm:$0x3]
    %s1854 = scalar_lea.vmem [#allocation3], 18
    %v1855 = vld [vmem:[%s1854] ss:$2 sm:$0x3]
    %s1856 = scalar_lea.vmem [#allocation3], 50
    %v1857 = vld [vmem:[%s1856] ss:$2 sm:$0x3]
    %s1858 = scalar_lea.vmem [#allocation3], 66
    %v1859 = vld [vmem:[%s1858] ss:$2 sm:$0x3]
    %s1860 = scalar_lea.vmem %s5, 48
    %v1861 = vld [vmem:[%s1860] sm:$0xff]
    %v1862 = vld [vmem:[%s1860 + $0x8] sm:$0xff]
    %v1863 = vld [vmem:[%s1860 + $0x10] sm:$0xf]
    %v1868 = vcombine.low %v1853, %v1855
    %v1869 = vcombine.low %v1857, %v1859
    %v1871 = vunpack.c.l.s4 1983009808
    %v1872 = vunpack.c.0.s8 %v1871
    %v1873 = vlaneseq
    %v1874 = vshrl.u32 %v1873, 7
    %v1875 = vsub.s32 %v1872, %v1874
    %v1876 = vrot.slane %v1868, %v1875
    %v1878 = vunpack.c.l.s4 1983009808
    %v1879 = vunpack.c.0.s8 %v1878
    %v1880 = vlaneseq
    %v1881 = vshrl.u32 %v1880, 7
    %v1882 = vsub.s32 %v1879, %v1881
    %v1883 = vrot.slane %v1869, %v1882
    %v1884 = vcombine.low %v1876, %v1883
    %v1885 = vsel %vm1679, %v1884, 0
    %v1888 = vsel %vm1682, %v1863, 0
    %1890 = vmatprep.subr.mxu0 0.0
    %1891 = vmatpush1.msra.mxu0 0.0
    %1892 = vmatprep.subr.mxu0 0.0
    %1893 = vmatpush1.msra.mxu0 0.0
    %1894 = vmatprep.subr.mxu0 0.0
    %1895 = vmatpush1.msra.mxu0 0.0
    %1896 = vmatprep.subr.mxu0 0.0
    %1897 = vmatpush1.msra.mxu0 0.0
    %1898 = vmatprep.subr.mxu0 0.0
    %1899 = vmatpush1.msra.mxu0 0.0
    %1900 = vmatprep.subr.mxu0 0.0
    %1901 = vmatpush1.msra.mxu0 0.0
    %1902 = vmatprep.subr.mxu0 0.0
    %1903 = vmatpush1.msra.mxu0 0.0
    %1904 = vmatprep.subr.mxu0 0.0
    %1905 = vmatpush1.msra.mxu0 0.0
    %1906 = vmatprep.subr.mxu0 0.0
    %1907 = vmatpush1.msra.mxu0 0.0
    %1908 = vmatprep.subr.mxu0 0.0
    %1909 = vmatpush1.msra.mxu0 0.0
    %1910 = vmatprep.subr.mxu0 0.0
    %1911 = vmatpush1.msra.mxu0 0.0
    %1912 = vmatprep.subr.mxu0 0.0
    %1913 = vmatpush1.msra.mxu0 0.0
    %1914 = vmatprep.subr.mxu0 0.0
    %1915 = vmatpush1.msra.mxu0 0.0
    %1916 = vmatprep.subr.mxu0 0.0
    %1917 = vmatpush1.msra.mxu0 %v1888
    %1918 = vmatprep.subr.mxu0 0.0
    %1919 = vmatpush1.msra.mxu0 %v1862
    %1920 = vmatprep.subr.mxu0 0.0
    %1921 = vmatpush1.msra.mxu0 %v1861
    %1922 = vmatprep.subr.mxu0 0.0
    %1923 = vmatpush2.msra.mxu0 0.0
    %1924 = vmatprep.subr.mxu0 0.0
    %1925 = vmatpush2.msra.mxu0 0.0
    %1926 = vmatprep.subr.mxu0 0.0
    %1927 = vmatpush2.msra.mxu0 0.0
    %1928 = vmatprep.subr.mxu0 0.0
    %1929 = vmatpush2.msra.mxu0 0.0
    %1930 = vmatprep.subr.mxu0 0.0
    %1931 = vmatpush2.msra.mxu0 0.0
    %1932 = vmatprep.subr.mxu0 0.0
    %1933 = vmatpush2.msra.mxu0 0.0
    %1934 = vmatprep.subr.mxu0 0.0
    %1935 = vmatpush2.msra.mxu0 0.0
    %1936 = vmatprep.subr.mxu0 0.0
    %1937 = vmatpush2.msra.mxu0 0.0
    %1938 = vmatprep.subr.mxu0 0.0
    %1939 = vmatpush2.msra.mxu0 0.0
    %1940 = vmatprep.subr.mxu0 0.0
    %1941 = vmatpush2.msra.mxu0 0.0
    %1942 = vmatprep.subr.mxu0 0.0
    %1943 = vmatpush2.msra.mxu0 0.0
    %1944 = vmatprep.subr.mxu0 0.0
    %1945 = vmatpush2.msra.mxu0 0.0
    %1946 = vmatprep.subr.mxu0 0.0
    %1947 = vmatpush2.msra.mxu0 0.0
    %1948 = vmatprep.subr.mxu0 0.0
    %1949 = vmatpush2.msra.mxu0 0.0
    %1950 = vmatprep.subr.mxu0 0.0
    %1951 = vmatpush2.msra.mxu0 0.0
    %1952 = vmatprep.subr.mxu0 0.0
    %1953 = vmatpush2.msra.mxu0 0.0
    %1954 = vmatprep.mubr.f32.mxu0 0.0
    %1955 = vmatmul.mubr.f32.gmra.mxu0 %v1885
    %v1956 = vpop.f32.mrf.mxu0
    %v1957 = vadd.f32 0.0, %v1956
    %v1958 = vpop.f32.mrf.mxu0
    %1959 = vdwg.mxu0
    %v1960 = vadd.f32 %v1849, %v1957
    %v1961 = vld [vmem:[%s1626] ss:$2 sm:$0x3]
    %s1962 = scalar_lea.vmem %s1626, 16 [#allocation3]
    %v1963 = vld [vmem:[%s1962] ss:$2 sm:$0x3]
    %s1964 = scalar_lea.vmem %s1626, 48 [#allocation3]
    %v1965 = vld [vmem:[%s1964] ss:$2 sm:$0x3]
    %s1966 = scalar_lea.vmem %s1626, 64 [#allocation3]
    %v1967 = vld [vmem:[%s1966] ss:$2 sm:$0x3]
    %s1968 = scalar_lea.vmem %s5, 72
    %v1969 = vld [vmem:[%s1968] sm:$0xff]
    %v1970 = vld [vmem:[%s1968 + $0x8] sm:$0xff]
    %v1971 = vld [vmem:[%s1968 + $0x10] sm:$0xf]
    %v1976 = vcombine.low %v1961, %v1963
    %v1977 = vcombine.low %v1965, %v1967
    %v1979 = vunpack.c.l.s4 1983009808
    %v1980 = vunpack.c.0.s8 %v1979
    %v1981 = vlaneseq
    %v1982 = vshrl.u32 %v1981, 7
    %v1983 = vsub.s32 %v1980, %v1982
    %v1984 = vrot.slane %v1976, %v1983
    %v1986 = vunpack.c.l.s4 1983009808
    %v1987 = vunpack.c.0.s8 %v1986
    %v1988 = vlaneseq
    %v1989 = vshrl.u32 %v1988, 7
    %v1990 = vsub.s32 %v1987, %v1989
    %v1991 = vrot.slane %v1977, %v1990
    %v1992 = vcombine.low %v1984, %v1991
    %v1993 = vsel %vm1679, %v1992, 0
    %v1996 = vsel %vm1682, %v1971, 0
    %1998 = vmatprep.subr.mxu0 0.0
    %1999 = vmatpush1.msra.mxu0 0.0
    %2000 = vmatprep.subr.mxu0 0.0
    %2001 = vmatpush1.msra.mxu0 0.0
    %2002 = vmatprep.subr.mxu0 0.0
    %2003 = vmatpush1.msra.mxu0 0.0
    %2004 = vmatprep.subr.mxu0 0.0
    %2005 = vmatpush1.msra.mxu0 0.0
    %2006 = vmatprep.subr.mxu0 0.0
    %2007 = vmatpush1.msra.mxu0 0.0
    %2008 = vmatprep.subr.mxu0 0.0
    %2009 = vmatpush1.msra.mxu0 0.0
    %2010 = vmatprep.subr.mxu0 0.0
    %2011 = vmatpush1.msra.mxu0 0.0
    %2012 = vmatprep.subr.mxu0 0.0
    %2013 = vmatpush1.msra.mxu0 0.0
    %2014 = vmatprep.subr.mxu0 0.0
    %2015 = vmatpush1.msra.mxu0 0.0
    %2016 = vmatprep.subr.mxu0 0.0
    %2017 = vmatpush1.msra.mxu0 0.0
    %2018 = vmatprep.subr.mxu0 0.0
    %2019 = vmatpush1.msra.mxu0 0.0
    %2020 = vmatprep.subr.mxu0 0.0
    %2021 = vmatpush1.msra.mxu0 0.0
    %2022 = vmatprep.subr.mxu0 0.0
    %2023 = vmatpush1.msra.mxu0 0.0
    %2024 = vmatprep.subr.mxu0 0.0
    %2025 = vmatpush1.msra.mxu0 %v1996
    %2026 = vmatprep.subr.mxu0 0.0
    %2027 = vmatpush1.msra.mxu0 %v1970
    %2028 = vmatprep.subr.mxu0 0.0
    %2029 = vmatpush1.msra.mxu0 %v1969
    %2030 = vmatprep.subr.mxu0 0.0
    %2031 = vmatpush2.msra.mxu0 0.0
    %2032 = vmatprep.subr.mxu0 0.0
    %2033 = vmatpush2.msra.mxu0 0.0
    %2034 = vmatprep.subr.mxu0 0.0
    %2035 = vmatpush2.msra.mxu0 0.0
    %2036 = vmatprep.subr.mxu0 0.0
    %2037 = vmatpush2.msra.mxu0 0.0
    %2038 = vmatprep.subr.mxu0 0.0
    %2039 = vmatpush2.msra.mxu0 0.0
    %2040 = vmatprep.subr.mxu0 0.0
    %2041 = vmatpush2.msra.mxu0 0.0
    %2042 = vmatprep.subr.mxu0 0.0
    %2043 = vmatpush2.msra.mxu0 0.0
    %2044 = vmatprep.subr.mxu0 0.0
    %2045 = vmatpush2.msra.mxu0 0.0
    %2046 = vmatprep.subr.mxu0 0.0
    %2047 = vmatpush2.msra.mxu0 0.0
    %2048 = vmatprep.subr.mxu0 0.0
    %2049 = vmatpush2.msra.mxu0 0.0
    %2050 = vmatprep.subr.mxu0 0.0
    %2051 = vmatpush2.msra.mxu0 0.0
    %2052 = vmatprep.subr.mxu0 0.0
    %2053 = vmatpush2.msra.mxu0 0.0
    %2054 = vmatprep.subr.mxu0 0.0
    %2055 = vmatpush2.msra.mxu0 0.0
    %2056 = vmatprep.subr.mxu0 0.0
    %2057 = vmatpush2.msra.mxu0 0.0
    %2058 = vmatprep.subr.mxu0 0.0
    %2059 = vmatpush2.msra.mxu0 0.0
    %2060 = vmatprep.subr.mxu0 0.0
    %2061 = vmatpush2.msra.mxu0 0.0
    %2062 = vmatprep.mubr.f32.mxu0 0.0
    %2063 = vmatmul.mubr.f32.gmra.mxu0 %v1993
    %v2064 = vpop.f32.mrf.mxu0
    %v2065 = vadd.f32 0.0, %v2064
    %v2066 = vpop.f32.mrf.mxu0
    %2067 = vdwg.mxu0
    %v2068 = vadd.f32 %v1960, %v2065
    %s2069 = scalar_lea.vmem %s1626, 1 [#allocation3]
    %v2070 = vld [vmem:[%s2069] ss:$2 sm:$0x3]
    %s2071 = scalar_lea.vmem %s1626, 17 [#allocation3]
    %v2072 = vld [vmem:[%s2071] ss:$2 sm:$0x3]
    %s2073 = scalar_lea.vmem %s1626, 49 [#allocation3]
    %v2074 = vld [vmem:[%s2073] ss:$2 sm:$0x3]
    %s2075 = scalar_lea.vmem %s1626, 65 [#allocation3]
    %v2076 = vld [vmem:[%s2075] ss:$2 sm:$0x3]
    %s2077 = scalar_lea.vmem %s5, 96
    %v2078 = vld [vmem:[%s2077] sm:$0xff]
    %v2079 = vld [vmem:[%s2077 + $0x8] sm:$0xff]
    %v2080 = vld [vmem:[%s2077 + $0x10] sm:$0xf]
    %v2085 = vcombine.low %v2070, %v2072
    %v2086 = vcombine.low %v2074, %v2076
    %v2088 = vunpack.c.l.s4 1983009808
    %v2089 = vunpack.c.0.s8 %v2088
    %v2090 = vlaneseq
    %v2091 = vshrl.u32 %v2090, 7
    %v2092 = vsub.s32 %v2089, %v2091
    %v2093 = vrot.slane %v2085, %v2092
    %v2095 = vunpack.c.l.s4 1983009808
    %v2096 = vunpack.c.0.s8 %v2095
    %v2097 = vlaneseq
    %v2098 = vshrl.u32 %v2097, 7
    %v2099 = vsub.s32 %v2096, %v2098
    %v2100 = vrot.slane %v2086, %v2099
    %v2101 = vcombine.low %v2093, %v2100
    %v2102 = vsel %vm1679, %v2101, 0
    %v2105 = vsel %vm1682, %v2080, 0
    %2107 = vmatprep.subr.mxu0 0.0
    %2108 = vmatpush1.msra.mxu0 0.0
    %2109 = vmatprep.subr.mxu0 0.0
    %2110 = vmatpush1.msra.mxu0 0.0
    %2111 = vmatprep.subr.mxu0 0.0
    %2112 = vmatpush1.msra.mxu0 0.0
    %2113 = vmatprep.subr.mxu0 0.0
    %2114 = vmatpush1.msra.mxu0 0.0
    %2115 = vmatprep.subr.mxu0 0.0
    %2116 = vmatpush1.msra.mxu0 0.0
    %2117 = vmatprep.subr.mxu0 0.0
    %2118 = vmatpush1.msra.mxu0 0.0
    %2119 = vmatprep.subr.mxu0 0.0
    %2120 = vmatpush1.msra.mxu0 0.0
    %2121 = vmatprep.subr.mxu0 0.0
    %2122 = vmatpush1.msra.mxu0 0.0
    %2123 = vmatprep.subr.mxu0 0.0
    %2124 = vmatpush1.msra.mxu0 0.0
    %2125 = vmatprep.subr.mxu0 0.0
    %2126 = vmatpush1.msra.mxu0 0.0
    %2127 = vmatprep.subr.mxu0 0.0
    %2128 = vmatpush1.msra.mxu0 0.0
    %2129 = vmatprep.subr.mxu0 0.0
    %2130 = vmatpush1.msra.mxu0 0.0
    %2131 = vmatprep.subr.mxu0 0.0
    %2132 = vmatpush1.msra.mxu0 0.0
    %2133 = vmatprep.subr.mxu0 0.0
    %2134 = vmatpush1.msra.mxu0 %v2105
    %2135 = vmatprep.subr.mxu0 0.0
    %2136 = vmatpush1.msra.mxu0 %v2079
    %2137 = vmatprep.subr.mxu0 0.0
    %2138 = vmatpush1.msra.mxu0 %v2078
    %2139 = vmatprep.subr.mxu0 0.0
    %2140 = vmatpush2.msra.mxu0 0.0
    %2141 = vmatprep.subr.mxu0 0.0
    %2142 = vmatpush2.msra.mxu0 0.0
    %2143 = vmatprep.subr.mxu0 0.0
    %2144 = vmatpush2.msra.mxu0 0.0
    %2145 = vmatprep.subr.mxu0 0.0
    %2146 = vmatpush2.msra.mxu0 0.0
    %2147 = vmatprep.subr.mxu0 0.0
    %2148 = vmatpush2.msra.mxu0 0.0
    %2149 = vmatprep.subr.mxu0 0.0
    %2150 = vmatpush2.msra.mxu0 0.0
    %2151 = vmatprep.subr.mxu0 0.0
    %2152 = vmatpush2.msra.mxu0 0.0
    %2153 = vmatprep.subr.mxu0 0.0
    %2154 = vmatpush2.msra.mxu0 0.0
    %2155 = vmatprep.subr.mxu0 0.0
    %2156 = vmatpush2.msra.mxu0 0.0
    %2157 = vmatprep.subr.mxu0 0.0
    %2158 = vmatpush2.msra.mxu0 0.0
    %2159 = vmatprep.subr.mxu0 0.0
    %2160 = vmatpush2.msra.mxu0 0.0
    %2161 = vmatprep.subr.mxu0 0.0
    %2162 = vmatpush2.msra.mxu0 0.0
    %2163 = vmatprep.subr.mxu0 0.0
    %2164 = vmatpush2.msra.mxu0 0.0
    %2165 = vmatprep.subr.mxu0 0.0
    %2166 = vmatpush2.msra.mxu0 0.0
    %2167 = vmatprep.subr.mxu0 0.0
    %2168 = vmatpush2.msra.mxu0 0.0
    %2169 = vmatprep.subr.mxu0 0.0
    %2170 = vmatpush2.msra.mxu0 0.0
    %2171 = vmatprep.mubr.f32.mxu0 0.0
    %2172 = vmatmul.mubr.f32.gmra.mxu0 %v2102
    %v2173 = vpop.f32.mrf.mxu0
    %v2174 = vadd.f32 0.0, %v2173
    %v2175 = vpop.f32.mrf.mxu0
    %2176 = vdwg.mxu0
    %v2177 = vadd.f32 %v2068, %v2174
    %s2178 = scalar_lea.vmem %s1626, 2 [#allocation3]
    %v2179 = vld [vmem:[%s2178] ss:$2 sm:$0x3]
    %s2180 = scalar_lea.vmem %s1626, 18 [#allocation3]
    %v2181 = vld [vmem:[%s2180] ss:$2 sm:$0x3]
    %s2182 = scalar_lea.vmem %s1626, 50 [#allocation3]
    %v2183 = vld [vmem:[%s2182] ss:$2 sm:$0x3]
    %s2184 = scalar_lea.vmem %s1626, 66 [#allocation3]
    %v2185 = vld [vmem:[%s2184] ss:$2 sm:$0x3]
    %s2186 = scalar_lea.vmem %s5, 120
    %v2187 = vld [vmem:[%s2186] sm:$0xff]
    %v2188 = vld [vmem:[%s2186 + $0x8] sm:$0xff]
    %v2189 = vld [vmem:[%s2186 + $0x10] sm:$0xf]
    %v2194 = vcombine.low %v2179, %v2181
    %v2195 = vcombine.low %v2183, %v2185
    %v2197 = vunpack.c.l.s4 1983009808
    %v2198 = vunpack.c.0.s8 %v2197
    %v2199 = vlaneseq
    %v2200 = vshrl.u32 %v2199, 7
    %v2201 = vsub.s32 %v2198, %v2200
    %v2202 = vrot.slane %v2194, %v2201
    %v2204 = vunpack.c.l.s4 1983009808
    %v2205 = vunpack.c.0.s8 %v2204
    %v2206 = vlaneseq
    %v2207 = vshrl.u32 %v2206, 7
    %v2208 = vsub.s32 %v2205, %v2207
    %v2209 = vrot.slane %v2195, %v2208
    %v2210 = vcombine.low %v2202, %v2209
    %v2211 = vsel %vm1679, %v2210, 0
    %v2214 = vsel %vm1682, %v2189, 0
    %2216 = vmatprep.subr.mxu0 0.0
    %2217 = vmatpush1.msra.mxu0 0.0
    %2218 = vmatprep.subr.mxu0 0.0
    %2219 = vmatpush1.msra.mxu0 0.0
    %2220 = vmatprep.subr.mxu0 0.0
    %2221 = vmatpush1.msra.mxu0 0.0
    %2222 = vmatprep.subr.mxu0 0.0
    %2223 = vmatpush1.msra.mxu0 0.0
    %2224 = vmatprep.subr.mxu0 0.0
    %2225 = vmatpush1.msra.mxu0 0.0
    %2226 = vmatprep.subr.mxu0 0.0
    %2227 = vmatpush1.msra.mxu0 0.0
    %2228 = vmatprep.subr.mxu0 0.0
    %2229 = vmatpush1.msra.mxu0 0.0
    %2230 = vmatprep.subr.mxu0 0.0
    %2231 = vmatpush1.msra.mxu0 0.0
    %2232 = vmatprep.subr.mxu0 0.0
    %2233 = vmatpush1.msra.mxu0 0.0
    %2234 = vmatprep.subr.mxu0 0.0
    %2235 = vmatpush1.msra.mxu0 0.0
    %2236 = vmatprep.subr.mxu0 0.0
    %2237 = vmatpush1.msra.mxu0 0.0
    %2238 = vmatprep.subr.mxu0 0.0
    %2239 = vmatpush1.msra.mxu0 0.0
    %2240 = vmatprep.subr.mxu0 0.0
    %2241 = vmatpush1.msra.mxu0 0.0
    %2242 = vmatprep.subr.mxu0 0.0
    %2243 = vmatpush1.msra.mxu0 %v2214
    %2244 = vmatprep.subr.mxu0 0.0
    %2245 = vmatpush1.msra.mxu0 %v2188
    %2246 = vmatprep.subr.mxu0 0.0
    %2247 = vmatpush1.msra.mxu0 %v2187
    %2248 = vmatprep.subr.mxu0 0.0
    %2249 = vmatpush2.msra.mxu0 0.0
    %2250 = vmatprep.subr.mxu0 0.0
    %2251 = vmatpush2.msra.mxu0 0.0
    %2252 = vmatprep.subr.mxu0 0.0
    %2253 = vmatpush2.msra.mxu0 0.0
    %2254 = vmatprep.subr.mxu0 0.0
    %2255 = vmatpush2.msra.mxu0 0.0
    %2256 = vmatprep.subr.mxu0 0.0
    %2257 = vmatpush2.msra.mxu0 0.0
    %2258 = vmatprep.subr.mxu0 0.0
    %2259 = vmatpush2.msra.mxu0 0.0
    %2260 = vmatprep.subr.mxu0 0.0
    %2261 = vmatpush2.msra.mxu0 0.0
    %2262 = vmatprep.subr.mxu0 0.0
    %2263 = vmatpush2.msra.mxu0 0.0
    %2264 = vmatprep.subr.mxu0 0.0
    %2265 = vmatpush2.msra.mxu0 0.0
    %2266 = vmatprep.subr.mxu0 0.0
    %2267 = vmatpush2.msra.mxu0 0.0
    %2268 = vmatprep.subr.mxu0 0.0
    %2269 = vmatpush2.msra.mxu0 0.0
    %2270 = vmatprep.subr.mxu0 0.0
    %2271 = vmatpush2.msra.mxu0 0.0
    %2272 = vmatprep.subr.mxu0 0.0
    %2273 = vmatpush2.msra.mxu0 0.0
    %2274 = vmatprep.subr.mxu0 0.0
    %2275 = vmatpush2.msra.mxu0 0.0
    %2276 = vmatprep.subr.mxu0 0.0
    %2277 = vmatpush2.msra.mxu0 0.0
    %2278 = vmatprep.subr.mxu0 0.0
    %2279 = vmatpush2.msra.mxu0 0.0
    %2280 = vmatprep.mubr.f32.mxu0 0.0
    %2281 = vmatmul.mubr.f32.gmra.mxu0 %v2211
    %v2282 = vpop.f32.mrf.mxu0
    %v2283 = vadd.f32 0.0, %v2282
    %v2284 = vpop.f32.mrf.mxu0
    %2285 = vdwg.mxu0
    %v2286 = vadd.f32 %v2177, %v2283
    %s2287 = scalar_lea.vmem [#allocation3], 16
    %v2288 = vld [vmem:[%s2287] ss:$2 sm:$0x3]
    %s2289 = scalar_lea.vmem %s2287, 16 [#allocation3]
    %v2290 = vld [vmem:[%s2289] ss:$2 sm:$0x3]
    %s2291 = scalar_lea.vmem %s2287, 48 [#allocation3]
    %v2292 = vld [vmem:[%s2291] ss:$2 sm:$0x3]
    %s2293 = scalar_lea.vmem %s2287, 64 [#allocation3]
    %v2294 = vld [vmem:[%s2293] ss:$2 sm:$0x3]
    %s2295 = scalar_lea.vmem %s5, 144
    %v2296 = vld [vmem:[%s2295] sm:$0xff]
    %v2297 = vld [vmem:[%s2295 + $0x8] sm:$0xff]
    %v2298 = vld [vmem:[%s2295 + $0x10] sm:$0xf]
    %v2303 = vcombine.low %v2288, %v2290
    %v2304 = vcombine.low %v2292, %v2294
    %v2306 = vunpack.c.l.s4 1983009808
    %v2307 = vunpack.c.0.s8 %v2306
    %v2308 = vlaneseq
    %v2309 = vshrl.u32 %v2308, 7
    %v2310 = vsub.s32 %v2307, %v2309
    %v2311 = vrot.slane %v2303, %v2310
    %v2313 = vunpack.c.l.s4 1983009808
    %v2314 = vunpack.c.0.s8 %v2313
    %v2315 = vlaneseq
    %v2316 = vshrl.u32 %v2315, 7
    %v2317 = vsub.s32 %v2314, %v2316
    %v2318 = vrot.slane %v2304, %v2317
    %v2319 = vcombine.low %v2311, %v2318
    %v2320 = vsel %vm1679, %v2319, 0
    %v2323 = vsel %vm1682, %v2298, 0
    %2325 = vmatprep.subr.mxu0 0.0
    %2326 = vmatpush1.msra.mxu0 0.0
    %2327 = vmatprep.subr.mxu0 0.0
    %2328 = vmatpush1.msra.mxu0 0.0
    %2329 = vmatprep.subr.mxu0 0.0
    %2330 = vmatpush1.msra.mxu0 0.0
    %2331 = vmatprep.subr.mxu0 0.0
    %2332 = vmatpush1.msra.mxu0 0.0
    %2333 = vmatprep.subr.mxu0 0.0
    %2334 = vmatpush1.msra.mxu0 0.0
    %2335 = vmatprep.subr.mxu0 0.0
    %2336 = vmatpush1.msra.mxu0 0.0
    %2337 = vmatprep.subr.mxu0 0.0
    %2338 = vmatpush1.msra.mxu0 0.0
    %2339 = vmatprep.subr.mxu0 0.0
    %2340 = vmatpush1.msra.mxu0 0.0
    %2341 = vmatprep.subr.mxu0 0.0
    %2342 = vmatpush1.msra.mxu0 0.0
    %2343 = vmatprep.subr.mxu0 0.0
    %2344 = vmatpush1.msra.mxu0 0.0
    %2345 = vmatprep.subr.mxu0 0.0
    %2346 = vmatpush1.msra.mxu0 0.0
    %2347 = vmatprep.subr.mxu0 0.0
    %2348 = vmatpush1.msra.mxu0 0.0
    %2349 = vmatprep.subr.mxu0 0.0
    %2350 = vmatpush1.msra.mxu0 0.0
    %2351 = vmatprep.subr.mxu0 0.0
    %2352 = vmatpush1.msra.mxu0 %v2323
    %2353 = vmatprep.subr.mxu0 0.0
    %2354 = vmatpush1.msra.mxu0 %v2297
    %2355 = vmatprep.subr.mxu0 0.0
    %2356 = vmatpush1.msra.mxu0 %v2296
    %2357 = vmatprep.subr.mxu0 0.0
    %2358 = vmatpush2.msra.mxu0 0.0
    %2359 = vmatprep.subr.mxu0 0.0
    %2360 = vmatpush2.msra.mxu0 0.0
    %2361 = vmatprep.subr.mxu0 0.0
    %2362 = vmatpush2.msra.mxu0 0.0
    %2363 = vmatprep.subr.mxu0 0.0
    %2364 = vmatpush2.msra.mxu0 0.0
    %2365 = vmatprep.subr.mxu0 0.0
    %2366 = vmatpush2.msra.mxu0 0.0
    %2367 = vmatprep.subr.mxu0 0.0
    %2368 = vmatpush2.msra.mxu0 0.0
    %2369 = vmatprep.subr.mxu0 0.0
    %2370 = vmatpush2.msra.mxu0 0.0
    %2371 = vmatprep.subr.mxu0 0.0
    %2372 = vmatpush2.msra.mxu0 0.0
    %2373 = vmatprep.subr.mxu0 0.0
    %2374 = vmatpush2.msra.mxu0 0.0
    %2375 = vmatprep.subr.mxu0 0.0
    %2376 = vmatpush2.msra.mxu0 0.0
    %2377 = vmatprep.subr.mxu0 0.0
    %2378 = vmatpush2.msra.mxu0 0.0
    %2379 = vmatprep.subr.mxu0 0.0
    %2380 = vmatpush2.msra.mxu0 0.0
    %2381 = vmatprep.subr.mxu0 0.0
    %2382 = vmatpush2.msra.mxu0 0.0
    %2383 = vmatprep.subr.mxu0 0.0
    %2384 = vmatpush2.msra.mxu0 0.0
    %2385 = vmatprep.subr.mxu0 0.0
    %2386 = vmatpush2.msra.mxu0 0.0
    %2387 = vmatprep.subr.mxu0 0.0
    %2388 = vmatpush2.msra.mxu0 0.0
    %2389 = vmatprep.mubr.f32.mxu0 0.0
    %2390 = vmatmul.mubr.f32.gmra.mxu0 %v2320
    %v2391 = vpop.f32.mrf.mxu0
    %v2392 = vadd.f32 0.0, %v2391
    %v2393 = vpop.f32.mrf.mxu0
    %2394 = vdwg.mxu0
    %v2395 = vadd.f32 %v2286, %v2392
    %s2396 = scalar_lea.vmem %s2287, 1 [#allocation3]
    %v2397 = vld [vmem:[%s2396] ss:$2 sm:$0x3]
    %s2398 = scalar_lea.vmem %s2287, 17 [#allocation3]
    %v2399 = vld [vmem:[%s2398] ss:$2 sm:$0x3]
    %s2400 = scalar_lea.vmem %s2287, 49 [#allocation3]
    %v2401 = vld [vmem:[%s2400] ss:$2 sm:$0x3]
    %s2402 = scalar_lea.vmem %s2287, 65 [#allocation3]
    %v2403 = vld [vmem:[%s2402] ss:$2 sm:$0x3]
    %s2404 = scalar_lea.vmem %s5, 168
    %v2405 = vld [vmem:[%s2404] sm:$0xff]
    %v2406 = vld [vmem:[%s2404 + $0x8] sm:$0xff]
    %v2407 = vld [vmem:[%s2404 + $0x10] sm:$0xf]
    %v2412 = vcombine.low %v2397, %v2399
    %v2413 = vcombine.low %v2401, %v2403
    %v2415 = vunpack.c.l.s4 1983009808
    %v2416 = vunpack.c.0.s8 %v2415
    %v2417 = vlaneseq
    %v2418 = vshrl.u32 %v2417, 7
    %v2419 = vsub.s32 %v2416, %v2418
    %v2420 = vrot.slane %v2412, %v2419
    %v2422 = vunpack.c.l.s4 1983009808
    %v2423 = vunpack.c.0.s8 %v2422
    %v2424 = vlaneseq
    %v2425 = vshrl.u32 %v2424, 7
    %v2426 = vsub.s32 %v2423, %v2425
    %v2427 = vrot.slane %v2413, %v2426
    %v2428 = vcombine.low %v2420, %v2427
    %v2429 = vsel %vm1679, %v2428, 0
    %v2432 = vsel %vm1682, %v2407, 0
    %2434 = vmatprep.subr.mxu0 0.0
    %2435 = vmatpush1.msra.mxu0 0.0
    %2436 = vmatprep.subr.mxu0 0.0
    %2437 = vmatpush1.msra.mxu0 0.0
    %2438 = vmatprep.subr.mxu0 0.0
    %2439 = vmatpush1.msra.mxu0 0.0
    %2440 = vmatprep.subr.mxu0 0.0
    %2441 = vmatpush1.msra.mxu0 0.0
    %2442 = vmatprep.subr.mxu0 0.0
    %2443 = vmatpush1.msra.mxu0 0.0
    %2444 = vmatprep.subr.mxu0 0.0
    %2445 = vmatpush1.msra.mxu0 0.0
    %2446 = vmatprep.subr.mxu0 0.0
    %2447 = vmatpush1.msra.mxu0 0.0
    %2448 = vmatprep.subr.mxu0 0.0
    %2449 = vmatpush1.msra.mxu0 0.0
    %2450 = vmatprep.subr.mxu0 0.0
    %2451 = vmatpush1.msra.mxu0 0.0
    %2452 = vmatprep.subr.mxu0 0.0
    %2453 = vmatpush1.msra.mxu0 0.0
    %2454 = vmatprep.subr.mxu0 0.0
    %2455 = vmatpush1.msra.mxu0 0.0
    %2456 = vmatprep.subr.mxu0 0.0
    %2457 = vmatpush1.msra.mxu0 0.0
    %2458 = vmatprep.subr.mxu0 0.0
    %2459 = vmatpush1.msra.mxu0 0.0
    %2460 = vmatprep.subr.mxu0 0.0
    %2461 = vmatpush1.msra.mxu0 %v2432
    %2462 = vmatprep.subr.mxu0 0.0
    %2463 = vmatpush1.msra.mxu0 %v2406
    %2464 = vmatprep.subr.mxu0 0.0
    %2465 = vmatpush1.msra.mxu0 %v2405
    %2466 = vmatprep.subr.mxu0 0.0
    %2467 = vmatpush2.msra.mxu0 0.0
    %2468 = vmatprep.subr.mxu0 0.0
    %2469 = vmatpush2.msra.mxu0 0.0
    %2470 = vmatprep.subr.mxu0 0.0
    %2471 = vmatpush2.msra.mxu0 0.0
    %2472 = vmatprep.subr.mxu0 0.0
    %2473 = vmatpush2.msra.mxu0 0.0
    %2474 = vmatprep.subr.mxu0 0.0
    %2475 = vmatpush2.msra.mxu0 0.0
    %2476 = vmatprep.subr.mxu0 0.0
    %2477 = vmatpush2.msra.mxu0 0.0
    %2478 = vmatprep.subr.mxu0 0.0
    %2479 = vmatpush2.msra.mxu0 0.0
    %2480 = vmatprep.subr.mxu0 0.0
    %2481 = vmatpush2.msra.mxu0 0.0
    %2482 = vmatprep.subr.mxu0 0.0
    %2483 = vmatpush2.msra.mxu0 0.0
    %2484 = vmatprep.subr.mxu0 0.0
    %2485 = vmatpush2.msra.mxu0 0.0
    %2486 = vmatprep.subr.mxu0 0.0
    %2487 = vmatpush2.msra.mxu0 0.0
    %2488 = vmatprep.subr.mxu0 0.0
    %2489 = vmatpush2.msra.mxu0 0.0
    %2490 = vmatprep.subr.mxu0 0.0
    %2491 = vmatpush2.msra.mxu0 0.0
    %2492 = vmatprep.subr.mxu0 0.0
    %2493 = vmatpush2.msra.mxu0 0.0
    %2494 = vmatprep.subr.mxu0 0.0
    %2495 = vmatpush2.msra.mxu0 0.0
    %2496 = vmatprep.subr.mxu0 0.0
    %2497 = vmatpush2.msra.mxu0 0.0
    %2498 = vmatprep.mubr.f32.mxu0 0.0
    %2499 = vmatmul.mubr.f32.gmra.mxu0 %v2429
    %v2500 = vpop.f32.mrf.mxu0
    %v2501 = vadd.f32 0.0, %v2500
    %v2502 = vpop.f32.mrf.mxu0
    %2503 = vdwg.mxu0
    %v2504 = vadd.f32 %v2395, %v2501
    %s2505 = scalar_lea.vmem %s2287, 2 [#allocation3]
    %v2506 = vld [vmem:[%s2505] ss:$2 sm:$0x3]
    %s2507 = scalar_lea.vmem %s2287, 18 [#allocation3]
    %v2508 = vld [vmem:[%s2507] ss:$2 sm:$0x3]
    %s2509 = scalar_lea.vmem %s2287, 50 [#allocation3]
    %v2510 = vld [vmem:[%s2509] ss:$2 sm:$0x3]
    %s2511 = scalar_lea.vmem %s2287, 66 [#allocation3]
    %v2512 = vld [vmem:[%s2511] ss:$2 sm:$0x3]
    %s2513 = scalar_lea.vmem %s5, 192
    %v2514 = vld [vmem:[%s2513] sm:$0xff]
    %v2515 = vld [vmem:[%s2513 + $0x8] sm:$0xff]
    %v2516 = vld [vmem:[%s2513 + $0x10] sm:$0xf]
    %v2521 = vcombine.low %v2506, %v2508
    %v2522 = vcombine.low %v2510, %v2512
    %v2524 = vunpack.c.l.s4 1983009808
    %v2525 = vunpack.c.0.s8 %v2524
    %v2526 = vlaneseq
    %v2527 = vshrl.u32 %v2526, 7
    %v2528 = vsub.s32 %v2525, %v2527
    %v2529 = vrot.slane %v2521, %v2528
    %v2531 = vunpack.c.l.s4 1983009808
    %v2532 = vunpack.c.0.s8 %v2531
    %v2533 = vlaneseq
    %v2534 = vshrl.u32 %v2533, 7
    %v2535 = vsub.s32 %v2532, %v2534
    %v2536 = vrot.slane %v2522, %v2535
    %v2537 = vcombine.low %v2529, %v2536
    %v2538 = vsel %vm1679, %v2537, 0
    %v2541 = vsel %vm1682, %v2516, 0
    %2543 = vmatprep.subr.mxu0 0.0
    %2544 = vmatpush1.msra.mxu0 0.0
    %2545 = vmatprep.subr.mxu0 0.0
    %2546 = vmatpush1.msra.mxu0 0.0
    %2547 = vmatprep.subr.mxu0 0.0
    %2548 = vmatpush1.msra.mxu0 0.0
    %2549 = vmatprep.subr.mxu0 0.0
    %2550 = vmatpush1.msra.mxu0 0.0
    %2551 = vmatprep.subr.mxu0 0.0
    %2552 = vmatpush1.msra.mxu0 0.0
    %2553 = vmatprep.subr.mxu0 0.0
    %2554 = vmatpush1.msra.mxu0 0.0
    %2555 = vmatprep.subr.mxu0 0.0
    %2556 = vmatpush1.msra.mxu0 0.0
    %2557 = vmatprep.subr.mxu0 0.0
    %2558 = vmatpush1.msra.mxu0 0.0
    %2559 = vmatprep.subr.mxu0 0.0
    %2560 = vmatpush1.msra.mxu0 0.0
    %2561 = vmatprep.subr.mxu0 0.0
    %2562 = vmatpush1.msra.mxu0 0.0
    %2563 = vmatprep.subr.mxu0 0.0
    %2564 = vmatpush1.msra.mxu0 0.0
    %2565 = vmatprep.subr.mxu0 0.0
    %2566 = vmatpush1.msra.mxu0 0.0
    %2567 = vmatprep.subr.mxu0 0.0
    %2568 = vmatpush1.msra.mxu0 0.0
    %2569 = vmatprep.subr.mxu0 0.0
    %2570 = vmatpush1.msra.mxu0 %v2541
    %2571 = vmatprep.subr.mxu0 0.0
    %2572 = vmatpush1.msra.mxu0 %v2515
    %2573 = vmatprep.subr.mxu0 0.0
    %2574 = vmatpush1.msra.mxu0 %v2514
    %2575 = vmatprep.subr.mxu0 0.0
    %2576 = vmatpush2.msra.mxu0 0.0
    %2577 = vmatprep.subr.mxu0 0.0
    %2578 = vmatpush2.msra.mxu0 0.0
    %2579 = vmatprep.subr.mxu0 0.0
    %2580 = vmatpush2.msra.mxu0 0.0
    %2581 = vmatprep.subr.mxu0 0.0
    %2582 = vmatpush2.msra.mxu0 0.0
    %2583 = vmatprep.subr.mxu0 0.0
    %2584 = vmatpush2.msra.mxu0 0.0
    %2585 = vmatprep.subr.mxu0 0.0
    %2586 = vmatpush2.msra.mxu0 0.0
    %2587 = vmatprep.subr.mxu0 0.0
    %2588 = vmatpush2.msra.mxu0 0.0
    %2589 = vmatprep.subr.mxu0 0.0
    %2590 = vmatpush2.msra.mxu0 0.0
    %2591 = vmatprep.subr.mxu0 0.0
    %2592 = vmatpush2.msra.mxu0 0.0
    %2593 = vmatprep.subr.mxu0 0.0
    %2594 = vmatpush2.msra.mxu0 0.0
    %2595 = vmatprep.subr.mxu0 0.0
    %2596 = vmatpush2.msra.mxu0 0.0
    %2597 = vmatprep.subr.mxu0 0.0
    %2598 = vmatpush2.msra.mxu0 0.0
    %2599 = vmatprep.subr.mxu0 0.0
    %2600 = vmatpush2.msra.mxu0 0.0
    %2601 = vmatprep.subr.mxu0 0.0
    %2602 = vmatpush2.msra.mxu0 0.0
    %2603 = vmatprep.subr.mxu0 0.0
    %2604 = vmatpush2.msra.mxu0 0.0
    %2605 = vmatprep.subr.mxu0 0.0
    %2606 = vmatpush2.msra.mxu0 0.0
    %2607 = vmatprep.mubr.f32.mxu0 0.0
    %2608 = vmatmul.mubr.f32.gmra.mxu0 %v2538
    %v2609 = vpop.f32.mrf.mxu0
    %v2610 = vadd.f32 0.0, %v2609
    %v2611 = vpop.f32.mrf.mxu0
    %2612 = vdwg.mxu0
    %v2613 = vadd.f32 %v2504, %v2610
    %v2614 = vld [vmem:[%s6] sm:$0x1]
    %v2616 = vlaneseq
    %v2617 = vshrl.u32 %v2616, 7
    %v2618 = vsub.s32 0, %v2617
    %v2619 = vrot.slane %v2614, %v2618
    %v2621 = vadd.f32 %v2613, %v2619
    %vm2622 = vcmp.ge.f32.partialorder %v2621, 0.0
    %v2623 = vmul.f32 %v2621, 0.2
    %v2624 = vsel %vm2622, %v2621, %v2623
    %v2626 = vcombine.high %v2624, %v2624
    %v2628 = vunpack.c.l.s4 1983009808
    %v2629 = vunpack.c.0.s8 %v2628
    %v2630 = vlaneseq
    %v2631 = vshrl.u32 %v2630, 7
    %v2632 = vsub.s32 %v2629, %v2631
    %v2633 = vrot.slane %v2624, %v2632
    %v2635 = vunpack.c.l.s4 1983009808
    %v2636 = vunpack.c.0.s8 %v2635
    %v2637 = vlaneseq
    %v2638 = vshrl.u32 %v2637, 7
    %v2639 = vsub.s32 %v2636, %v2638
    %v2640 = vrot.slane %v2626, %v2639
    %v2641 = vcombine.high %v2633, %v2633
    %v2642 = vcombine.high %v2640, %v2640
    %vm2647 = vcmask 322560
    %2648 = vst.msk [vmem:[#allocation4] sm:$0xf] %vm2647, 0.0
    %2649 = vst.msk [vmem:[#allocation4 + $0x10] sm:$0xf] %vm2647, 0.0
    %s2650 = scalar_lea.vmem [#allocation4], 12
    %2651 = vst.msk [vmem:[%s2650] sm:$0xf] %vm2647, 0.0
    %2652 = vst.msk [vmem:[%s2650 + $0x10] sm:$0xf] %vm2647, 0.0
    %vm2653 = vcmask 319488
    %2654 = vst.msk [vmem:[#allocation4] sm:$0x1] %vm2653, 0.0
    %2655 = vst.msk [vmem:[#allocation4 + $0x4] sm:$0x1] %vm2653, 0.0
    %2656 = vst.msk [vmem:[#allocation4 + $0x8] sm:$0x1] %vm2653, 0.0
    %2657 = vst.msk [vmem:[#allocation4 + $0xc] sm:$0x1] %vm2653, 0.0
    %2658 = vst.msk [vmem:[#allocation4 + $0x10] sm:$0x1] %vm2653, 0.0
    %2659 = vst.msk [vmem:[#allocation4 + $0x14] sm:$0x1] %vm2653, 0.0
    %2660 = vst.msk [vmem:[#allocation4 + $0x18] sm:$0x1] %vm2653, 0.0
    %2661 = vst.msk [vmem:[#allocation4 + $0x1c] sm:$0x1] %vm2653, 0.0
    %2662 = vst.msk [vmem:[#allocation4 + $0x3] sm:$0x1] %vm2653, 0.0
    %2663 = vst.msk [vmem:[#allocation4 + $0x7] sm:$0x1] %vm2653, 0.0
    %2664 = vst.msk [vmem:[#allocation4 + $0xb] sm:$0x1] %vm2653, 0.0
    %2665 = vst.msk [vmem:[#allocation4 + $0xf] sm:$0x1] %vm2653, 0.0
    %2666 = vst.msk [vmem:[#allocation4 + $0x13] sm:$0x1] %vm2653, 0.0
    %2667 = vst.msk [vmem:[#allocation4 + $0x17] sm:$0x1] %vm2653, 0.0
    %2668 = vst.msk [vmem:[#allocation4 + $0x1b] sm:$0x1] %vm2653, 0.0
    %2669 = vst.msk [vmem:[#allocation4 + $0x1f] sm:$0x1] %vm2653, 0.0
    %s2670 = scalar_lea.vmem [#allocation4], 4
    %vm2671 = vcmask 320512
    %2672 = vst.msk [vmem:[%s2670 + $0x1] sm:$0x3] %vm2671, %v2633
    %2673 = vst.msk [vmem:[%s2670 + $0x5] sm:$0x3] %vm2671, %v2641
    %2674 = vst.msk [vmem:[%s2670 + $0x11] sm:$0x3] %vm2671, %v2640
    %2675 = vst.msk [vmem:[%s2670 + $0x15] sm:$0x3] %vm2671, %v2642
    %v2676 = vld [vmem:[#allocation4] ss:$2 sm:$0x1]
    %s2677 = scalar_lea.vmem [#allocation4], 16
    %v2678 = vld [vmem:[%s2677] ss:$2 sm:$0x1]
    %v2679 = vld [vmem:[%s7] sm:$0xff]
    %v2680 = vld [vmem:[%s7 + $0x8] sm:$0xff]
    %v2681 = vld [vmem:[%s7 + $0x10] sm:$0xff]
    %v2682 = vld [vmem:[%s7 + $0x18] sm:$0xff]
    %v2683 = vld [vmem:[%s7 + $0x20] sm:$0xff]
    %s2684 = scalar_lea.vmem [#allocation4], 1
    %v2685 = vld [vmem:[%s2684] ss:$2 sm:$0x1]
    %s2686 = scalar_lea.vmem [#allocation4], 17
    %v2687 = vld [vmem:[%s2686] ss:$2 sm:$0x1]
    %s2688 = scalar_lea.vmem %s7, 40
    %v2689 = vld [vmem:[%s2688] sm:$0xff]
    %v2690 = vld [vmem:[%s2688 + $0x8] sm:$0xff]
    %v2691 = vld [vmem:[%s2688 + $0x10] sm:$0xff]
    %v2692 = vld [vmem:[%s2688 + $0x18] sm:$0xff]
    %v2693 = vld [vmem:[%s2688 + $0x20] sm:$0xff]
    %v2696 = vrot.slane %v2687, 7
    %vm2697 = vcmask 1041409
    %v2698 = vsel %vm2697, %v2696, %v2685
    %vm2699 = vcmask 326656
    %v2700 = vsel %vm2699, %v2698, 0
    %2702 = vmatprep.subr.mxu0 0.0
    %2703 = vmatpush1.msra.mxu0 0.0
    %2704 = vmatprep.subr.mxu0 0.0
    %2705 = vmatpush1.msra.mxu0 0.0
    %2706 = vmatprep.subr.mxu0 0.0
    %2707 = vmatpush1.msra.mxu0 0.0
    %2708 = vmatprep.subr.mxu0 0.0
    %2709 = vmatpush1.msra.mxu0 0.0
    %2710 = vmatprep.subr.mxu0 0.0
    %2711 = vmatpush1.msra.mxu0 0.0
    %2712 = vmatprep.subr.mxu0 0.0
    %2713 = vmatpush1.msra.mxu0 0.0
    %2714 = vmatprep.subr.mxu0 0.0
    %2715 = vmatpush1.msra.mxu0 0.0
    %2716 = vmatprep.subr.mxu0 0.0
    %2717 = vmatpush1.msra.mxu0 0.0
    %2718 = vmatprep.subr.mxu0 0.0
    %2719 = vmatpush1.msra.mxu0 0.0
    %2720 = vmatprep.subr.mxu0 0.0
    %2721 = vmatpush1.msra.mxu0 0.0
    %2722 = vmatprep.subr.mxu0 0.0
    %2723 = vmatpush1.msra.mxu0 0.0
    %2724 = vmatprep.subr.mxu0 0.0
    %2725 = vmatpush1.msra.mxu0 %v2693
    %2726 = vmatprep.subr.mxu0 0.0
    %2727 = vmatpush1.msra.mxu0 %v2692
    %2728 = vmatprep.subr.mxu0 0.0
    %2729 = vmatpush1.msra.mxu0 %v2691
    %2730 = vmatprep.subr.mxu0 0.0
    %2731 = vmatpush1.msra.mxu0 %v2690
    %2732 = vmatprep.subr.mxu0 0.0
    %2733 = vmatpush1.msra.mxu0 %v2689
    %2734 = vmatprep.subr.mxu0 0.0
    %2735 = vmatpush2.msra.mxu0 0.0
    %2736 = vmatprep.subr.mxu0 0.0
    %2737 = vmatpush2.msra.mxu0 0.0
    %2738 = vmatprep.subr.mxu0 0.0
    %2739 = vmatpush2.msra.mxu0 0.0
    %2740 = vmatprep.subr.mxu0 0.0
    %2741 = vmatpush2.msra.mxu0 0.0
    %2742 = vmatprep.subr.mxu0 0.0
    %2743 = vmatpush2.msra.mxu0 0.0
    %2744 = vmatprep.subr.mxu0 0.0
    %2745 = vmatpush2.msra.mxu0 0.0
    %2746 = vmatprep.subr.mxu0 0.0
    %2747 = vmatpush2.msra.mxu0 0.0
    %2748 = vmatprep.subr.mxu0 0.0
    %2749 = vmatpush2.msra.mxu0 0.0
    %2750 = vmatprep.subr.mxu0 0.0
    %2751 = vmatpush2.msra.mxu0 0.0
    %2752 = vmatprep.subr.mxu0 0.0
    %2753 = vmatpush2.msra.mxu0 0.0
    %2754 = vmatprep.subr.mxu0 0.0
    %2755 = vmatpush2.msra.mxu0 0.0
    %2756 = vmatprep.subr.mxu0 0.0
    %2757 = vmatpush2.msra.mxu0 0.0
    %2758 = vmatprep.subr.mxu0 0.0
    %2759 = vmatpush2.msra.mxu0 0.0
    %2760 = vmatprep.subr.mxu0 0.0
    %2761 = vmatpush2.msra.mxu0 0.0
    %2762 = vmatprep.subr.mxu0 0.0
    %2763 = vmatpush2.msra.mxu0 0.0
    %2764 = vmatprep.subr.mxu0 0.0
    %2765 = vmatpush2.msra.mxu0 0.0
    %2766 = vmatprep.mubr.f32.mxu0 0.0
    %2767 = vmatmul.mubr.f32.gmra.mxu0 %v2700
    %v2768 = vpop.f32.mrf.mxu0
    %v2769 = vadd.f32 0.0, %v2768
    %v2770 = vpop.f32.mrf.mxu0
    %2771 = vdwg.mxu0
    %v2774 = vrot.slane %v2678, 7
    %v2775 = vsel %vm2697, %v2774, %v2676
    %v2776 = vsel %vm2699, %v2775, 0
    %2778 = vmatprep.subr.mxu0 0.0
    %2779 = vmatpush1.msra.mxu0 0.0
    %2780 = vmatprep.subr.mxu0 0.0
    %2781 = vmatpush1.msra.mxu0 0.0
    %2782 = vmatprep.subr.mxu0 0.0
    %2783 = vmatpush1.msra.mxu0 0.0
    %2784 = vmatprep.subr.mxu0 0.0
    %2785 = vmatpush1.msra.mxu0 0.0
    %2786 = vmatprep.subr.mxu0 0.0
    %2787 = vmatpush1.msra.mxu0 0.0
    %2788 = vmatprep.subr.mxu0 0.0
    %2789 = vmatpush1.msra.mxu0 0.0
    %2790 = vmatprep.subr.mxu0 0.0
    %2791 = vmatpush1.msra.mxu0 0.0
    %2792 = vmatprep.subr.mxu0 0.0
    %2793 = vmatpush1.msra.mxu0 0.0
    %2794 = vmatprep.subr.mxu0 0.0
    %2795 = vmatpush1.msra.mxu0 0.0
    %2796 = vmatprep.subr.mxu0 0.0
    %2797 = vmatpush1.msra.mxu0 0.0
    %2798 = vmatprep.subr.mxu0 0.0
    %2799 = vmatpush1.msra.mxu0 0.0
    %2800 = vmatprep.subr.mxu0 0.0
    %2801 = vmatpush1.msra.mxu0 %v2683
    %2802 = vmatprep.subr.mxu0 0.0
    %2803 = vmatpush1.msra.mxu0 %v2682
    %2804 = vmatprep.subr.mxu0 0.0
    %2805 = vmatpush1.msra.mxu0 %v2681
    %2806 = vmatprep.subr.mxu0 0.0
    %2807 = vmatpush1.msra.mxu0 %v2680
    %2808 = vmatprep.subr.mxu0 0.0
    %2809 = vmatpush1.msra.mxu0 %v2679
    %2810 = vmatprep.subr.mxu0 0.0
    %2811 = vmatpush2.msra.mxu0 0.0
    %2812 = vmatprep.subr.mxu0 0.0
    %2813 = vmatpush2.msra.mxu0 0.0
    %2814 = vmatprep.subr.mxu0 0.0
    %2815 = vmatpush2.msra.mxu0 0.0
    %2816 = vmatprep.subr.mxu0 0.0
    %2817 = vmatpush2.msra.mxu0 0.0
    %2818 = vmatprep.subr.mxu0 0.0
    %2819 = vmatpush2.msra.mxu0 0.0
    %2820 = vmatprep.subr.mxu0 0.0
    %2821 = vmatpush2.msra.mxu0 0.0
    %2822 = vmatprep.subr.mxu0 0.0
    %2823 = vmatpush2.msra.mxu0 0.0
    %2824 = vmatprep.subr.mxu0 0.0
    %2825 = vmatpush2.msra.mxu0 0.0
    %2826 = vmatprep.subr.mxu0 0.0
    %2827 = vmatpush2.msra.mxu0 0.0
    %2828 = vmatprep.subr.mxu0 0.0
    %2829 = vmatpush2.msra.mxu0 0.0
    %2830 = vmatprep.subr.mxu0 0.0
    %2831 = vmatpush2.msra.mxu0 0.0
    %2832 = vmatprep.subr.mxu0 0.0
    %2833 = vmatpush2.msra.mxu0 0.0
    %2834 = vmatprep.subr.mxu0 0.0
    %2835 = vmatpush2.msra.mxu0 0.0
    %2836 = vmatprep.subr.mxu0 0.0
    %2837 = vmatpush2.msra.mxu0 0.0
    %2838 = vmatprep.subr.mxu0 0.0
    %2839 = vmatpush2.msra.mxu0 0.0
    %2840 = vmatprep.subr.mxu0 0.0
    %2841 = vmatpush2.msra.mxu0 0.0
    %2842 = vmatprep.mubr.f32.mxu0 0.0
    %2843 = vmatmul.mubr.f32.gmra.mxu0 %v2776
    %v2844 = vpop.f32.mrf.mxu0
    %v2845 = vadd.f32 %v2769, %v2844
    %v2846 = vpop.f32.mrf.mxu0
    %2847 = vdwg.mxu0
    %s2848 = scalar_lea.vmem [#allocation4], 2
    %v2849 = vld [vmem:[%s2848] ss:$2 sm:$0x1]
    %s2850 = scalar_lea.vmem [#allocation4], 18
    %v2851 = vld [vmem:[%s2850] ss:$2 sm:$0x1]
    %s2852 = scalar_lea.vmem %s7, 80
    %v2853 = vld [vmem:[%s2852] sm:$0xff]
    %v2854 = vld [vmem:[%s2852 + $0x8] sm:$0xff]
    %v2855 = vld [vmem:[%s2852 + $0x10] sm:$0xff]
    %v2856 = vld [vmem:[%s2852 + $0x18] sm:$0xff]
    %v2857 = vld [vmem:[%s2852 + $0x20] sm:$0xff]
    %v2860 = vrot.slane %v2851, 7
    %v2861 = vsel %vm2697, %v2860, %v2849
    %v2862 = vsel %vm2699, %v2861, 0
    %2864 = vmatprep.subr.mxu0 0.0
    %2865 = vmatpush1.msra.mxu0 0.0
    %2866 = vmatprep.subr.mxu0 0.0
    %2867 = vmatpush1.msra.mxu0 0.0
    %2868 = vmatprep.subr.mxu0 0.0
    %2869 = vmatpush1.msra.mxu0 0.0
    %2870 = vmatprep.subr.mxu0 0.0
    %2871 = vmatpush1.msra.mxu0 0.0
    %2872 = vmatprep.subr.mxu0 0.0
    %2873 = vmatpush1.msra.mxu0 0.0
    %2874 = vmatprep.subr.mxu0 0.0
    %2875 = vmatpush1.msra.mxu0 0.0
    %2876 = vmatprep.subr.mxu0 0.0
    %2877 = vmatpush1.msra.mxu0 0.0
    %2878 = vmatprep.subr.mxu0 0.0
    %2879 = vmatpush1.msra.mxu0 0.0
    %2880 = vmatprep.subr.mxu0 0.0
    %2881 = vmatpush1.msra.mxu0 0.0
    %2882 = vmatprep.subr.mxu0 0.0
    %2883 = vmatpush1.msra.mxu0 0.0
    %2884 = vmatprep.subr.mxu0 0.0
    %2885 = vmatpush1.msra.mxu0 0.0
    %2886 = vmatprep.subr.mxu0 0.0
    %2887 = vmatpush1.msra.mxu0 %v2857
    %2888 = vmatprep.subr.mxu0 0.0
    %2889 = vmatpush1.msra.mxu0 %v2856
    %2890 = vmatprep.subr.mxu0 0.0
    %2891 = vmatpush1.msra.mxu0 %v2855
    %2892 = vmatprep.subr.mxu0 0.0
    %2893 = vmatpush1.msra.mxu0 %v2854
    %2894 = vmatprep.subr.mxu0 0.0
    %2895 = vmatpush1.msra.mxu0 %v2853
    %2896 = vmatprep.subr.mxu0 0.0
    %2897 = vmatpush2.msra.mxu0 0.0
    %2898 = vmatprep.subr.mxu0 0.0
    %2899 = vmatpush2.msra.mxu0 0.0
    %2900 = vmatprep.subr.mxu0 0.0
    %2901 = vmatpush2.msra.mxu0 0.0
    %2902 = vmatprep.subr.mxu0 0.0
    %2903 = vmatpush2.msra.mxu0 0.0
    %2904 = vmatprep.subr.mxu0 0.0
    %2905 = vmatpush2.msra.mxu0 0.0
    %2906 = vmatprep.subr.mxu0 0.0
    %2907 = vmatpush2.msra.mxu0 0.0
    %2908 = vmatprep.subr.mxu0 0.0
    %2909 = vmatpush2.msra.mxu0 0.0
    %2910 = vmatprep.subr.mxu0 0.0
    %2911 = vmatpush2.msra.mxu0 0.0
    %2912 = vmatprep.subr.mxu0 0.0
    %2913 = vmatpush2.msra.mxu0 0.0
    %2914 = vmatprep.subr.mxu0 0.0
    %2915 = vmatpush2.msra.mxu0 0.0
    %2916 = vmatprep.subr.mxu0 0.0
    %2917 = vmatpush2.msra.mxu0 0.0
    %2918 = vmatprep.subr.mxu0 0.0
    %2919 = vmatpush2.msra.mxu0 0.0
    %2920 = vmatprep.subr.mxu0 0.0
    %2921 = vmatpush2.msra.mxu0 0.0
    %2922 = vmatprep.subr.mxu0 0.0
    %2923 = vmatpush2.msra.mxu0 0.0
    %2924 = vmatprep.subr.mxu0 0.0
    %2925 = vmatpush2.msra.mxu0 0.0
    %2926 = vmatprep.subr.mxu0 0.0
    %2927 = vmatpush2.msra.mxu0 0.0
    %2928 = vmatprep.mubr.f32.mxu0 0.0
    %2929 = vmatmul.mubr.f32.gmra.mxu0 %v2862
    %v2930 = vpop.f32.mrf.mxu0
    %v2931 = vadd.f32 0.0, %v2930
    %v2932 = vpop.f32.mrf.mxu0
    %2933 = vdwg.mxu0
    %v2934 = vadd.f32 %v2845, %v2931
    %v2935 = vld [vmem:[%s2670] ss:$2 sm:$0x1]
    %s2936 = scalar_lea.vmem %s2670, 16 [#allocation4]
    %v2937 = vld [vmem:[%s2936] ss:$2 sm:$0x1]
    %s2938 = scalar_lea.vmem %s7, 120
    %v2939 = vld [vmem:[%s2938] sm:$0xff]
    %v2940 = vld [vmem:[%s2938 + $0x8] sm:$0xff]
    %v2941 = vld [vmem:[%s2938 + $0x10] sm:$0xff]
    %v2942 = vld [vmem:[%s2938 + $0x18] sm:$0xff]
    %v2943 = vld [vmem:[%s2938 + $0x20] sm:$0xff]
    %v2946 = vrot.slane %v2937, 7
    %v2947 = vsel %vm2697, %v2946, %v2935
    %v2948 = vsel %vm2699, %v2947, 0
    %2950 = vmatprep.subr.mxu0 0.0
    %2951 = vmatpush1.msra.mxu0 0.0
    %2952 = vmatprep.subr.mxu0 0.0
    %2953 = vmatpush1.msra.mxu0 0.0
    %2954 = vmatprep.subr.mxu0 0.0
    %2955 = vmatpush1.msra.mxu0 0.0
    %2956 = vmatprep.subr.mxu0 0.0
    %2957 = vmatpush1.msra.mxu0 0.0
    %2958 = vmatprep.subr.mxu0 0.0
    %2959 = vmatpush1.msra.mxu0 0.0
    %2960 = vmatprep.subr.mxu0 0.0
    %2961 = vmatpush1.msra.mxu0 0.0
    %2962 = vmatprep.subr.mxu0 0.0
    %2963 = vmatpush1.msra.mxu0 0.0
    %2964 = vmatprep.subr.mxu0 0.0
    %2965 = vmatpush1.msra.mxu0 0.0
    %2966 = vmatprep.subr.mxu0 0.0
    %2967 = vmatpush1.msra.mxu0 0.0
    %2968 = vmatprep.subr.mxu0 0.0
    %2969 = vmatpush1.msra.mxu0 0.0
    %2970 = vmatprep.subr.mxu0 0.0
    %2971 = vmatpush1.msra.mxu0 0.0
    %2972 = vmatprep.subr.mxu0 0.0
    %2973 = vmatpush1.msra.mxu0 %v2943
    %2974 = vmatprep.subr.mxu0 0.0
    %2975 = vmatpush1.msra.mxu0 %v2942
    %2976 = vmatprep.subr.mxu0 0.0
    %2977 = vmatpush1.msra.mxu0 %v2941
    %2978 = vmatprep.subr.mxu0 0.0
    %2979 = vmatpush1.msra.mxu0 %v2940
    %2980 = vmatprep.subr.mxu0 0.0
    %2981 = vmatpush1.msra.mxu0 %v2939
    %2982 = vmatprep.subr.mxu0 0.0
    %2983 = vmatpush2.msra.mxu0 0.0
    %2984 = vmatprep.subr.mxu0 0.0
    %2985 = vmatpush2.msra.mxu0 0.0
    %2986 = vmatprep.subr.mxu0 0.0
    %2987 = vmatpush2.msra.mxu0 0.0
    %2988 = vmatprep.subr.mxu0 0.0
    %2989 = vmatpush2.msra.mxu0 0.0
    %2990 = vmatprep.subr.mxu0 0.0
    %2991 = vmatpush2.msra.mxu0 0.0
    %2992 = vmatprep.subr.mxu0 0.0
    %2993 = vmatpush2.msra.mxu0 0.0
    %2994 = vmatprep.subr.mxu0 0.0
    %2995 = vmatpush2.msra.mxu0 0.0
    %2996 = vmatprep.subr.mxu0 0.0
    %2997 = vmatpush2.msra.mxu0 0.0
    %2998 = vmatprep.subr.mxu0 0.0
    %2999 = vmatpush2.msra.mxu0 0.0
    %3000 = vmatprep.subr.mxu0 0.0
    %3001 = vmatpush2.msra.mxu0 0.0
    %3002 = vmatprep.subr.mxu0 0.0
    %3003 = vmatpush2.msra.mxu0 0.0
    %3004 = vmatprep.subr.mxu0 0.0
    %3005 = vmatpush2.msra.mxu0 0.0
    %3006 = vmatprep.subr.mxu0 0.0
    %3007 = vmatpush2.msra.mxu0 0.0
    %3008 = vmatprep.subr.mxu0 0.0
    %3009 = vmatpush2.msra.mxu0 0.0
    %3010 = vmatprep.subr.mxu0 0.0
    %3011 = vmatpush2.msra.mxu0 0.0
    %3012 = vmatprep.subr.mxu0 0.0
    %3013 = vmatpush2.msra.mxu0 0.0
    %3014 = vmatprep.mubr.f32.mxu0 0.0
    %3015 = vmatmul.mubr.f32.gmra.mxu0 %v2948
    %v3016 = vpop.f32.mrf.mxu0
    %v3017 = vadd.f32 0.0, %v3016
    %v3018 = vpop.f32.mrf.mxu0
    %3019 = vdwg.mxu0
    %v3020 = vadd.f32 %v2934, %v3017
    %s3021 = scalar_lea.vmem %s2670, 1 [#allocation4]
    %v3022 = vld [vmem:[%s3021] ss:$2 sm:$0x1]
    %s3023 = scalar_lea.vmem %s2670, 17 [#allocation4]
    %v3024 = vld [vmem:[%s3023] ss:$2 sm:$0x1]
    %s3025 = scalar_lea.vmem %s7, 160
    %v3026 = vld [vmem:[%s3025] sm:$0xff]
    %v3027 = vld [vmem:[%s3025 + $0x8] sm:$0xff]
    %v3028 = vld [vmem:[%s3025 + $0x10] sm:$0xff]
    %v3029 = vld [vmem:[%s3025 + $0x18] sm:$0xff]
    %v3030 = vld [vmem:[%s3025 + $0x20] sm:$0xff]
    %v3033 = vrot.slane %v3024, 7
    %v3034 = vsel %vm2697, %v3033, %v3022
    %v3035 = vsel %vm2699, %v3034, 0
    %3037 = vmatprep.subr.mxu0 0.0
    %3038 = vmatpush1.msra.mxu0 0.0
    %3039 = vmatprep.subr.mxu0 0.0
    %3040 = vmatpush1.msra.mxu0 0.0
    %3041 = vmatprep.subr.mxu0 0.0
    %3042 = vmatpush1.msra.mxu0 0.0
    %3043 = vmatprep.subr.mxu0 0.0
    %3044 = vmatpush1.msra.mxu0 0.0
    %3045 = vmatprep.subr.mxu0 0.0
    %3046 = vmatpush1.msra.mxu0 0.0
    %3047 = vmatprep.subr.mxu0 0.0
    %3048 = vmatpush1.msra.mxu0 0.0
    %3049 = vmatprep.subr.mxu0 0.0
    %3050 = vmatpush1.msra.mxu0 0.0
    %3051 = vmatprep.subr.mxu0 0.0
    %3052 = vmatpush1.msra.mxu0 0.0
    %3053 = vmatprep.subr.mxu0 0.0
    %3054 = vmatpush1.msra.mxu0 0.0
    %3055 = vmatprep.subr.mxu0 0.0
    %3056 = vmatpush1.msra.mxu0 0.0
    %3057 = vmatprep.subr.mxu0 0.0
    %3058 = vmatpush1.msra.mxu0 0.0
    %3059 = vmatprep.subr.mxu0 0.0
    %3060 = vmatpush1.msra.mxu0 %v3030
    %3061 = vmatprep.subr.mxu0 0.0
    %3062 = vmatpush1.msra.mxu0 %v3029
    %3063 = vmatprep.subr.mxu0 0.0
    %3064 = vmatpush1.msra.mxu0 %v3028
    %3065 = vmatprep.subr.mxu0 0.0
    %3066 = vmatpush1.msra.mxu0 %v3027
    %3067 = vmatprep.subr.mxu0 0.0
    %3068 = vmatpush1.msra.mxu0 %v3026
    %3069 = vmatprep.subr.mxu0 0.0
    %3070 = vmatpush2.msra.mxu0 0.0
    %3071 = vmatprep.subr.mxu0 0.0
    %3072 = vmatpush2.msra.mxu0 0.0
    %3073 = vmatprep.subr.mxu0 0.0
    %3074 = vmatpush2.msra.mxu0 0.0
    %3075 = vmatprep.subr.mxu0 0.0
    %3076 = vmatpush2.msra.mxu0 0.0
    %3077 = vmatprep.subr.mxu0 0.0
    %3078 = vmatpush2.msra.mxu0 0.0
    %3079 = vmatprep.subr.mxu0 0.0
    %3080 = vmatpush2.msra.mxu0 0.0
    %3081 = vmatprep.subr.mxu0 0.0
    %3082 = vmatpush2.msra.mxu0 0.0
    %3083 = vmatprep.subr.mxu0 0.0
    %3084 = vmatpush2.msra.mxu0 0.0
    %3085 = vmatprep.subr.mxu0 0.0
    %3086 = vmatpush2.msra.mxu0 0.0
    %3087 = vmatprep.subr.mxu0 0.0
    %3088 = vmatpush2.msra.mxu0 0.0
    %3089 = vmatprep.subr.mxu0 0.0
    %3090 = vmatpush2.msra.mxu0 0.0
    %3091 = vmatprep.subr.mxu0 0.0
    %3092 = vmatpush2.msra.mxu0 0.0
    %3093 = vmatprep.subr.mxu0 0.0
    %3094 = vmatpush2.msra.mxu0 0.0
    %3095 = vmatprep.subr.mxu0 0.0
    %3096 = vmatpush2.msra.mxu0 0.0
    %3097 = vmatprep.subr.mxu0 0.0
    %3098 = vmatpush2.msra.mxu0 0.0
    %3099 = vmatprep.subr.mxu0 0.0
    %3100 = vmatpush2.msra.mxu0 0.0
    %3101 = vmatprep.mubr.f32.mxu0 0.0
    %3102 = vmatmul.mubr.f32.gmra.mxu0 %v3035
    %v3103 = vpop.f32.mrf.mxu0
    %v3104 = vadd.f32 0.0, %v3103
    %v3105 = vpop.f32.mrf.mxu0
    %3106 = vdwg.mxu0
    %v3107 = vadd.f32 %v3020, %v3104
    %s3108 = scalar_lea.vmem %s2670, 2 [#allocation4]
    %v3109 = vld [vmem:[%s3108] ss:$2 sm:$0x1]
    %s3110 = scalar_lea.vmem %s2670, 18 [#allocation4]
    %v3111 = vld [vmem:[%s3110] ss:$2 sm:$0x1]
    %s3112 = scalar_lea.vmem %s7, 200
    %v3113 = vld [vmem:[%s3112] sm:$0xff]
    %v3114 = vld [vmem:[%s3112 + $0x8] sm:$0xff]
    %v3115 = vld [vmem:[%s3112 + $0x10] sm:$0xff]
    %v3116 = vld [vmem:[%s3112 + $0x18] sm:$0xff]
    %v3117 = vld [vmem:[%s3112 + $0x20] sm:$0xff]
    %v3120 = vrot.slane %v3111, 7
    %v3121 = vsel %vm2697, %v3120, %v3109
    %v3122 = vsel %vm2699, %v3121, 0
    %3124 = vmatprep.subr.mxu0 0.0
    %3125 = vmatpush1.msra.mxu0 0.0
    %3126 = vmatprep.subr.mxu0 0.0
    %3127 = vmatpush1.msra.mxu0 0.0
    %3128 = vmatprep.subr.mxu0 0.0
    %3129 = vmatpush1.msra.mxu0 0.0
    %3130 = vmatprep.subr.mxu0 0.0
    %3131 = vmatpush1.msra.mxu0 0.0
    %3132 = vmatprep.subr.mxu0 0.0
    %3133 = vmatpush1.msra.mxu0 0.0
    %3134 = vmatprep.subr.mxu0 0.0
    %3135 = vmatpush1.msra.mxu0 0.0
    %3136 = vmatprep.subr.mxu0 0.0
    %3137 = vmatpush1.msra.mxu0 0.0
    %3138 = vmatprep.subr.mxu0 0.0
    %3139 = vmatpush1.msra.mxu0 0.0
    %3140 = vmatprep.subr.mxu0 0.0
    %3141 = vmatpush1.msra.mxu0 0.0
    %3142 = vmatprep.subr.mxu0 0.0
    %3143 = vmatpush1.msra.mxu0 0.0
    %3144 = vmatprep.subr.mxu0 0.0
    %3145 = vmatpush1.msra.mxu0 0.0
    %3146 = vmatprep.subr.mxu0 0.0
    %3147 = vmatpush1.msra.mxu0 %v3117
    %3148 = vmatprep.subr.mxu0 0.0
    %3149 = vmatpush1.msra.mxu0 %v3116
    %3150 = vmatprep.subr.mxu0 0.0
    %3151 = vmatpush1.msra.mxu0 %v3115
    %3152 = vmatprep.subr.mxu0 0.0
    %3153 = vmatpush1.msra.mxu0 %v3114
    %3154 = vmatprep.subr.mxu0 0.0
    %3155 = vmatpush1.msra.mxu0 %v3113
    %3156 = vmatprep.subr.mxu0 0.0
    %3157 = vmatpush2.msra.mxu0 0.0
    %3158 = vmatprep.subr.mxu0 0.0
    %3159 = vmatpush2.msra.mxu0 0.0
    %3160 = vmatprep.subr.mxu0 0.0
    %3161 = vmatpush2.msra.mxu0 0.0
    %3162 = vmatprep.subr.mxu0 0.0
    %3163 = vmatpush2.msra.mxu0 0.0
    %3164 = vmatprep.subr.mxu0 0.0
    %3165 = vmatpush2.msra.mxu0 0.0
    %3166 = vmatprep.subr.mxu0 0.0
    %3167 = vmatpush2.msra.mxu0 0.0
    %3168 = vmatprep.subr.mxu0 0.0
    %3169 = vmatpush2.msra.mxu0 0.0
    %3170 = vmatprep.subr.mxu0 0.0
    %3171 = vmatpush2.msra.mxu0 0.0
    %3172 = vmatprep.subr.mxu0 0.0
    %3173 = vmatpush2.msra.mxu0 0.0
    %3174 = vmatprep.subr.mxu0 0.0
    %3175 = vmatpush2.msra.mxu0 0.0
    %3176 = vmatprep.subr.mxu0 0.0
    %3177 = vmatpush2.msra.mxu0 0.0
    %3178 = vmatprep.subr.mxu0 0.0
    %3179 = vmatpush2.msra.mxu0 0.0
    %3180 = vmatprep.subr.mxu0 0.0
    %3181 = vmatpush2.msra.mxu0 0.0
    %3182 = vmatprep.subr.mxu0 0.0
    %3183 = vmatpush2.msra.mxu0 0.0
    %3184 = vmatprep.subr.mxu0 0.0
    %3185 = vmatpush2.msra.mxu0 0.0
    %3186 = vmatprep.subr.mxu0 0.0
    %3187 = vmatpush2.msra.mxu0 0.0
    %3188 = vmatprep.mubr.f32.mxu0 0.0
    %3189 = vmatmul.mubr.f32.gmra.mxu0 %v3122
    %v3190 = vpop.f32.mrf.mxu0
    %v3191 = vadd.f32 0.0, %v3190
    %v3192 = vpop.f32.mrf.mxu0
    %3193 = vdwg.mxu0
    %v3194 = vadd.f32 %v3107, %v3191
    %s3195 = scalar_lea.vmem [#allocation4], 8
    %v3196 = vld [vmem:[%s3195] ss:$2 sm:$0x1]
    %s3197 = scalar_lea.vmem %s3195, 16 [#allocation4]
    %v3198 = vld [vmem:[%s3197] ss:$2 sm:$0x1]
    %s3199 = scalar_lea.vmem %s7, 240
    %v3200 = vld [vmem:[%s3199] sm:$0xff]
    %v3201 = vld [vmem:[%s3199 + $0x8] sm:$0xff]
    %v3202 = vld [vmem:[%s3199 + $0x10] sm:$0xff]
    %v3203 = vld [vmem:[%s3199 + $0x18] sm:$0xff]
    %v3204 = vld [vmem:[%s3199 + $0x20] sm:$0xff]
    %v3207 = vrot.slane %v3198, 7
    %v3208 = vsel %vm2697, %v3207, %v3196
    %v3209 = vsel %vm2699, %v3208, 0
    %3211 = vmatprep.subr.mxu0 0.0
    %3212 = vmatpush1.msra.mxu0 0.0
    %3213 = vmatprep.subr.mxu0 0.0
    %3214 = vmatpush1.msra.mxu0 0.0
    %3215 = vmatprep.subr.mxu0 0.0
    %3216 = vmatpush1.msra.mxu0 0.0
    %3217 = vmatprep.subr.mxu0 0.0
    %3218 = vmatpush1.msra.mxu0 0.0
    %3219 = vmatprep.subr.mxu0 0.0
    %3220 = vmatpush1.msra.mxu0 0.0
    %3221 = vmatprep.subr.mxu0 0.0
    %3222 = vmatpush1.msra.mxu0 0.0
    %3223 = vmatprep.subr.mxu0 0.0
    %3224 = vmatpush1.msra.mxu0 0.0
    %3225 = vmatprep.subr.mxu0 0.0
    %3226 = vmatpush1.msra.mxu0 0.0
    %3227 = vmatprep.subr.mxu0 0.0
    %3228 = vmatpush1.msra.mxu0 0.0
    %3229 = vmatprep.subr.mxu0 0.0
    %3230 = vmatpush1.msra.mxu0 0.0
    %3231 = vmatprep.subr.mxu0 0.0
    %3232 = vmatpush1.msra.mxu0 0.0
    %3233 = vmatprep.subr.mxu0 0.0
    %3234 = vmatpush1.msra.mxu0 %v3204
    %3235 = vmatprep.subr.mxu0 0.0
    %3236 = vmatpush1.msra.mxu0 %v3203
    %3237 = vmatprep.subr.mxu0 0.0
    %3238 = vmatpush1.msra.mxu0 %v3202
    %3239 = vmatprep.subr.mxu0 0.0
    %3240 = vmatpush1.msra.mxu0 %v3201
    %3241 = vmatprep.subr.mxu0 0.0
    %3242 = vmatpush1.msra.mxu0 %v3200
    %3243 = vmatprep.subr.mxu0 0.0
    %3244 = vmatpush2.msra.mxu0 0.0
    %3245 = vmatprep.subr.mxu0 0.0
    %3246 = vmatpush2.msra.mxu0 0.0
    %3247 = vmatprep.subr.mxu0 0.0
    %3248 = vmatpush2.msra.mxu0 0.0
    %3249 = vmatprep.subr.mxu0 0.0
    %3250 = vmatpush2.msra.mxu0 0.0
    %3251 = vmatprep.subr.mxu0 0.0
    %3252 = vmatpush2.msra.mxu0 0.0
    %3253 = vmatprep.subr.mxu0 0.0
    %3254 = vmatpush2.msra.mxu0 0.0
    %3255 = vmatprep.subr.mxu0 0.0
    %3256 = vmatpush2.msra.mxu0 0.0
    %3257 = vmatprep.subr.mxu0 0.0
    %3258 = vmatpush2.msra.mxu0 0.0
    %3259 = vmatprep.subr.mxu0 0.0
    %3260 = vmatpush2.msra.mxu0 0.0
    %3261 = vmatprep.subr.mxu0 0.0
    %3262 = vmatpush2.msra.mxu0 0.0
    %3263 = vmatprep.subr.mxu0 0.0
    %3264 = vmatpush2.msra.mxu0 0.0
    %3265 = vmatprep.subr.mxu0 0.0
    %3266 = vmatpush2.msra.mxu0 0.0
    %3267 = vmatprep.subr.mxu0 0.0
    %3268 = vmatpush2.msra.mxu0 0.0
    %3269 = vmatprep.subr.mxu0 0.0
    %3270 = vmatpush2.msra.mxu0 0.0
    %3271 = vmatprep.subr.mxu0 0.0
    %3272 = vmatpush2.msra.mxu0 0.0
    %3273 = vmatprep.subr.mxu0 0.0
    %3274 = vmatpush2.msra.mxu0 0.0
    %3275 = vmatprep.mubr.f32.mxu0 0.0
    %3276 = vmatmul.mubr.f32.gmra.mxu0 %v3209
    %v3277 = vpop.f32.mrf.mxu0
    %v3278 = vadd.f32 0.0, %v3277
    %v3279 = vpop.f32.mrf.mxu0
    %3280 = vdwg.mxu0
    %v3281 = vadd.f32 %v3194, %v3278
    %s3282 = scalar_lea.vmem %s3195, 1 [#allocation4]
    %v3283 = vld [vmem:[%s3282] ss:$2 sm:$0x1]
    %s3284 = scalar_lea.vmem %s3195, 17 [#allocation4]
    %v3285 = vld [vmem:[%s3284] ss:$2 sm:$0x1]
    %s3286 = scalar_lea.vmem %s7, 280
    %v3287 = vld [vmem:[%s3286] sm:$0xff]
    %v3288 = vld [vmem:[%s3286 + $0x8] sm:$0xff]
    %v3289 = vld [vmem:[%s3286 + $0x10] sm:$0xff]
    %v3290 = vld [vmem:[%s3286 + $0x18] sm:$0xff]
    %v3291 = vld [vmem:[%s3286 + $0x20] sm:$0xff]
    %v3294 = vrot.slane %v3285, 7
    %v3295 = vsel %vm2697, %v3294, %v3283
    %v3296 = vsel %vm2699, %v3295, 0
    %3298 = vmatprep.subr.mxu0 0.0
    %3299 = vmatpush1.msra.mxu0 0.0
    %3300 = vmatprep.subr.mxu0 0.0
    %3301 = vmatpush1.msra.mxu0 0.0
    %3302 = vmatprep.subr.mxu0 0.0
    %3303 = vmatpush1.msra.mxu0 0.0
    %3304 = vmatprep.subr.mxu0 0.0
    %3305 = vmatpush1.msra.mxu0 0.0
    %3306 = vmatprep.subr.mxu0 0.0
    %3307 = vmatpush1.msra.mxu0 0.0
    %3308 = vmatprep.subr.mxu0 0.0
    %3309 = vmatpush1.msra.mxu0 0.0
    %3310 = vmatprep.subr.mxu0 0.0
    %3311 = vmatpush1.msra.mxu0 0.0
    %3312 = vmatprep.subr.mxu0 0.0
    %3313 = vmatpush1.msra.mxu0 0.0
    %3314 = vmatprep.subr.mxu0 0.0
    %3315 = vmatpush1.msra.mxu0 0.0
    %3316 = vmatprep.subr.mxu0 0.0
    %3317 = vmatpush1.msra.mxu0 0.0
    %3318 = vmatprep.subr.mxu0 0.0
    %3319 = vmatpush1.msra.mxu0 0.0
    %3320 = vmatprep.subr.mxu0 0.0
    %3321 = vmatpush1.msra.mxu0 %v3291
    %3322 = vmatprep.subr.mxu0 0.0
    %3323 = vmatpush1.msra.mxu0 %v3290
    %3324 = vmatprep.subr.mxu0 0.0
    %3325 = vmatpush1.msra.mxu0 %v3289
    %3326 = vmatprep.subr.mxu0 0.0
    %3327 = vmatpush1.msra.mxu0 %v3288
    %3328 = vmatprep.subr.mxu0 0.0
    %3329 = vmatpush1.msra.mxu0 %v3287
    %3330 = vmatprep.subr.mxu0 0.0
    %3331 = vmatpush2.msra.mxu0 0.0
    %3332 = vmatprep.subr.mxu0 0.0
    %3333 = vmatpush2.msra.mxu0 0.0
    %3334 = vmatprep.subr.mxu0 0.0
    %3335 = vmatpush2.msra.mxu0 0.0
    %3336 = vmatprep.subr.mxu0 0.0
    %3337 = vmatpush2.msra.mxu0 0.0
    %3338 = vmatprep.subr.mxu0 0.0
    %3339 = vmatpush2.msra.mxu0 0.0
    %3340 = vmatprep.subr.mxu0 0.0
    %3341 = vmatpush2.msra.mxu0 0.0
    %3342 = vmatprep.subr.mxu0 0.0
    %3343 = vmatpush2.msra.mxu0 0.0
    %3344 = vmatprep.subr.mxu0 0.0
    %3345 = vmatpush2.msra.mxu0 0.0
    %3346 = vmatprep.subr.mxu0 0.0
    %3347 = vmatpush2.msra.mxu0 0.0
    %3348 = vmatprep.subr.mxu0 0.0
    %3349 = vmatpush2.msra.mxu0 0.0
    %3350 = vmatprep.subr.mxu0 0.0
    %3351 = vmatpush2.msra.mxu0 0.0
    %3352 = vmatprep.subr.mxu0 0.0
    %3353 = vmatpush2.msra.mxu0 0.0
    %3354 = vmatprep.subr.mxu0 0.0
    %3355 = vmatpush2.msra.mxu0 0.0
    %3356 = vmatprep.subr.mxu0 0.0
    %3357 = vmatpush2.msra.mxu0 0.0
    %3358 = vmatprep.subr.mxu0 0.0
    %3359 = vmatpush2.msra.mxu0 0.0
    %3360 = vmatprep.subr.mxu0 0.0
    %3361 = vmatpush2.msra.mxu0 0.0
    %3362 = vmatprep.mubr.f32.mxu0 0.0
    %3363 = vmatmul.mubr.f32.gmra.mxu0 %v3296
    %v3364 = vpop.f32.mrf.mxu0
    %v3365 = vadd.f32 0.0, %v3364
    %v3366 = vpop.f32.mrf.mxu0
    %3367 = vdwg.mxu0
    %v3368 = vadd.f32 %v3281, %v3365
    %s3369 = scalar_lea.vmem %s3195, 2 [#allocation4]
    %v3370 = vld [vmem:[%s3369] ss:$2 sm:$0x1]
    %s3371 = scalar_lea.vmem %s3195, 18 [#allocation4]
    %v3372 = vld [vmem:[%s3371] ss:$2 sm:$0x1]
    %s3373 = scalar_lea.vmem %s7, 320
    %v3374 = vld [vmem:[%s3373] sm:$0xff]
    %v3375 = vld [vmem:[%s3373 + $0x8] sm:$0xff]
    %v3376 = vld [vmem:[%s3373 + $0x10] sm:$0xff]
    %v3377 = vld [vmem:[%s3373 + $0x18] sm:$0xff]
    %v3378 = vld [vmem:[%s3373 + $0x20] sm:$0xff]
    %v3381 = vrot.slane %v3372, 7
    %v3382 = vsel %vm2697, %v3381, %v3370
    %v3383 = vsel %vm2699, %v3382, 0
    %3385 = vmatprep.subr.mxu0 0.0
    %3386 = vmatpush1.msra.mxu0 0.0
    %3387 = vmatprep.subr.mxu0 0.0
    %3388 = vmatpush1.msra.mxu0 0.0
    %3389 = vmatprep.subr.mxu0 0.0
    %3390 = vmatpush1.msra.mxu0 0.0
    %3391 = vmatprep.subr.mxu0 0.0
    %3392 = vmatpush1.msra.mxu0 0.0
    %3393 = vmatprep.subr.mxu0 0.0
    %3394 = vmatpush1.msra.mxu0 0.0
    %3395 = vmatprep.subr.mxu0 0.0
    %3396 = vmatpush1.msra.mxu0 0.0
    %3397 = vmatprep.subr.mxu0 0.0
    %3398 = vmatpush1.msra.mxu0 0.0
    %3399 = vmatprep.subr.mxu0 0.0
    %3400 = vmatpush1.msra.mxu0 0.0
    %3401 = vmatprep.subr.mxu0 0.0
    %3402 = vmatpush1.msra.mxu0 0.0
    %3403 = vmatprep.subr.mxu0 0.0
    %3404 = vmatpush1.msra.mxu0 0.0
    %3405 = vmatprep.subr.mxu0 0.0
    %3406 = vmatpush1.msra.mxu0 0.0
    %3407 = vmatprep.subr.mxu0 0.0
    %3408 = vmatpush1.msra.mxu0 %v3378
    %3409 = vmatprep.subr.mxu0 0.0
    %3410 = vmatpush1.msra.mxu0 %v3377
    %3411 = vmatprep.subr.mxu0 0.0
    %3412 = vmatpush1.msra.mxu0 %v3376
    %3413 = vmatprep.subr.mxu0 0.0
    %3414 = vmatpush1.msra.mxu0 %v3375
    %3415 = vmatprep.subr.mxu0 0.0
    %3416 = vmatpush1.msra.mxu0 %v3374
    %3417 = vmatprep.subr.mxu0 0.0
    %3418 = vmatpush2.msra.mxu0 0.0
    %3419 = vmatprep.subr.mxu0 0.0
    %3420 = vmatpush2.msra.mxu0 0.0
    %3421 = vmatprep.subr.mxu0 0.0
    %3422 = vmatpush2.msra.mxu0 0.0
    %3423 = vmatprep.subr.mxu0 0.0
    %3424 = vmatpush2.msra.mxu0 0.0
    %3425 = vmatprep.subr.mxu0 0.0
    %3426 = vmatpush2.msra.mxu0 0.0
    %3427 = vmatprep.subr.mxu0 0.0
    %3428 = vmatpush2.msra.mxu0 0.0
    %3429 = vmatprep.subr.mxu0 0.0
    %3430 = vmatpush2.msra.mxu0 0.0
    %3431 = vmatprep.subr.mxu0 0.0
    %3432 = vmatpush2.msra.mxu0 0.0
    %3433 = vmatprep.subr.mxu0 0.0
    %3434 = vmatpush2.msra.mxu0 0.0
    %3435 = vmatprep.subr.mxu0 0.0
    %3436 = vmatpush2.msra.mxu0 0.0
    %3437 = vmatprep.subr.mxu0 0.0
    %3438 = vmatpush2.msra.mxu0 0.0
    %3439 = vmatprep.subr.mxu0 0.0
    %3440 = vmatpush2.msra.mxu0 0.0
    %3441 = vmatprep.subr.mxu0 0.0
    %3442 = vmatpush2.msra.mxu0 0.0
    %3443 = vmatprep.subr.mxu0 0.0
    %3444 = vmatpush2.msra.mxu0 0.0
    %3445 = vmatprep.subr.mxu0 0.0
    %3446 = vmatpush2.msra.mxu0 0.0
    %3447 = vmatprep.subr.mxu0 0.0
    %3448 = vmatpush2.msra.mxu0 0.0
    %3449 = vmatprep.mubr.f32.mxu0 0.0
    %3450 = vmatmul.mubr.f32.gmra.mxu0 %v3383
    %v3451 = vpop.f32.mrf.mxu0
    %v3452 = vadd.f32 0.0, %v3451
    %v3453 = vpop.f32.mrf.mxu0
    %3454 = vdwg.mxu0
    %v3455 = vadd.f32 %v3368, %v3452
    %v3456 = vld [vmem:[%s8] sm:$0x1]
    %v3458 = vlaneseq
    %v3459 = vshrl.u32 %v3458, 7
    %v3460 = vsub.s32 0, %v3459
    %v3461 = vrot.slane %v3456, %v3460
    %v3463 = vadd.f32 %v3455, %v3461
    %vm3464 = vcmp.ge.f32.partialorder %v3463, 0.0
    %v3465 = vmul.f32 %v3463, 0.2
    %v3466 = vsel %vm3464, %v3463, %v3465
    %v3467 = vadd.f32 %v3466, 0.0
    %v3468 = vld [vmem:[%s9] sm:$0xff]
    %v3469 = vld [vmem:[%s9 + $0x8] sm:$0xff]
    %v3470 = vld [vmem:[%s9 + $0x10] sm:$0xff]
    %v3471 = vld [vmem:[%s9 + $0x18] sm:$0xff]
    %v3472 = vld [vmem:[%s9 + $0x20] sm:$0xff]
    %v3473 = vld [vmem:[%s9 + $0x28] sm:$0xff]
    %v3474 = vld [vmem:[%s9 + $0x30] sm:$0xff]
    %v3475 = vld [vmem:[%s9 + $0x38] sm:$0xff]
    %v3476 = vld [vmem:[%s9 + $0x40] sm:$0xff]
    %v3477 = vld [vmem:[%s9 + $0x48] sm:$0xff]
    %v3478 = vld [vmem:[%s10] sm:$0x1]
    %v3480 = vlaneseq
    %v3481 = vshrl.u32 %v3480, 7
    %v3482 = vsub.s32 0, %v3481
    %v3483 = vrot.slane %v3478, %v3482
    %vm3485 = vcmask 654336
    %v3487 = vsel %vm3485, %v3467, 0
    %3489 = vmatprep.subr.mxu0 0.0
    %3490 = vmatpush1.msra.mxu0 0.0
    %3491 = vmatprep.subr.mxu0 0.0
    %3492 = vmatpush1.msra.mxu0 0.0
    %3493 = vmatprep.subr.mxu0 0.0
    %3494 = vmatpush1.msra.mxu0 0.0
    %3495 = vmatprep.subr.mxu0 0.0
    %3496 = vmatpush1.msra.mxu0 0.0
    %3497 = vmatprep.subr.mxu0 0.0
    %3498 = vmatpush1.msra.mxu0 0.0
    %3499 = vmatprep.subr.mxu0 0.0
    %3500 = vmatpush1.msra.mxu0 0.0
    %3501 = vmatprep.subr.mxu0 0.0
    %3502 = vmatpush1.msra.mxu0 %v3477
    %3503 = vmatprep.subr.mxu0 0.0
    %3504 = vmatpush1.msra.mxu0 %v3476
    %3505 = vmatprep.subr.mxu0 0.0
    %3506 = vmatpush1.msra.mxu0 %v3475
    %3507 = vmatprep.subr.mxu0 0.0
    %3508 = vmatpush1.msra.mxu0 %v3474
    %3509 = vmatprep.subr.mxu0 0.0
    %3510 = vmatpush1.msra.mxu0 %v3473
    %3511 = vmatprep.subr.mxu0 0.0
    %3512 = vmatpush1.msra.mxu0 %v3472
    %3513 = vmatprep.subr.mxu0 0.0
    %3514 = vmatpush1.msra.mxu0 %v3471
    %3515 = vmatprep.subr.mxu0 0.0
    %3516 = vmatpush1.msra.mxu0 %v3470
    %3517 = vmatprep.subr.mxu0 0.0
    %3518 = vmatpush1.msra.mxu0 %v3469
    %3519 = vmatprep.subr.mxu0 0.0
    %3520 = vmatpush1.msra.mxu0 %v3468
    %3521 = vmatprep.subr.mxu0 0.0
    %3522 = vmatpush2.msra.mxu0 0.0
    %3523 = vmatprep.subr.mxu0 0.0
    %3524 = vmatpush2.msra.mxu0 0.0
    %3525 = vmatprep.subr.mxu0 0.0
    %3526 = vmatpush2.msra.mxu0 0.0
    %3527 = vmatprep.subr.mxu0 0.0
    %3528 = vmatpush2.msra.mxu0 0.0
    %3529 = vmatprep.subr.mxu0 0.0
    %3530 = vmatpush2.msra.mxu0 0.0
    %3531 = vmatprep.subr.mxu0 0.0
    %3532 = vmatpush2.msra.mxu0 0.0
    %3533 = vmatprep.subr.mxu0 0.0
    %3534 = vmatpush2.msra.mxu0 0.0
    %3535 = vmatprep.subr.mxu0 0.0
    %3536 = vmatpush2.msra.mxu0 0.0
    %3537 = vmatprep.subr.mxu0 0.0
    %3538 = vmatpush2.msra.mxu0 0.0
    %3539 = vmatprep.subr.mxu0 0.0
    %3540 = vmatpush2.msra.mxu0 0.0
    %3541 = vmatprep.subr.mxu0 0.0
    %3542 = vmatpush2.msra.mxu0 0.0
    %3543 = vmatprep.subr.mxu0 0.0
    %3544 = vmatpush2.msra.mxu0 0.0
    %3545 = vmatprep.subr.mxu0 0.0
    %3546 = vmatpush2.msra.mxu0 0.0
    %3547 = vmatprep.subr.mxu0 0.0
    %3548 = vmatpush2.msra.mxu0 0.0
    %3549 = vmatprep.subr.mxu0 0.0
    %3550 = vmatpush2.msra.mxu0 0.0
    %3551 = vmatprep.subr.mxu0 0.0
    %3552 = vmatpush2.msra.mxu0 0.0
    %3553 = vmatprep.mubr.f32.mxu0 0.0
    %3554 = vmatmul.mubr.f32.gmra.mxu0 %v3487
    %v3555 = vpop.f32.mrf.mxu0
    %v3556 = vadd.f32 %v3483, %v3555
    %v3557 = vpop.f32.mrf.mxu0
    %3558 = vdwg.mxu0
    %vm3559 = vcmp.ge.f32.partialorder %v3556, 0.0
    %v3560 = vmul.f32 %v3556, 0.2
    %v3561 = vsel %vm3559, %v3556, %v3560
    %v3562 = vld [vmem:[%s11] sm:$0xff]
    %v3563 = vld [vmem:[%s11 + $0x8] sm:$0xff]
    %v3564 = vld [vmem:[%s11 + $0x10] sm:$0xff]
    %v3565 = vld [vmem:[%s11 + $0x18] sm:$0xff]
    %v3566 = vld [vmem:[%s11 + $0x20] sm:$0xff]
    %v3567 = vld [vmem:[#allocation5] sm:$0x1]
    %v3569 = vlaneseq
    %v3570 = vshrl.u32 %v3569, 7
    %v3571 = vsub.s32 0, %v3570
    %v3572 = vrot.slane %v3567, %v3571
    %v3575 = vsel %vm2699, %v3561, 0
    %3577 = vmatprep.subr.mxu0 0.0
    %3578 = vmatpush1.msra.mxu0 0.0
    %3579 = vmatprep.subr.mxu0 0.0
    %3580 = vmatpush1.msra.mxu0 0.0
    %3581 = vmatprep.subr.mxu0 0.0
    %3582 = vmatpush1.msra.mxu0 0.0
    %3583 = vmatprep.subr.mxu0 0.0
    %3584 = vmatpush1.msra.mxu0 0.0
    %3585 = vmatprep.subr.mxu0 0.0
    %3586 = vmatpush1.msra.mxu0 0.0
    %3587 = vmatprep.subr.mxu0 0.0
    %3588 = vmatpush1.msra.mxu0 0.0
    %3589 = vmatprep.subr.mxu0 0.0
    %3590 = vmatpush1.msra.mxu0 0.0
    %3591 = vmatprep.subr.mxu0 0.0
    %3592 = vmatpush1.msra.mxu0 0.0
    %3593 = vmatprep.subr.mxu0 0.0
    %3594 = vmatpush1.msra.mxu0 0.0
    %3595 = vmatprep.subr.mxu0 0.0
    %3596 = vmatpush1.msra.mxu0 0.0
    %3597 = vmatprep.subr.mxu0 0.0
    %3598 = vmatpush1.msra.mxu0 0.0
    %3599 = vmatprep.subr.mxu0 0.0
    %3600 = vmatpush1.msra.mxu0 %v3566
    %3601 = vmatprep.subr.mxu0 0.0
    %3602 = vmatpush1.msra.mxu0 %v3565
    %3603 = vmatprep.subr.mxu0 0.0
    %3604 = vmatpush1.msra.mxu0 %v3564
    %3605 = vmatprep.subr.mxu0 0.0
    %3606 = vmatpush1.msra.mxu0 %v3563
    %3607 = vmatprep.subr.mxu0 0.0
    %3608 = vmatpush1.msra.mxu0 %v3562
    %3609 = vmatprep.subr.mxu0 0.0
    %3610 = vmatpush2.msra.mxu0 0.0
    %3611 = vmatprep.subr.mxu0 0.0
    %3612 = vmatpush2.msra.mxu0 0.0
    %3613 = vmatprep.subr.mxu0 0.0
    %3614 = vmatpush2.msra.mxu0 0.0
    %3615 = vmatprep.subr.mxu0 0.0
    %3616 = vmatpush2.msra.mxu0 0.0
    %3617 = vmatprep.subr.mxu0 0.0
    %3618 = vmatpush2.msra.mxu0 0.0
    %3619 = vmatprep.subr.mxu0 0.0
    %3620 = vmatpush2.msra.mxu0 0.0
    %3621 = vmatprep.subr.mxu0 0.0
    %3622 = vmatpush2.msra.mxu0 0.0
    %3623 = vmatprep.subr.mxu0 0.0
    %3624 = vmatpush2.msra.mxu0 0.0
    %3625 = vmatprep.subr.mxu0 0.0
    %3626 = vmatpush2.msra.mxu0 0.0
    %3627 = vmatprep.subr.mxu0 0.0
    %3628 = vmatpush2.msra.mxu0 0.0
    %3629 = vmatprep.subr.mxu0 0.0
    %3630 = vmatpush2.msra.mxu0 0.0
    %3631 = vmatprep.subr.mxu0 0.0
    %3632 = vmatpush2.msra.mxu0 0.0
    %3633 = vmatprep.subr.mxu0 0.0
    %3634 = vmatpush2.msra.mxu0 0.0
    %3635 = vmatprep.subr.mxu0 0.0
    %3636 = vmatpush2.msra.mxu0 0.0
    %3637 = vmatprep.subr.mxu0 0.0
    %3638 = vmatpush2.msra.mxu0 0.0
    %3639 = vmatprep.subr.mxu0 0.0
    %3640 = vmatpush2.msra.mxu0 0.0
    %3641 = vmatprep.mubr.f32.mxu0 0.0
    %3642 = vmatmul.mubr.f32.gmra.mxu0 %v3575
    %v3643 = vpop.f32.mrf.mxu0
    %v3644 = vadd.f32 %v3572, %v3643
    %v3645 = vpop.f32.mrf.mxu0
    %3646 = vdwg.mxu0
    %3648 = vset.pattern.permute.xlu0 0
    %3649 = vperm.xlu0 %3648, %v3644
    %v3650 = vpop.permute.xlu0 %3649
    %v3651 = vlaneseq
    %v3652 = vand.u32 %v3651, 127
    %v3653 = vlaneseq
    %v3654 = vshrl.u32 %v3653, 7
    %v3655 = vsub.s32 %v3652, %v3654
    %v3656 = vrot.slane %v3650, %v3655
    %vm3658 = vcmask 8192
    %3659 = vst.msk [vmem:[#allocation6] sm:$0x1] %vm3658, %v3656
    // Predicated region
    $region54: #{forward_pallas.1} parent=1 // pred_check
      _
    $region55: #{forward_pallas.1} parent=1 // pred_check_branch
      %3661 = sbr.rel (0) target = $region57
    $region56: #{forward_pallas.1} parent=1 // pred_region
      %s3663 = ssub.s32 16, 16
      %3664 = vsyncadd [#allocation7], %s3663
      %s3666 = sshll.u32 [#allocation6], 4
      %s3667 = int_to_ptr.vmem [resolvable:$true] %s3666
      %3669 = dma.vmem_to_hbm [thread:$0]  %s3667, 16, %s13, [#allocation7]
    $region57: #{forward_pallas.1} parent=1 // pred_fallthru
      _
    // Predicated region
    $region58: #{forward_pallas.1} parent=1 // pred_check
      _
    $region59: #{forward_pallas.1} parent=1 // pred_check_branch
      %3671 = sbr.rel (0) target = $region61
    $region60: #{forward_pallas.1} parent=1 // pred_region
      %3672 = dma.done [#allocation7], 16
    $region61: #{forward_pallas.1} parent=1 // pred_fallthru
      _
    %3673 = vsyncpa [#allocation7], 1

</llo_original>
